<compile_context>
chip_gen: v7x
topology: tpu7x:2x2x1
jax: 0.10.0
libtpu: 0.0.40
codegen_flags: <defaults>
</compile_context>

<pallas_src>
import functools

import jax
import jax.numpy as jnp
from jax.experimental import pallas as pl
from jax.experimental.pallas import tpu as pltpu

BN_EPS = 1e-5
MXU_DTYPE = jnp.bfloat16   # matmul operand dtype (f32 accumulation + epilogues)
K1 = 32                    # conv1 im2col K: 27 real taps zero-padded to 32 lanes


# --------------------------------------------------------------------------
# Fused Pallas kernel: whole per-sample-block forward pass
# --------------------------------------------------------------------------

def _fused_forward_kernel(patches_ref, w1_ref, bn1_ref, w5_ref, bn5_ref,
                          tw0_ref, tbn0_ref, tw1_ref, tbn1_ref,
                          tw2_ref, tbn2_ref, tw3_ref, tbn3_ref,
                          sm_ref, clsw_ref, clsb_ref, out_ref,
                          *, T, bs, tbp, Hp, Wp):
    # patches_ref: (1, 4*Hp*Wp*tbp, 32) bf16 im2col'd conv1 input, rows ordered
    #              (parity-phase, pool-row i, pool-col j, padded (t, b)).
    # tbp        : (t, b) row count padded up to a multiple of 8 (bs*T real rows).
    # out_ref    : (1, bs, num_classes)
    HW = Hp * Wp
    L = HW * tbp                # rows per conv1-output parity phase
    bsT = T * bs

    # ---- conv1: Conv2d(3->c0, 3x3, s2, p1, no bias) + BN + ReLU (ONE matmul) ----
    p = patches_ref[0]                                        # (4L, 32) bf16
    y = jnp.dot(p, w1_ref[...], preferred_element_type=jnp.float32)
    bn1 = bn1_ref[...]
    y = jnp.maximum(y * bn1[0:1] + bn1[1:2], 0.0).astype(MXU_DTYPE)   # (4L, c0)

    # parity phases: p_rc[row=(i,j,tb)] = conv1_out[2i+r, 2j+c]
    p00, p01 = y[0:L], y[L:2 * L]
    p10, p11 = y[2 * L:3 * L], y[3 * L:4 * L]

    # ---- maxpool 3x3 / s2 / p1 (zero pad valid: post-ReLU values >= 0) ----
    def up(a, rows):  # shift rows down by `rows` (zeros shifted in at the top)
        return jnp.concatenate(
            [jnp.zeros((rows,) + a.shape[1:], a.dtype), a[:L - rows]], axis=0)

    r0 = jnp.maximum(jnp.maximum(p00, p10), up(p10, Wp * tbp))   # rows {2i-1,2i,2i+1}, col 2j
    r1 = jnp.maximum(jnp.maximum(p01, p11), up(p11, Wp * tbp))   # same, col 2j+1
    ridx = jax.lax.broadcasted_iota(jnp.int32, (L, 1), 0)
    jmask = (ridx % (Wp * tbp)) >= tbp                           # rows with j >= 1
    left = jnp.where(jmask, up(r1, tbp), jnp.zeros_like(r1))     # col 2j-1
    pooled = jnp.maximum(jnp.maximum(r0, r1), left)              # (L, c0) bf16

    # ---- conv5 (1x1) + BN + ReLU (ONE matmul), then spatial mean x.mean([2,3]) ----
    z = jnp.dot(pooled, w5_ref[...], preferred_element_type=jnp.float32)
    bn5 = bn5_ref[...]
    z = jnp.maximum(z * bn5[0:1] + bn5[1:2], 0.0)                # (L, c4) f32
    c4 = z.shape[-1]
    feat = jnp.mean(z.reshape(HW, tbp, c4), axis=0)              # (tbp, c4)
    x = feat[0:bsT]                                              # drop (t,b) padding rows

    # ---- 4 x (Conv1d k=3 'same' + BN + ReLU): ONE K-fused matmul per layer ----
    for tw_ref, tbn_ref in ((tw0_ref, tbn0_ref), (tw1_ref, tbn1_ref),
                            (tw2_ref, tbn2_ref), (tw3_ref, tbn3_ref)):
        zrow = jnp.zeros((bs,) + x.shape[1:], x.dtype)
        prv = jnp.concatenate([zrow, x[:bsT - bs]], axis=0)      # frame t-1 (zero at t=0)
        nxt = jnp.concatenate([x[bs:], zrow], axis=0)            # frame t+1 (zero at t=T-1)
        op = jnp.concatenate([prv, x, nxt], axis=-1).astype(MXU_DTYPE)   # (bsT, 3*cin)
        a = jnp.dot(op, tw_ref[...], preferred_element_type=jnp.float32)
        tbn = tbn_ref[...]
        x = jnp.maximum(a * tbn[0:1] + tbn[1:2], 0.0)            # (bsT, cout) f32

    # ---- temporal mean (selector matmul, no reshape) + Linear(128 -> ncls) ----
    m = jnp.dot(sm_ref[...], x, preferred_element_type=jnp.float32)      # (bs, 128)
    logits = jnp.dot(m, clsw_ref[...],
                     preferred_element_type=jnp.float32) + clsb_ref[...]
    out_ref[0] = logits.astype(out_ref.dtype)


def _full_spec(shape):
    nd = len(shape)
    return pl.BlockSpec(shape, lambda s, _nd=nd: (0,) * _nd)


def _choose_block_samples(n, max_bs=8):
    """Largest sample block that keeps >= 2 grid steps (v7x megacore) and divides n."""
    if n <= 1:
        return max(n, 1)
    best = 1
    for bs in range(1, min(n // 2, max_bs) + 1):
        if n % bs == 0:
            best = bs
    return best


# --------------------------------------------------------------------------
# Parameters (deterministic, synthetic -- shapes follow the module __init__)
# --------------------------------------------------------------------------

def _bn_params(key, c):
    k1, k2, k3, k4 = jax.random.split(key, 4)
    gamma = 1.0 + 0.1 * jax.random.normal(k1, (c,), jnp.float32)
    beta = 0.1 * jax.random.normal(k2, (c,), jnp.float32)
    mean = 0.1 * jax.random.normal(k3, (c,), jnp.float32)
    var = 0.5 + jax.random.uniform(k4, (c,), jnp.float32)
    return gamma, beta, mean, var


def init_params(key, stages_out_channels=(8, 8, 8, 8, 32), num_classes=4):
    c0 = stages_out_channels[0]
    c3 = stages_out_channels[3]
    c4 = stages_out_channels[4]
    keys = jax.random.split(key, 16)
    p = {}
    p['conv1_w'] = 0.1 * jax.random.normal(keys[0], (c0, 3, 3, 3), jnp.float32)
    p['bn1'] = _bn_params(keys[1], c0)
    p['conv5_w'] = 0.1 * jax.random.normal(keys[2], (c4, c3), jnp.float32)
    p['bn5'] = _bn_params(keys[3], c4)

    def conv1d_p(kw, kb, kbn, cin, cout):
        w = 0.1 * jax.random.normal(kw, (cout, cin, 3), jnp.float32)
        b = 0.1 * jax.random.normal(kb, (cout,), jnp.float32)
        return w, b, _bn_params(kbn, cout)

    p['conv1d_0'] = conv1d_p(keys[4], keys[5], keys[6], c4, 64)
    p['conv1d_1'] = conv1d_p(keys[7], keys[8], keys[9], 64, 64)
    p['conv1d_2'] = conv1d_p(keys[10], keys[11], keys[12], 64, 128)
    p['conv1d_3'] = conv1d_p(keys[13], keys[14], keys[15], 128, 128)
    kcw, kcb = jax.random.split(jax.random.fold_in(key, 99), 2)
    p['cls_w'] = 0.1 * jax.random.normal(kcw, (num_classes, 128), jnp.float32)
    p['cls_b'] = 0.1 * jax.random.normal(kcb, (num_classes,), jnp.float32)
    return p


def _bn_fold(gamma, beta, mean, var, conv_bias=None):
    scale = gamma / jnp.sqrt(var + BN_EPS)
    shift = beta - mean * scale
    if conv_bias is not None:
        shift = shift + conv_bias * scale
    return jnp.stack([scale, shift], axis=0).astype(jnp.float32)   # (2, C)


def prepare_params(params):
    """One-time prep: fold BN stats, transpose/concat weights, cast matmul operands."""
    c0 = params['conv1_w'].shape[0]
    pp = {}
    # conv1: (c0, ci, kh, kw) -> (kh, kw, ci, c0) -> (27, c0) -> pad to (32, c0)
    w1 = jnp.transpose(params['conv1_w'], (2, 3, 1, 0)).reshape(27, c0)
    pp['w1'] = jnp.pad(w1, ((0, K1 - 27), (0, 0))).astype(MXU_DTYPE)
    pp['bn1'] = _bn_fold(*params['bn1'])
    pp['w5'] = jnp.transpose(params['conv5_w']).astype(MXU_DTYPE)         # (c3, c4)
    pp['bn5'] = _bn_fold(*params['bn5'])
    for idx in range(4):
        w, b, bn = params['conv1d_%d' % idx]
        cout, cin, _ = w.shape
        # (cout, cin, 3) -> (3, cin, cout) -> K-concatenated (3*cin, cout)
        pp['tw%d' % idx] = (jnp.transpose(w, (2, 1, 0))
                            .reshape(3 * cin, cout).astype(MXU_DTYPE))
        pp['tbn%d' % idx] = _bn_fold(*bn, conv_bias=b)
    pp['cls_w'] = jnp.transpose(params['cls_w']).astype(jnp.float32)      # (128, ncls)
    pp['cls_b'] = params['cls_b'].reshape(1, -1).astype(jnp.float32)
    return pp


# --------------------------------------------------------------------------
# Forward pass
# --------------------------------------------------------------------------

def forward(prepped, x_nchw, im_per_sample, block_samples=None):
    B, Cin, H, W = x_nchw.shape
    assert Cin == 3, 'expected RGB input'
    assert B % im_per_sample == 0, 'Batch size is not a multiple of sequence length.'
    assert H % 4 == 0 and W % 4 == 0, 'spatial dims must be multiples of 4'
    n = B // im_per_sample
    T = im_per_sample
    bs = block_samples if block_samples is not None else _choose_block_samples(n)
    assert n % bs == 0
    G = n // bs
    Ho, Wo = H // 2, W // 2            # conv1 output (stride 2, pad 1)
    Hp, Wp = Ho // 2, Wo // 2          # maxpool output (stride 2, pad 1)
    bsT = bs * T
    tbp = -(-bsT // 8) * 8             # pad (t, b) rows to a sublane multiple of 8

    # ---- wrapper-side im2col for conv1 (lane-dense bf16 operand) ----
    x = jnp.transpose(x_nchw, (0, 2, 3, 1))                 # NHWC
    xp = jnp.pad(x, ((0, 0), (1, 1), (1, 1), (0, 0)))
    taps = [xp[:, kh:kh + 2 * Ho:2, kw:kw + 2 * Wo:2, :]
            for kh in range(3) for kw in range(3)]
    pat = jnp.concatenate(taps, axis=-1)                    # (B, Ho, Wo, 27)
    pat = jnp.pad(pat, ((0, 0), (0, 0), (0, 0), (0, K1 - 27)))
    # reorder rows to (block, parity-phase, pool-row i, pool-col j, t, b)
    pat = pat.reshape(G, bs, T, Hp, 2, Wp, 2, K1)
    pat = jnp.transpose(pat, (0, 4, 6, 3, 5, 2, 1, 7))      # (G, rp, cp, i, j, t, b, K1)
    pat = pat.reshape(G, 4 * Hp * Wp, bsT, K1)
    pat = jnp.pad(pat, ((0, 0), (0, 0), (0, tbp - bsT), (0, 0)))
    patches = pat.reshape(G, 4 * Hp * Wp * tbp, K1).astype(MXU_DTYPE)

    # temporal-mean selector: (bs, bsT), columns ordered (t, b)
    sm = jnp.tile(jnp.eye(bs, dtype=jnp.float32), (1, T)) / float(T)

    # TODO(synk): stage2/stage3/stage4 (InvertedResidual), Modulator and
    # LocalFeatureExtractor are not defined in the provided source; skipped
    # (stages_out_channels chosen so conv5's __init__ shape still matches).
    # TODO(synk): self.resnet50 / adaptive_avgpool only feed
    # forward_features_resnet, which forward() never calls; not implemented.

    num_classes = prepped['cls_w'].shape[1]
    M_pad = 4 * Hp * Wp * tbp
    weight_arrays = [prepped['w1'], prepped['bn1'], prepped['w5'], prepped['bn5'],
                     prepped['tw0'], prepped['tbn0'], prepped['tw1'], prepped['tbn1'],
                     prepped['tw2'], prepped['tbn2'], prepped['tw3'], prepped['tbn3'],
                     sm, prepped['cls_w'], prepped['cls_b']]
    in_specs = ([pl.BlockSpec((1, M_pad, K1), lambda s: (s, 0, 0))]
                + [_full_spec(w.shape) for w in weight_arrays])

    kernel = functools.partial(_fused_forward_kernel,
                               T=T, bs=bs, tbp=tbp, Hp=Hp, Wp=Wp)
    out = pl.pallas_call(
        kernel,
        out_shape=jax.ShapeDtypeStruct((G, bs, num_classes), jnp.float32),
        grid=(G,),
        in_specs=in_specs,
        out_specs=pl.BlockSpec((1, bs, num_classes), lambda s: (s, 0, 0)),
        compiler_params=pltpu.CompilerParams(
            dimension_semantics=("parallel",)),
    )(patches, *weight_arrays)
    return out.reshape(n, num_classes)


if __name__ == "__main__":
    key = jax.random.PRNGKey(0)
    pkey, xkey = jax.random.split(key)
    im_per_sample = 5                        # small synthetic sequence length
    n_samples = 2
    B_images = n_samples * im_per_sample     # 10 images of 3x16x16
    num_classes = 4
    x = jax.random.normal(xkey, (B_images, 3, 16, 16), jnp.float32)
    params = init_params(pkey, stages_out_channels=(8, 8, 8, 8, 32),
                         num_classes=num_classes)
    prepped = prepare_params(params)         # hoisted out of the jitted forward

    fwd = jax.jit(functools.partial(forward, im_per_sample=im_per_sample))
    out = fwd(prepped, x)
    jax.block_until_ready(out)
    assert out.shape == (n_samples, num_classes)
    assert jnp.all(jnp.isfinite(out))
    print("KERNEL_OK")
</pallas_src>

<mosaic_0001>
module attributes {stable_mosaic.version = 11 : i64} {
  func.func @_fused_forward_kernel(%arg0: i32, %arg1: memref<1x512x32xbf16, #tpu.memory_space<vmem>>, %arg2: memref<32x8xbf16, #tpu.memory_space<vmem>>, %arg3: memref<2x8xf32, #tpu.memory_space<vmem>>, %arg4: memref<8x32xbf16, #tpu.memory_space<vmem>>, %arg5: memref<2x32xf32, #tpu.memory_space<vmem>>, %arg6: memref<96x64xbf16, #tpu.memory_space<vmem>>, %arg7: memref<2x64xf32, #tpu.memory_space<vmem>>, %arg8: memref<192x64xbf16, #tpu.memory_space<vmem>>, %arg9: memref<2x64xf32, #tpu.memory_space<vmem>>, %arg10: memref<192x128xbf16, #tpu.memory_space<vmem>>, %arg11: memref<2x128xf32, #tpu.memory_space<vmem>>, %arg12: memref<384x128xbf16, #tpu.memory_space<vmem>>, %arg13: memref<2x128xf32, #tpu.memory_space<vmem>>, %arg14: memref<1x5xf32, #tpu.memory_space<vmem>>, %arg15: memref<128x4xf32, #tpu.memory_space<vmem>>, %arg16: memref<1x4xf32, #tpu.memory_space<vmem>>, %arg17: memref<1x1x4xf32, #tpu.memory_space<vmem>>) attributes {dimension_semantics = [#tpu.dimension_semantics<parallel>], iteration_bounds = array<i64: 2>, scalar_prefetch = 0 : i64, scratch_operands = 0 : i64, tpu.core_type = #tpu.core_type<tc>, window_params = [{transform_indices = @transform_0, window_bounds = array<i64: 1, 512, 32>}, {pipeline_mode = #tpu.pipeline_mode<synchronous>, transform_indices = @transform_1, window_bounds = array<i64: 32, 8>}, {pipeline_mode = #tpu.pipeline_mode<synchronous>, transform_indices = @transform_2, window_bounds = array<i64: 2, 8>}, {pipeline_mode = #tpu.pipeline_mode<synchronous>, transform_indices = @transform_3, window_bounds = array<i64: 8, 32>}, {pipeline_mode = #tpu.pipeline_mode<synchronous>, transform_indices = @transform_4, window_bounds = array<i64: 2, 32>}, {pipeline_mode = #tpu.pipeline_mode<synchronous>, transform_indices = @transform_5, window_bounds = array<i64: 96, 64>}, {pipeline_mode = #tpu.pipeline_mode<synchronous>, transform_indices = @transform_6, window_bounds = array<i64: 2, 64>}, {pipeline_mode = #tpu.pipeline_mode<synchronous>, transform_indices = @transform_7, window_bounds = array<i64: 192, 64>}, {pipeline_mode = #tpu.pipeline_mode<synchronous>, transform_indices = @transform_8, window_bounds = array<i64: 2, 64>}, {pipeline_mode = #tpu.pipeline_mode<synchronous>, transform_indices = @transform_9, window_bounds = array<i64: 192, 128>}, {pipeline_mode = #tpu.pipeline_mode<synchronous>, transform_indices = @transform_10, window_bounds = array<i64: 2, 128>}, {pipeline_mode = #tpu.pipeline_mode<synchronous>, transform_indices = @transform_11, window_bounds = array<i64: 384, 128>}, {pipeline_mode = #tpu.pipeline_mode<synchronous>, transform_indices = @transform_12, window_bounds = array<i64: 2, 128>}, {pipeline_mode = #tpu.pipeline_mode<synchronous>, transform_indices = @transform_13, window_bounds = array<i64: 1, 5>}, {pipeline_mode = #tpu.pipeline_mode<synchronous>, transform_indices = @transform_14, window_bounds = array<i64: 128, 4>}, {pipeline_mode = #tpu.pipeline_mode<synchronous>, transform_indices = @transform_15, window_bounds = array<i64: 1, 4>}, {transform_indices = @transform_16, window_bounds = array<i64: 1, 1, 4>}]} {
    %c0 = arith.constant 0 : index
    %c0_0 = arith.constant 0 : index
    %c0_1 = arith.constant 0 : index
    %0 = vector.load %arg1[%c0, %c0_0, %c0_1] : memref<1x512x32xbf16, #tpu.memory_space<vmem>>, vector<1x512x32xbf16>
    %1 = vector.shape_cast %0 : vector<1x512x32xbf16> to vector<512x32xbf16>
    %c0_2 = arith.constant 0 : index
    %c0_3 = arith.constant 0 : index
    %2 = vector.load %arg2[%c0_2, %c0_3] : memref<32x8xbf16, #tpu.memory_space<vmem>>, vector<32x8xbf16>
    %cst = arith.constant dense<0.000000e+00> : vector<512x8xf32>
    %3 = tpu.matmul %1, %2, %cst {dimension_numbers = #tpu.dot_dimension_numbers<[1], [0], [0], [1], [0, 0, 1, 1], [], []>} : vector<512x32xbf16>, vector<32x8xbf16>, vector<512x8xf32> -> vector<512x8xf32>
    %c0_4 = arith.constant 0 : index
    %c0_5 = arith.constant 0 : index
    %4 = vector.load %arg3[%c0_4, %c0_5] : memref<2x8xf32, #tpu.memory_space<vmem>>, vector<2x8xf32>
    %5 = vector.extract_strided_slice %4 {offsets = [0, 0], sizes = [1, 8], strides = [1, 1]} : vector<2x8xf32> to vector<1x8xf32>
    %6 = vector.broadcast %5 : vector<1x8xf32> to vector<512x8xf32>
    %7 = arith.mulf %3, %6 : vector<512x8xf32>
    %8 = vector.extract_strided_slice %4 {offsets = [1, 0], sizes = [1, 8], strides = [1, 1]} : vector<2x8xf32> to vector<1x8xf32>
    %9 = vector.broadcast %8 : vector<1x8xf32> to vector<512x8xf32>
    %10 = arith.addf %7, %9 : vector<512x8xf32>
    %cst_6 = arith.constant 0.000000e+00 : f32
    %11 = vector.broadcast %cst_6 : f32 to vector<512x8xf32>
    %12 = arith.maximumf %10, %11 : vector<512x8xf32>
    %13 = arith.truncf %12 : vector<512x8xf32> to vector<512x8xbf16>
    %14 = vector.extract_strided_slice %13 {offsets = [0, 0], sizes = [128, 8], strides = [1, 1]} : vector<512x8xbf16> to vector<128x8xbf16>
    %15 = vector.extract_strided_slice %13 {offsets = [128, 0], sizes = [128, 8], strides = [1, 1]} : vector<512x8xbf16> to vector<128x8xbf16>
    %16 = vector.extract_strided_slice %13 {offsets = [256, 0], sizes = [128, 8], strides = [1, 1]} : vector<512x8xbf16> to vector<128x8xbf16>
    %17 = vector.extract_strided_slice %13 {offsets = [384, 0], sizes = [128, 8], strides = [1, 1]} : vector<512x8xbf16> to vector<128x8xbf16>
    %18 = arith.maximumf %14, %16 : vector<128x8xbf16>
    %cst_7 = arith.constant 0.000000e+00 : bf16
    %19 = vector.broadcast %cst_7 : bf16 to vector<32x8xbf16>
    %20 = vector.extract_strided_slice %16 {offsets = [0, 0], sizes = [96, 8], strides = [1, 1]} : vector<128x8xbf16> to vector<96x8xbf16>
    %21 = tpu.concatenate %19, %20 in 0 : vector<32x8xbf16>, vector<96x8xbf16> -> vector<128x8xbf16>
    %22 = arith.maximumf %18, %21 : vector<128x8xbf16>
    %23 = arith.maximumf %15, %17 : vector<128x8xbf16>
    %cst_8 = arith.constant 0.000000e+00 : bf16
    %24 = vector.broadcast %cst_8 : bf16 to vector<32x8xbf16>
    %25 = vector.extract_strided_slice %17 {offsets = [0, 0], sizes = [96, 8], strides = [1, 1]} : vector<128x8xbf16> to vector<96x8xbf16>
    %26 = tpu.concatenate %24, %25 in 0 : vector<32x8xbf16>, vector<96x8xbf16> -> vector<128x8xbf16>
    %27 = arith.maximumf %23, %26 : vector<128x8xbf16>
    %28 = tpu.iota {dimensions = array<i32: 0>} : vector<128x1xi32>
    %c32_i32 = arith.constant 32 : i32
    %c0_i32 = arith.constant 0 : i32
    %29 = arith.cmpi eq, %c32_i32, %c0_i32 : i32
    %c1_i32 = arith.constant 1 : i32
    %30 = arith.select %29, %c1_i32, %c32_i32 : i32
    %31 = vector.broadcast %30 : i32 to vector<128x1xi32>
    %32 = arith.remsi %28, %31 : vector<128x1xi32>
    %c0_i32_9 = arith.constant 0 : i32
    %33 = vector.broadcast %c0_i32_9 : i32 to vector<128x1xi32>
    %34 = arith.cmpi ne, %32, %33 : vector<128x1xi32>
    %c0_i32_10 = arith.constant 0 : i32
    %35 = vector.broadcast %c0_i32_10 : i32 to vector<128x1xi32>
    %36 = arith.cmpi slt, %32, %35 : vector<128x1xi32>
    %c0_i32_11 = arith.constant 0 : i32
    %37 = arith.cmpi slt, %30, %c0_i32_11 : i32
    %38 = vector.broadcast %37 : i1 to vector<128x1xi1>
    %39 = vector.broadcast %38 : vector<128x1xi1> to vector<128x1xi1>
    %40 = arith.xori %36, %39 : vector<128x1xi1>
    %41 = arith.andi %40, %34 : vector<128x1xi1>
    %42 = vector.broadcast %30 : i32 to vector<128x1xi32>
    %43 = arith.addi %32, %42 : vector<128x1xi32>
    %44 = arith.select %41, %43, %32 : vector<128x1xi1>, vector<128x1xi32>
    %c8_i32 = arith.constant 8 : i32
    %45 = vector.broadcast %c8_i32 : i32 to vector<128x1xi32>
    %46 = arith.cmpi sge, %44, %45 : vector<128x1xi32>
    %cst_12 = arith.constant 0.000000e+00 : bf16
    %47 = vector.broadcast %cst_12 : bf16 to vector<8x8xbf16>
    %48 = vector.extract_strided_slice %27 {offsets = [0, 0], sizes = [120, 8], strides = [1, 1]} : vector<128x8xbf16> to vector<120x8xbf16>
    %49 = tpu.concatenate %47, %48 in 0 : vector<8x8xbf16>, vector<120x8xbf16> -> vector<128x8xbf16>
    %cst_13 = arith.constant 0.000000e+00 : bf16
    %50 = vector.broadcast %cst_13 : bf16 to vector<128x8xbf16>
    %51 = vector.shape_cast %46 : vector<128x1xi1> to vector<128x1xi1>
    %52 = vector.broadcast %51 : vector<128x1xi1> to vector<128x8xi1>
    %53 = arith.select %52, %49, %50 : vector<128x8xi1>, vector<128x8xbf16>
    %54 = arith.maximumf %22, %27 : vector<128x8xbf16>
    %55 = arith.maximumf %54, %53 : vector<128x8xbf16>
    %c0_14 = arith.constant 0 : index
    %c0_15 = arith.constant 0 : index
    %56 = vector.load %arg4[%c0_14, %c0_15] : memref<8x32xbf16, #tpu.memory_space<vmem>>, vector<8x32xbf16>
    %cst_16 = arith.constant dense<0.000000e+00> : vector<128x32xf32>
    %57 = tpu.matmul %55, %56, %cst_16 {dimension_numbers = #tpu.dot_dimension_numbers<[1], [0], [0], [1], [0, 0, 1, 1], [], []>} : vector<128x8xbf16>, vector<8x32xbf16>, vector<128x32xf32> -> vector<128x32xf32>
    %c0_17 = arith.constant 0 : index
    %c0_18 = arith.constant 0 : index
    %58 = vector.load %arg5[%c0_17, %c0_18] : memref<2x32xf32, #tpu.memory_space<vmem>>, vector<2x32xf32>
    %59 = vector.extract_strided_slice %58 {offsets = [0, 0], sizes = [1, 32], strides = [1, 1]} : vector<2x32xf32> to vector<1x32xf32>
    %60 = vector.broadcast %59 : vector<1x32xf32> to vector<128x32xf32>
    %61 = arith.mulf %57, %60 : vector<128x32xf32>
    %62 = vector.extract_strided_slice %58 {offsets = [1, 0], sizes = [1, 32], strides = [1, 1]} : vector<2x32xf32> to vector<1x32xf32>
    %63 = vector.broadcast %62 : vector<1x32xf32> to vector<128x32xf32>
    %64 = arith.addf %61, %63 : vector<128x32xf32>
    %cst_19 = arith.constant 0.000000e+00 : f32
    %65 = vector.broadcast %cst_19 : f32 to vector<128x32xf32>
    %66 = arith.maximumf %64, %65 : vector<128x32xf32>
    %67 = vector.shape_cast %66 : vector<128x32xf32> to vector<16x8x32xf32>
    %cst_20 = arith.constant dense<0.000000e+00> : vector<8x32xf32>
    %68 = vector.multi_reduction <add>, %67, %cst_20 [0] : vector<16x8x32xf32> to vector<8x32xf32>
    %cst_21 = arith.constant 1.600000e+01 : f32
    %69 = vector.broadcast %cst_21 : f32 to vector<8x32xf32>
    %70 = arith.divf %68, %69 : vector<8x32xf32>
    %71 = vector.extract_strided_slice %70 {offsets = [0, 0], sizes = [5, 32], strides = [1, 1]} : vector<8x32xf32> to vector<5x32xf32>
    %cst_22 = arith.constant 0.000000e+00 : f32
    %72 = vector.broadcast %cst_22 : f32 to vector<1x32xf32>
    %73 = vector.extract_strided_slice %71 {offsets = [0, 0], sizes = [4, 32], strides = [1, 1]} : vector<5x32xf32> to vector<4x32xf32>
    %74 = tpu.concatenate %72, %73 in 0 : vector<1x32xf32>, vector<4x32xf32> -> vector<5x32xf32>
    %75 = vector.extract_strided_slice %71 {offsets = [1, 0], sizes = [4, 32], strides = [1, 1]} : vector<5x32xf32> to vector<4x32xf32>
    %76 = tpu.concatenate %75, %72 in 0 : vector<4x32xf32>, vector<1x32xf32> -> vector<5x32xf32>
    %77 = tpu.concatenate %74, %71, %76 in 1 : vector<5x32xf32>, vector<5x32xf32>, vector<5x32xf32> -> vector<5x96xf32>
    %78 = arith.truncf %77 : vector<5x96xf32> to vector<5x96xbf16>
    %c0_23 = arith.constant 0 : index
    %c0_24 = arith.constant 0 : index
    %79 = vector.load %arg6[%c0_23, %c0_24] : memref<96x64xbf16, #tpu.memory_space<vmem>>, vector<96x64xbf16>
    %cst_25 = arith.constant dense<0.000000e+00> : vector<5x64xf32>
    %80 = tpu.matmul %78, %79, %cst_25 {dimension_numbers = #tpu.dot_dimension_numbers<[1], [0], [0], [1], [0, 0, 1, 1], [], []>} : vector<5x96xbf16>, vector<96x64xbf16>, vector<5x64xf32> -> vector<5x64xf32>
    %c0_26 = arith.constant 0 : index
    %c0_27 = arith.constant 0 : index
    %81 = vector.load %arg7[%c0_26, %c0_27] : memref<2x64xf32, #tpu.memory_space<vmem>>, vector<2x64xf32>
    %82 = vector.extract_strided_slice %81 {offsets = [0, 0], sizes = [1, 64], strides = [1, 1]} : vector<2x64xf32> to vector<1x64xf32>
    %83 = vector.broadcast %82 : vector<1x64xf32> to vector<5x64xf32>
    %84 = arith.mulf %80, %83 : vector<5x64xf32>
    %85 = vector.extract_strided_slice %81 {offsets = [1, 0], sizes = [1, 64], strides = [1, 1]} : vector<2x64xf32> to vector<1x64xf32>
    %86 = vector.broadcast %85 : vector<1x64xf32> to vector<5x64xf32>
    %87 = arith.addf %84, %86 : vector<5x64xf32>
    %cst_28 = arith.constant 0.000000e+00 : f32
    %88 = vector.broadcast %cst_28 : f32 to vector<5x64xf32>
    %89 = arith.maximumf %87, %88 : vector<5x64xf32>
    %cst_29 = arith.constant 0.000000e+00 : f32
    %90 = vector.broadcast %cst_29 : f32 to vector<1x64xf32>
    %91 = vector.extract_strided_slice %89 {offsets = [0, 0], sizes = [4, 64], strides = [1, 1]} : vector<5x64xf32> to vector<4x64xf32>
    %92 = tpu.concatenate %90, %91 in 0 : vector<1x64xf32>, vector<4x64xf32> -> vector<5x64xf32>
    %93 = vector.extract_strided_slice %89 {offsets = [1, 0], sizes = [4, 64], strides = [1, 1]} : vector<5x64xf32> to vector<4x64xf32>
    %94 = tpu.concatenate %93, %90 in 0 : vector<4x64xf32>, vector<1x64xf32> -> vector<5x64xf32>
    %95 = tpu.concatenate %92, %89, %94 in 1 : vector<5x64xf32>, vector<5x64xf32>, vector<5x64xf32> -> vector<5x192xf32>
    %96 = arith.truncf %95 : vector<5x192xf32> to vector<5x192xbf16>
    %c0_30 = arith.constant 0 : index
    %c0_31 = arith.constant 0 : index
    %97 = vector.load %arg8[%c0_30, %c0_31] : memref<192x64xbf16, #tpu.memory_space<vmem>>, vector<192x64xbf16>
    %cst_32 = arith.constant dense<0.000000e+00> : vector<5x64xf32>
    %98 = tpu.matmul %96, %97, %cst_32 {dimension_numbers = #tpu.dot_dimension_numbers<[1], [0], [0], [1], [0, 0, 1, 1], [], []>} : vector<5x192xbf16>, vector<192x64xbf16>, vector<5x64xf32> -> vector<5x64xf32>
    %c0_33 = arith.constant 0 : index
    %c0_34 = arith.constant 0 : index
    %99 = vector.load %arg9[%c0_33, %c0_34] : memref<2x64xf32, #tpu.memory_space<vmem>>, vector<2x64xf32>
    %100 = vector.extract_strided_slice %99 {offsets = [0, 0], sizes = [1, 64], strides = [1, 1]} : vector<2x64xf32> to vector<1x64xf32>
    %101 = vector.broadcast %100 : vector<1x64xf32> to vector<5x64xf32>
    %102 = arith.mulf %98, %101 : vector<5x64xf32>
    %103 = vector.extract_strided_slice %99 {offsets = [1, 0], sizes = [1, 64], strides = [1, 1]} : vector<2x64xf32> to vector<1x64xf32>
    %104 = vector.broadcast %103 : vector<1x64xf32> to vector<5x64xf32>
    %105 = arith.addf %102, %104 : vector<5x64xf32>
    %cst_35 = arith.constant 0.000000e+00 : f32
    %106 = vector.broadcast %cst_35 : f32 to vector<5x64xf32>
    %107 = arith.maximumf %105, %106 : vector<5x64xf32>
    %cst_36 = arith.constant 0.000000e+00 : f32
    %108 = vector.broadcast %cst_36 : f32 to vector<1x64xf32>
    %109 = vector.extract_strided_slice %107 {offsets = [0, 0], sizes = [4, 64], strides = [1, 1]} : vector<5x64xf32> to vector<4x64xf32>
    %110 = tpu.concatenate %108, %109 in 0 : vector<1x64xf32>, vector<4x64xf32> -> vector<5x64xf32>
    %111 = vector.extract_strided_slice %107 {offsets = [1, 0], sizes = [4, 64], strides = [1, 1]} : vector<5x64xf32> to vector<4x64xf32>
    %112 = tpu.concatenate %111, %108 in 0 : vector<4x64xf32>, vector<1x64xf32> -> vector<5x64xf32>
    %113 = tpu.concatenate %110, %107, %112 in 1 : vector<5x64xf32>, vector<5x64xf32>, vector<5x64xf32> -> vector<5x192xf32>
    %114 = arith.truncf %113 : vector<5x192xf32> to vector<5x192xbf16>
    %c0_37 = arith.constant 0 : index
    %c0_38 = arith.constant 0 : index
    %115 = vector.load %arg10[%c0_37, %c0_38] : memref<192x128xbf16, #tpu.memory_space<vmem>>, vector<192x128xbf16>
    %cst_39 = arith.constant dense<0.000000e+00> : vector<5x128xf32>
    %116 = tpu.matmul %114, %115, %cst_39 {dimension_numbers = #tpu.dot_dimension_numbers<[1], [0], [0], [1], [0, 0, 1, 1], [], []>} : vector<5x192xbf16>, vector<192x128xbf16>, vector<5x128xf32> -> vector<5x128xf32>
    %c0_40 = arith.constant 0 : index
    %c0_41 = arith.constant 0 : index
    %117 = vector.load %arg11[%c0_40, %c0_41] : memref<2x128xf32, #tpu.memory_space<vmem>>, vector<2x128xf32>
    %118 = vector.extract_strided_slice %117 {offsets = [0, 0], sizes = [1, 128], strides = [1, 1]} : vector<2x128xf32> to vector<1x128xf32>
    %119 = vector.broadcast %118 : vector<1x128xf32> to vector<5x128xf32>
    %120 = arith.mulf %116, %119 : vector<5x128xf32>
    %121 = vector.extract_strided_slice %117 {offsets = [1, 0], sizes = [1, 128], strides = [1, 1]} : vector<2x128xf32> to vector<1x128xf32>
    %122 = vector.broadcast %121 : vector<1x128xf32> to vector<5x128xf32>
    %123 = arith.addf %120, %122 : vector<5x128xf32>
    %cst_42 = arith.constant 0.000000e+00 : f32
    %124 = vector.broadcast %cst_42 : f32 to vector<5x128xf32>
    %125 = arith.maximumf %123, %124 : vector<5x128xf32>
    %cst_43 = arith.constant 0.000000e+00 : f32
    %126 = vector.broadcast %cst_43 : f32 to vector<1x128xf32>
    %127 = vector.extract_strided_slice %125 {offsets = [0, 0], sizes = [4, 128], strides = [1, 1]} : vector<5x128xf32> to vector<4x128xf32>
    %128 = tpu.concatenate %126, %127 in 0 : vector<1x128xf32>, vector<4x128xf32> -> vector<5x128xf32>
    %129 = vector.extract_strided_slice %125 {offsets = [1, 0], sizes = [4, 128], strides = [1, 1]} : vector<5x128xf32> to vector<4x128xf32>
    %130 = tpu.concatenate %129, %126 in 0 : vector<4x128xf32>, vector<1x128xf32> -> vector<5x128xf32>
    %131 = tpu.concatenate %128, %125, %130 in 1 : vector<5x128xf32>, vector<5x128xf32>, vector<5x128xf32> -> vector<5x384xf32>
    %132 = arith.truncf %131 : vector<5x384xf32> to vector<5x384xbf16>
    %c0_44 = arith.constant 0 : index
    %c0_45 = arith.constant 0 : index
    %133 = vector.load %arg12[%c0_44, %c0_45] : memref<384x128xbf16, #tpu.memory_space<vmem>>, vector<384x128xbf16>
    %cst_46 = arith.constant dense<0.000000e+00> : vector<5x128xf32>
    %134 = tpu.matmul %132, %133, %cst_46 {dimension_numbers = #tpu.dot_dimension_numbers<[1], [0], [0], [1], [0, 0, 1, 1], [], []>} : vector<5x384xbf16>, vector<384x128xbf16>, vector<5x128xf32> -> vector<5x128xf32>
    %c0_47 = arith.constant 0 : index
    %c0_48 = arith.constant 0 : index
    %135 = vector.load %arg13[%c0_47, %c0_48] : memref<2x128xf32, #tpu.memory_space<vmem>>, vector<2x128xf32>
    %136 = vector.extract_strided_slice %135 {offsets = [0, 0], sizes = [1, 128], strides = [1, 1]} : vector<2x128xf32> to vector<1x128xf32>
    %137 = vector.broadcast %136 : vector<1x128xf32> to vector<5x128xf32>
    %138 = arith.mulf %134, %137 : vector<5x128xf32>
    %139 = vector.extract_strided_slice %135 {offsets = [1, 0], sizes = [1, 128], strides = [1, 1]} : vector<2x128xf32> to vector<1x128xf32>
    %140 = vector.broadcast %139 : vector<1x128xf32> to vector<5x128xf32>
    %141 = arith.addf %138, %140 : vector<5x128xf32>
    %cst_49 = arith.constant 0.000000e+00 : f32
    %142 = vector.broadcast %cst_49 : f32 to vector<5x128xf32>
    %143 = arith.maximumf %141, %142 : vector<5x128xf32>
    %c0_50 = arith.constant 0 : index
    %c0_51 = arith.constant 0 : index
    %144 = vector.load %arg14[%c0_50, %c0_51] : memref<1x5xf32, #tpu.memory_space<vmem>>, vector<1x5xf32>
    %cst_52 = arith.constant dense<0.000000e+00> : vector<1x128xf32>
    %145 = tpu.matmul %144, %143, %cst_52 {dimension_numbers = #tpu.dot_dimension_numbers<[1], [0], [0], [1], [0, 0, 1, 1], [], []>} : vector<1x5xf32>, vector<5x128xf32>, vector<1x128xf32> -> vector<1x128xf32>
    %c0_53 = arith.constant 0 : index
    %c0_54 = arith.constant 0 : index
    %146 = vector.load %arg15[%c0_53, %c0_54] : memref<128x4xf32, #tpu.memory_space<vmem>>, vector<128x4xf32>
    %cst_55 = arith.constant dense<0.000000e+00> : vector<1x4xf32>
    %147 = tpu.matmul %145, %146, %cst_55 {dimension_numbers = #tpu.dot_dimension_numbers<[1], [0], [0], [1], [0, 0, 1, 1], [], []>} : vector<1x128xf32>, vector<128x4xf32>, vector<1x4xf32> -> vector<1x4xf32>
    %c0_56 = arith.constant 0 : index
    %c0_57 = arith.constant 0 : index
    %148 = vector.load %arg16[%c0_56, %c0_57] : memref<1x4xf32, #tpu.memory_space<vmem>>, vector<1x4xf32>
    %149 = arith.addf %147, %148 : vector<1x4xf32>
    %c0_58 = arith.constant 0 : index
    %c0_59 = arith.constant 0 : index
    %c0_60 = arith.constant 0 : index
    %150 = vector.load %arg17[%c0_58, %c0_59, %c0_60] : memref<1x1x4xf32, #tpu.memory_space<vmem>>, vector<1x1x4xf32>
    %151 = vector.shape_cast %150 : vector<1x1x4xf32> to vector<1x4xf32>
    %152 = vector.shape_cast %149 : vector<1x4xf32> to vector<1x1x4xf32>
    tpu.vector_store %arg17[%c0_58, %c0_59, %c0_60], %152 {strides = array<i32>} : memref<1x1x4xf32, #tpu.memory_space<vmem>>, vector<1x1x4xf32>,
    return
  }
  func.func @transform_0(%arg0: i32) -> (i32, i32, i32) {
    %c0_i32 = arith.constant 0 : i32
    %c0_i32_0 = arith.constant 0 : i32
    %c0_i32_1 = arith.constant 0 : i32
    return %arg0, %c0_i32, %c0_i32_0 : i32, i32, i32
  }
  func.func @transform_1(%arg0: i32) -> (i32, i32) {
    %c0_i32 = arith.constant 0 : i32
    %c0_i32_0 = arith.constant 0 : i32
    %c0_i32_1 = arith.constant 0 : i32
    return %c0_i32, %c0_i32_0 : i32, i32
  }
  func.func @transform_2(%arg0: i32) -> (i32, i32) {
    %c0_i32 = arith.constant 0 : i32
    %c0_i32_0 = arith.constant 0 : i32
    %c0_i32_1 = arith.constant 0 : i32
    return %c0_i32, %c0_i32_0 : i32, i32
  }
  func.func @transform_3(%arg0: i32) -> (i32, i32) {
    %c0_i32 = arith.constant 0 : i32
    %c0_i32_0 = arith.constant 0 : i32
    %c0_i32_1 = arith.constant 0 : i32
    return %c0_i32, %c0_i32_0 : i32, i32
  }
  func.func @transform_4(%arg0: i32) -> (i32, i32) {
    %c0_i32 = arith.constant 0 : i32
    %c0_i32_0 = arith.constant 0 : i32
    %c0_i32_1 = arith.constant 0 : i32
    return %c0_i32, %c0_i32_0 : i32, i32
  }
  func.func @transform_5(%arg0: i32) -> (i32, i32) {
    %c0_i32 = arith.constant 0 : i32
    %c0_i32_0 = arith.constant 0 : i32
    %c0_i32_1 = arith.constant 0 : i32
    return %c0_i32, %c0_i32_0 : i32, i32
  }
  func.func @transform_6(%arg0: i32) -> (i32, i32) {
    %c0_i32 = arith.constant 0 : i32
    %c0_i32_0 = arith.constant 0 : i32
    %c0_i32_1 = arith.constant 0 : i32
    return %c0_i32, %c0_i32_0 : i32, i32
  }
  func.func @transform_7(%arg0: i32) -> (i32, i32) {
    %c0_i32 = arith.constant 0 : i32
    %c0_i32_0 = arith.constant 0 : i32
    %c0_i32_1 = arith.constant 0 : i32
    return %c0_i32, %c0_i32_0 : i32, i32
  }
  func.func @transform_8(%arg0: i32) -> (i32, i32) {
    %c0_i32 = arith.constant 0 : i32
    %c0_i32_0 = arith.constant 0 : i32
    %c0_i32_1 = arith.constant 0 : i32
    return %c0_i32, %c0_i32_0 : i32, i32
  }
  func.func @transform_9(%arg0: i32) -> (i32, i32) {
    %c0_i32 = arith.constant 0 : i32
    %c0_i32_0 = arith.constant 0 : i32
    %c0_i32_1 = arith.constant 0 : i32
    return %c0_i32, %c0_i32_0 : i32, i32
  }
  func.func @transform_10(%arg0: i32) -> (i32, i32) {
    %c0_i32 = arith.constant 0 : i32
    %c0_i32_0 = arith.constant 0 : i32
    %c0_i32_1 = arith.constant 0 : i32
    return %c0_i32, %c0_i32_0 : i32, i32
  }
  func.func @transform_11(%arg0: i32) -> (i32, i32) {
    %c0_i32 = arith.constant 0 : i32
    %c0_i32_0 = arith.constant 0 : i32
    %c0_i32_1 = arith.constant 0 : i32
    return %c0_i32, %c0_i32_0 : i32, i32
  }
  func.func @transform_12(%arg0: i32) -> (i32, i32) {
    %c0_i32 = arith.constant 0 : i32
    %c0_i32_0 = arith.constant 0 : i32
    %c0_i32_1 = arith.constant 0 : i32
    return %c0_i32, %c0_i32_0 : i32, i32
  }
  func.func @transform_13(%arg0: i32) -> (i32, i32) {
    %c0_i32 = arith.constant 0 : i32
    %c0_i32_0 = arith.constant 0 : i32
    %c0_i32_1 = arith.constant 0 : i32
    return %c0_i32, %c0_i32_0 : i32, i32
  }
  func.func @transform_14(%arg0: i32) -> (i32, i32) {
    %c0_i32 = arith.constant 0 : i32
    %c0_i32_0 = arith.constant 0 : i32
    %c0_i32_1 = arith.constant 0 : i32
    return %c0_i32, %c0_i32_0 : i32, i32
  }
  func.func @transform_15(%arg0: i32) -> (i32, i32) {
    %c0_i32 = arith.constant 0 : i32
    %c0_i32_0 = arith.constant 0 : i32
    %c0_i32_1 = arith.constant 0 : i32
    return %c0_i32, %c0_i32_0 : i32, i32
  }
  func.func @transform_16(%arg0: i32) -> (i32, i32, i32) {
    %c0_i32 = arith.constant 0 : i32
    %c0_i32_0 = arith.constant 0 : i32
    %c0_i32_1 = arith.constant 0 : i32
    return %arg0, %c0_i32, %c0_i32_0 : i32, i32, i32
  }
}

</mosaic_0001>

<llo_original>
// kernel: forward.1
$region0: #{forward.1}
  #allocation0 [shape = 'u32[]', space=smem, size = 0x4, offset = 0x4, fixed_abs, tag = 'smem constant byte address 0x4 - core index']
  #allocation1 [shape = 'u32[144,128]{1,0:T(1,128)}', space=vmem, size = 0x12000, scoped, tag = 'internal scratch']
  %s0 = inlined_call_operand.vmem [shape: bf16[2,512,32], index: 0, kind: input, shape index: {}]
  %s1 = inlined_call_operand.vmem [shape: bf16[32,8], index: 1, kind: input, shape index: {}]
  %s2 = inlined_call_operand.vmem [shape: f32[2,8], index: 2, kind: input, shape index: {}]
  %s3 = inlined_call_operand.vmem [shape: bf16[8,32], index: 3, kind: input, shape index: {}]
  %s4 = inlined_call_operand.vmem [shape: f32[2,32], index: 4, kind: input, shape index: {}]
  %s5 = inlined_call_operand.vmem [shape: bf16[96,64], index: 5, kind: input, shape index: {}]
  %s6 = inlined_call_operand.vmem [shape: f32[2,64], index: 6, kind: input, shape index: {}]
  %s7 = inlined_call_operand.vmem [shape: bf16[192,64], index: 7, kind: input, shape index: {}]
  %s8 = inlined_call_operand.vmem [shape: f32[2,64], index: 8, kind: input, shape index: {}]
  %s9 = inlined_call_operand.vmem [shape: bf16[192,128], index: 9, kind: input, shape index: {}]
  %s10 = inlined_call_operand.vmem [shape: f32[2,128], index: 10, kind: input, shape index: {}]
  %s11 = inlined_call_operand.vmem [shape: bf16[384,128], index: 11, kind: input, shape index: {}]
  %s12 = inlined_call_operand.vmem [shape: f32[2,128], index: 12, kind: input, shape index: {}]
  %s13 = inlined_call_operand.vmem [shape: f32[1,5], index: 13, kind: input, shape index: {}]
  %s14 = inlined_call_operand.vmem [shape: f32[128,4], index: 14, kind: input, shape index: {}]
  %s15 = inlined_call_operand.vmem [shape: f32[1,4], index: 15, kind: input, shape index: {}]
  %s16 = inlined_call_operand.hbm [shape: f32[2,1,4], index: 16, kind: output, shape index: {}]
  %s17 = sld [smem:[#allocation0]]
  $region97: #{forward.1} parent=0
    _
  %s19 = ssub.s32 1, %s17
  %s20 = scalar_select 0, %s19, %s17
  $region1: #{forward.1} parent=0
    #allocation2 [shape = 'u8[1024]{0}', space=vmem, size = 0x400, scoped, tag = 'output window, operand 0']
    #allocation3 [shape = 's32[2]{0}', space=sflag, size = 0x8, scoped, tag = 'scoped memory for forward.1']
    %21 = vsyncpa [#allocation3], 0
    %s22 = scalar_lea.sflag [#allocation3], 1
    %23 = vsyncpa %s22, 0
    loop: start=0, step=1, limit=4
    $region2: #{forward.1} parent=1 // loop_pre_header
      _
    $region3: #{forward.1} parent=1 // loop_header
      %s25 = sphi 0, %s29
      %p26 = scmp.ge.s32.totalorder %s25, 4
      %s35 = sphi 0, %s37
      %s38 = sphi 0, %s35
      %s39 = sphi 0, %s38
      %s55 = sphi 0, %s39
      %s59 = sphi 0, %s59
      %s61 = sphi 0, %s59
      %s62 = sphi 0, %s61
      %s76 = sphi 0, %s62
      %s80 = sphi 0, %s80
      %s82 = sphi 0, %s80
      %s83 = sphi 0, %s82
      %s97 = sphi 0, %s83
      %s101 = sphi 0, %s101
      %s103 = sphi 0, %s101
      %s104 = sphi 0, %s103
      %s118 = sphi 0, %s104
      %s122 = sphi 0, %s122
      %s124 = sphi 0, %s122
      %s125 = sphi 0, %s124
      %s139 = sphi 0, %s125
      %s143 = sphi 0, %s143
      %s145 = sphi 0, %s143
      %s146 = sphi 0, %s145
      %s160 = sphi 0, %s146
      %s164 = sphi 0, %s164
      %s166 = sphi 0, %s164
      %s167 = sphi 0, %s166
      %s181 = sphi 0, %s167
      %s185 = sphi 0, %s185
      %s187 = sphi 0, %s185
      %s188 = sphi 0, %s187
      %s202 = sphi 0, %s188
      %s206 = sphi 0, %s206
      %s208 = sphi 0, %s206
      %s209 = sphi 0, %s208
      %s223 = sphi 0, %s209
      %s227 = sphi 0, %s227
      %s229 = sphi 0, %s227
      %s230 = sphi 0, %s229
      %s244 = sphi 0, %s230
      %s248 = sphi 0, %s248
      %s250 = sphi 0, %s248
      %s251 = sphi 0, %s250
      %s265 = sphi 0, %s251
      %s269 = sphi 0, %s269
      %s271 = sphi 0, %s269
      %s272 = sphi 0, %s271
      %s286 = sphi 0, %s272
      %s290 = sphi 0, %s290
      %s292 = sphi 0, %s290
      %s293 = sphi 0, %s292
      %s307 = sphi 0, %s293
      %s311 = sphi 0, %s311
      %s313 = sphi 0, %s311
      %s314 = sphi 0, %s313
      %s328 = sphi 0, %s314
      %s332 = sphi 0, %s332
      %s334 = sphi 0, %s332
      %s335 = sphi 0, %s334
      %s349 = sphi 0, %s335
      %s353 = sphi 0, %s353
      %s355 = sphi 0, %s353
      %s356 = sphi 0, %s355
      %s370 = sphi 0, %s356
      %s376 = sphi 0, %s378
      %s379 = sphi 0, %s376
      %s380 = sphi 0, %s379
      %s396 = sphi 0, %s380
    $region4: #{forward.1} parent=1 // loop_header_branch
      %28 = sbr.rel (%p26) target = $region8
    $region5: #{forward.1} parent=1 // loop_body
      %s30 = ssub.s32 %s25, 1
      %s31 = ssub.s32 %s25, 2
      %s32 = sadd.s32 %s25, 1
      %s33 = ssub.s32 %s25, %s32
      %p34 = scmp.eq.s32.totalorder %s33, 0
      %s36 = sadd.s32 %s35, 1
      %s37 = scalar_select %p34, %s35, %s36
      %p40 = pneg %p34
      %p41 = scmp.eq.s32.totalorder %s25, 1
      %p42 = por %p40, %p41
      %p43 = scmp.ne.s32.totalorder %s35, %s38
      %p44 = scmp.eq.s32.totalorder %s25, 0
      %p45 = por %p43, %p44
      %p46 = scmp.ne.s32.totalorder %s35, %s38
      %p47 = scmp.eq.s32.totalorder %s30, 1
      %p48 = por %p46, %p47
      %p49 = scmp.ne.s32.totalorder %s38, %s39
      %p50 = scmp.eq.s32.totalorder %s30, 0
      %p51 = por %p49, %p50
      %p52 = scmp.ne.s32.totalorder %s38, %s39
      %p53 = scmp.eq.s32.totalorder %s31, 1
      %p54 = por %p52, %p53
      %p56 = scmp.ne.s32.totalorder %s39, %s55
      %p57 = scmp.eq.s32.totalorder %s31, 0
      %p58 = por %p56, %p57
      %s60 = sadd.s32 %s59, 1
      %p63 = scmp.eq.s32.totalorder %s25, 1
      %p64 = scmp.ne.s32.totalorder %s59, %s61
      %p65 = scmp.eq.s32.totalorder %s25, 0
      %p66 = por %p64, %p65
      %p67 = scmp.ne.s32.totalorder %s59, %s61
      %p68 = scmp.eq.s32.totalorder %s30, 1
      %p69 = por %p67, %p68
      %p70 = scmp.ne.s32.totalorder %s61, %s62
      %p71 = scmp.eq.s32.totalorder %s30, 0
      %p72 = por %p70, %p71
      %p73 = scmp.ne.s32.totalorder %s61, %s62
      %p74 = scmp.eq.s32.totalorder %s31, 1
      %p75 = por %p73, %p74
      %p77 = scmp.ne.s32.totalorder %s62, %s76
      %p78 = scmp.eq.s32.totalorder %s31, 0
      %p79 = por %p77, %p78
      %s81 = sadd.s32 %s80, 1
      %p84 = scmp.eq.s32.totalorder %s25, 1
      %p85 = scmp.ne.s32.totalorder %s80, %s82
      %p86 = scmp.eq.s32.totalorder %s25, 0
      %p87 = por %p85, %p86
      %p88 = scmp.ne.s32.totalorder %s80, %s82
      %p89 = scmp.eq.s32.totalorder %s30, 1
      %p90 = por %p88, %p89
      %p91 = scmp.ne.s32.totalorder %s82, %s83
      %p92 = scmp.eq.s32.totalorder %s30, 0
      %p93 = por %p91, %p92
      %p94 = scmp.ne.s32.totalorder %s82, %s83
      %p95 = scmp.eq.s32.totalorder %s31, 1
      %p96 = por %p94, %p95
      %p98 = scmp.ne.s32.totalorder %s83, %s97
      %p99 = scmp.eq.s32.totalorder %s31, 0
      %p100 = por %p98, %p99
      %s102 = sadd.s32 %s101, 1
      %p105 = scmp.eq.s32.totalorder %s25, 1
      %p106 = scmp.ne.s32.totalorder %s101, %s103
      %p107 = scmp.eq.s32.totalorder %s25, 0
      %p108 = por %p106, %p107
      %p109 = scmp.ne.s32.totalorder %s101, %s103
      %p110 = scmp.eq.s32.totalorder %s30, 1
      %p111 = por %p109, %p110
      %p112 = scmp.ne.s32.totalorder %s103, %s104
      %p113 = scmp.eq.s32.totalorder %s30, 0
      %p114 = por %p112, %p113
      %p115 = scmp.ne.s32.totalorder %s103, %s104
      %p116 = scmp.eq.s32.totalorder %s31, 1
      %p117 = por %p115, %p116
      %p119 = scmp.ne.s32.totalorder %s104, %s118
      %p120 = scmp.eq.s32.totalorder %s31, 0
      %p121 = por %p119, %p120
      %s123 = sadd.s32 %s122, 1
      %p126 = scmp.eq.s32.totalorder %s25, 1
      %p127 = scmp.ne.s32.totalorder %s122, %s124
      %p128 = scmp.eq.s32.totalorder %s25, 0
      %p129 = por %p127, %p128
      %p130 = scmp.ne.s32.totalorder %s122, %s124
      %p131 = scmp.eq.s32.totalorder %s30, 1
      %p132 = por %p130, %p131
      %p133 = scmp.ne.s32.totalorder %s124, %s125
      %p134 = scmp.eq.s32.totalorder %s30, 0
      %p135 = por %p133, %p134
      %p136 = scmp.ne.s32.totalorder %s124, %s125
      %p137 = scmp.eq.s32.totalorder %s31, 1
      %p138 = por %p136, %p137
      %p140 = scmp.ne.s32.totalorder %s125, %s139
      %p141 = scmp.eq.s32.totalorder %s31, 0
      %p142 = por %p140, %p141
      %s144 = sadd.s32 %s143, 1
      %p147 = scmp.eq.s32.totalorder %s25, 1
      %p148 = scmp.ne.s32.totalorder %s143, %s145
      %p149 = scmp.eq.s32.totalorder %s25, 0
      %p150 = por %p148, %p149
      %p151 = scmp.ne.s32.totalorder %s143, %s145
      %p152 = scmp.eq.s32.totalorder %s30, 1
      %p153 = por %p151, %p152
      %p154 = scmp.ne.s32.totalorder %s145, %s146
      %p155 = scmp.eq.s32.totalorder %s30, 0
      %p156 = por %p154, %p155
      %p157 = scmp.ne.s32.totalorder %s145, %s146
      %p158 = scmp.eq.s32.totalorder %s31, 1
      %p159 = por %p157, %p158
      %p161 = scmp.ne.s32.totalorder %s146, %s160
      %p162 = scmp.eq.s32.totalorder %s31, 0
      %p163 = por %p161, %p162
      %s165 = sadd.s32 %s164, 1
      %p168 = scmp.eq.s32.totalorder %s25, 1
      %p169 = scmp.ne.s32.totalorder %s164, %s166
      %p170 = scmp.eq.s32.totalorder %s25, 0
      %p171 = por %p169, %p170
      %p172 = scmp.ne.s32.totalorder %s164, %s166
      %p173 = scmp.eq.s32.totalorder %s30, 1
      %p174 = por %p172, %p173
      %p175 = scmp.ne.s32.totalorder %s166, %s167
      %p176 = scmp.eq.s32.totalorder %s30, 0
      %p177 = por %p175, %p176
      %p178 = scmp.ne.s32.totalorder %s166, %s167
      %p179 = scmp.eq.s32.totalorder %s31, 1
      %p180 = por %p178, %p179
      %p182 = scmp.ne.s32.totalorder %s167, %s181
      %p183 = scmp.eq.s32.totalorder %s31, 0
      %p184 = por %p182, %p183
      %s186 = sadd.s32 %s185, 1
      %p189 = scmp.eq.s32.totalorder %s25, 1
      %p190 = scmp.ne.s32.totalorder %s185, %s187
      %p191 = scmp.eq.s32.totalorder %s25, 0
      %p192 = por %p190, %p191
      %p193 = scmp.ne.s32.totalorder %s185, %s187
      %p194 = scmp.eq.s32.totalorder %s30, 1
      %p195 = por %p193, %p194
      %p196 = scmp.ne.s32.totalorder %s187, %s188
      %p197 = scmp.eq.s32.totalorder %s30, 0
      %p198 = por %p196, %p197
      %p199 = scmp.ne.s32.totalorder %s187, %s188
      %p200 = scmp.eq.s32.totalorder %s31, 1
      %p201 = por %p199, %p200
      %p203 = scmp.ne.s32.totalorder %s188, %s202
      %p204 = scmp.eq.s32.totalorder %s31, 0
      %p205 = por %p203, %p204
      %s207 = sadd.s32 %s206, 1
      %p210 = scmp.eq.s32.totalorder %s25, 1
      %p211 = scmp.ne.s32.totalorder %s206, %s208
      %p212 = scmp.eq.s32.totalorder %s25, 0
      %p213 = por %p211, %p212
      %p214 = scmp.ne.s32.totalorder %s206, %s208
      %p215 = scmp.eq.s32.totalorder %s30, 1
      %p216 = por %p214, %p215
      %p217 = scmp.ne.s32.totalorder %s208, %s209
      %p218 = scmp.eq.s32.totalorder %s30, 0
      %p219 = por %p217, %p218
      %p220 = scmp.ne.s32.totalorder %s208, %s209
      %p221 = scmp.eq.s32.totalorder %s31, 1
      %p222 = por %p220, %p221
      %p224 = scmp.ne.s32.totalorder %s209, %s223
      %p225 = scmp.eq.s32.totalorder %s31, 0
      %p226 = por %p224, %p225
      %s228 = sadd.s32 %s227, 1
      %p231 = scmp.eq.s32.totalorder %s25, 1
      %p232 = scmp.ne.s32.totalorder %s227, %s229
      %p233 = scmp.eq.s32.totalorder %s25, 0
      %p234 = por %p232, %p233
      %p235 = scmp.ne.s32.totalorder %s227, %s229
      %p236 = scmp.eq.s32.totalorder %s30, 1
      %p237 = por %p235, %p236
      %p238 = scmp.ne.s32.totalorder %s229, %s230
      %p239 = scmp.eq.s32.totalorder %s30, 0
      %p240 = por %p238, %p239
      %p241 = scmp.ne.s32.totalorder %s229, %s230
      %p242 = scmp.eq.s32.totalorder %s31, 1
      %p243 = por %p241, %p242
      %p245 = scmp.ne.s32.totalorder %s230, %s244
      %p246 = scmp.eq.s32.totalorder %s31, 0
      %p247 = por %p245, %p246
      %s249 = sadd.s32 %s248, 1
      %p252 = scmp.eq.s32.totalorder %s25, 1
      %p253 = scmp.ne.s32.totalorder %s248, %s250
      %p254 = scmp.eq.s32.totalorder %s25, 0
      %p255 = por %p253, %p254
      %p256 = scmp.ne.s32.totalorder %s248, %s250
      %p257 = scmp.eq.s32.totalorder %s30, 1
      %p258 = por %p256, %p257
      %p259 = scmp.ne.s32.totalorder %s250, %s251
      %p260 = scmp.eq.s32.totalorder %s30, 0
      %p261 = por %p259, %p260
      %p262 = scmp.ne.s32.totalorder %s250, %s251
      %p263 = scmp.eq.s32.totalorder %s31, 1
      %p264 = por %p262, %p263
      %p266 = scmp.ne.s32.totalorder %s251, %s265
      %p267 = scmp.eq.s32.totalorder %s31, 0
      %p268 = por %p266, %p267
      %s270 = sadd.s32 %s269, 1
      %p273 = scmp.eq.s32.totalorder %s25, 1
      %p274 = scmp.ne.s32.totalorder %s269, %s271
      %p275 = scmp.eq.s32.totalorder %s25, 0
      %p276 = por %p274, %p275
      %p277 = scmp.ne.s32.totalorder %s269, %s271
      %p278 = scmp.eq.s32.totalorder %s30, 1
      %p279 = por %p277, %p278
      %p280 = scmp.ne.s32.totalorder %s271, %s272
      %p281 = scmp.eq.s32.totalorder %s30, 0
      %p282 = por %p280, %p281
      %p283 = scmp.ne.s32.totalorder %s271, %s272
      %p284 = scmp.eq.s32.totalorder %s31, 1
      %p285 = por %p283, %p284
      %p287 = scmp.ne.s32.totalorder %s272, %s286
      %p288 = scmp.eq.s32.totalorder %s31, 0
      %p289 = por %p287, %p288
      %s291 = sadd.s32 %s290, 1
      %p294 = scmp.eq.s32.totalorder %s25, 1
      %p295 = scmp.ne.s32.totalorder %s290, %s292
      %p296 = scmp.eq.s32.totalorder %s25, 0
      %p297 = por %p295, %p296
      %p298 = scmp.ne.s32.totalorder %s290, %s292
      %p299 = scmp.eq.s32.totalorder %s30, 1
      %p300 = por %p298, %p299
      %p301 = scmp.ne.s32.totalorder %s292, %s293
      %p302 = scmp.eq.s32.totalorder %s30, 0
      %p303 = por %p301, %p302
      %p304 = scmp.ne.s32.totalorder %s292, %s293
      %p305 = scmp.eq.s32.totalorder %s31, 1
      %p306 = por %p304, %p305
      %p308 = scmp.ne.s32.totalorder %s293, %s307
      %p309 = scmp.eq.s32.totalorder %s31, 0
      %p310 = por %p308, %p309
      %s312 = sadd.s32 %s311, 1
      %p315 = scmp.eq.s32.totalorder %s25, 1
      %p316 = scmp.ne.s32.totalorder %s311, %s313
      %p317 = scmp.eq.s32.totalorder %s25, 0
      %p318 = por %p316, %p317
      %p319 = scmp.ne.s32.totalorder %s311, %s313
      %p320 = scmp.eq.s32.totalorder %s30, 1
      %p321 = por %p319, %p320
      %p322 = scmp.ne.s32.totalorder %s313, %s314
      %p323 = scmp.eq.s32.totalorder %s30, 0
      %p324 = por %p322, %p323
      %p325 = scmp.ne.s32.totalorder %s313, %s314
      %p326 = scmp.eq.s32.totalorder %s31, 1
      %p327 = por %p325, %p326
      %p329 = scmp.ne.s32.totalorder %s314, %s328
      %p330 = scmp.eq.s32.totalorder %s31, 0
      %p331 = por %p329, %p330
      %s333 = sadd.s32 %s332, 1
      %p336 = scmp.eq.s32.totalorder %s25, 1
      %p337 = scmp.ne.s32.totalorder %s332, %s334
      %p338 = scmp.eq.s32.totalorder %s25, 0
      %p339 = por %p337, %p338
      %p340 = scmp.ne.s32.totalorder %s332, %s334
      %p341 = scmp.eq.s32.totalorder %s30, 1
      %p342 = por %p340, %p341
      %p343 = scmp.ne.s32.totalorder %s334, %s335
      %p344 = scmp.eq.s32.totalorder %s30, 0
      %p345 = por %p343, %p344
      %p346 = scmp.ne.s32.totalorder %s334, %s335
      %p347 = scmp.eq.s32.totalorder %s31, 1
      %p348 = por %p346, %p347
      %p350 = scmp.ne.s32.totalorder %s335, %s349
      %p351 = scmp.eq.s32.totalorder %s31, 0
      %p352 = por %p350, %p351
      %s354 = sadd.s32 %s353, 1
      %p357 = scmp.eq.s32.totalorder %s25, 1
      %p358 = scmp.ne.s32.totalorder %s353, %s355
      %p359 = scmp.eq.s32.totalorder %s25, 0
      %p360 = por %p358, %p359
      %p361 = scmp.ne.s32.totalorder %s353, %s355
      %p362 = scmp.eq.s32.totalorder %s30, 1
      %p363 = por %p361, %p362
      %p364 = scmp.ne.s32.totalorder %s355, %s356
      %p365 = scmp.eq.s32.totalorder %s30, 0
      %p366 = por %p364, %p365
      %p367 = scmp.ne.s32.totalorder %s355, %s356
      %p368 = scmp.eq.s32.totalorder %s31, 1
      %p369 = por %p367, %p368
      %p371 = scmp.ne.s32.totalorder %s356, %s370
      %p372 = scmp.eq.s32.totalorder %s31, 0
      %p373 = por %p371, %p372
      %s374 = ssub.s32 %s25, %s32
      %p375 = scmp.eq.s32.totalorder %s374, 0
      %s377 = sadd.s32 %s376, 1
      %s378 = scalar_select %p375, %s376, %s377
      %p381 = pneg %p375
      %p382 = scmp.eq.s32.totalorder %s25, 1
      %p383 = por %p381, %p382
      %p384 = scmp.ne.s32.totalorder %s376, %s379
      %p385 = scmp.eq.s32.totalorder %s25, 0
      %p386 = por %p384, %p385
      %p387 = scmp.ne.s32.totalorder %s376, %s379
      %p388 = scmp.eq.s32.totalorder %s30, 1
      %p389 = por %p387, %p388
      %p390 = scmp.ne.s32.totalorder %s379, %s380
      %p391 = scmp.eq.s32.totalorder %s30, 0
      %p392 = por %p390, %p391
      %p393 = scmp.ne.s32.totalorder %s379, %s380
      %p394 = scmp.eq.s32.totalorder %s31, 1
      %p395 = por %p393, %p394
      %p397 = scmp.ne.s32.totalorder %s380, %s396
      %p398 = scmp.eq.s32.totalorder %s31, 0
      %p399 = por %p397, %p398
      %p400 = scmp.le.s32.totalorder 1, %s25
      %p401 = scmp.lt.s32.totalorder %s25, 3
      %p402 = pnand %p400, %p401
      %p403 = pneg %p402
      // Predicated region
      $region9: #{forward.1} parent=5 // pred_check
        _
      $region10: #{forward.1} parent=5 // pred_check_branch
        %405 = sbr.rel (%p402) target = $region12
      $region11: #{forward.1} parent=5 // pred_region
        %s406 = ssub.s32 %s25, 1
        // Predicated region
        $region13: #{forward.1} parent=11 // pred_check
          %p407 = pneg %p72
        $region14: #{forward.1} parent=11 // pred_check_branch
          %409 = sbr.rel (%p407) target = $region16
        $region15: #{forward.1} parent=11 // pred_region
          _
        $region16: #{forward.1} parent=11 // pred_fallthru
          _
        // Predicated region
        $region17: #{forward.1} parent=11 // pred_check
          %p410 = pneg %p93
        $region18: #{forward.1} parent=11 // pred_check_branch
          %412 = sbr.rel (%p410) target = $region20
        $region19: #{forward.1} parent=11 // pred_region
          _
        $region20: #{forward.1} parent=11 // pred_fallthru
          _
        // Predicated region
        $region21: #{forward.1} parent=11 // pred_check
          %p413 = pneg %p114
        $region22: #{forward.1} parent=11 // pred_check_branch
          %415 = sbr.rel (%p413) target = $region24
        $region23: #{forward.1} parent=11 // pred_region
          _
        $region24: #{forward.1} parent=11 // pred_fallthru
          _
        // Predicated region
        $region25: #{forward.1} parent=11 // pred_check
          %p416 = pneg %p135
        $region26: #{forward.1} parent=11 // pred_check_branch
          %418 = sbr.rel (%p416) target = $region28
        $region27: #{forward.1} parent=11 // pred_region
          _
        $region28: #{forward.1} parent=11 // pred_fallthru
          _
        // Predicated region
        $region29: #{forward.1} parent=11 // pred_check
          %p419 = pneg %p156
        $region30: #{forward.1} parent=11 // pred_check_branch
          %421 = sbr.rel (%p419) target = $region32
        $region31: #{forward.1} parent=11 // pred_region
          _
        $region32: #{forward.1} parent=11 // pred_fallthru
          _
        // Predicated region
        $region33: #{forward.1} parent=11 // pred_check
          %p422 = pneg %p177
        $region34: #{forward.1} parent=11 // pred_check_branch
          %424 = sbr.rel (%p422) target = $region36
        $region35: #{forward.1} parent=11 // pred_region
          _
        $region36: #{forward.1} parent=11 // pred_fallthru
          _
        // Predicated region
        $region37: #{forward.1} parent=11 // pred_check
          %p425 = pneg %p198
        $region38: #{forward.1} parent=11 // pred_check_branch
          %427 = sbr.rel (%p425) target = $region40
        $region39: #{forward.1} parent=11 // pred_region
          _
        $region40: #{forward.1} parent=11 // pred_fallthru
          _
        // Predicated region
        $region41: #{forward.1} parent=11 // pred_check
          %p428 = pneg %p219
        $region42: #{forward.1} parent=11 // pred_check_branch
          %430 = sbr.rel (%p428) target = $region44
        $region43: #{forward.1} parent=11 // pred_region
          _
        $region44: #{forward.1} parent=11 // pred_fallthru
          _
        // Predicated region
        $region45: #{forward.1} parent=11 // pred_check
          %p431 = pneg %p240
        $region46: #{forward.1} parent=11 // pred_check_branch
          %433 = sbr.rel (%p431) target = $region48
        $region47: #{forward.1} parent=11 // pred_region
          _
        $region48: #{forward.1} parent=11 // pred_fallthru
          _
        // Predicated region
        $region49: #{forward.1} parent=11 // pred_check
          %p434 = pneg %p261
        $region50: #{forward.1} parent=11 // pred_check_branch
          %436 = sbr.rel (%p434) target = $region52
        $region51: #{forward.1} parent=11 // pred_region
          _
        $region52: #{forward.1} parent=11 // pred_fallthru
          _
        // Predicated region
        $region53: #{forward.1} parent=11 // pred_check
          %p437 = pneg %p282
        $region54: #{forward.1} parent=11 // pred_check_branch
          %439 = sbr.rel (%p437) target = $region56
        $region55: #{forward.1} parent=11 // pred_region
          _
        $region56: #{forward.1} parent=11 // pred_fallthru
          _
        // Predicated region
        $region57: #{forward.1} parent=11 // pred_check
          %p440 = pneg %p303
        $region58: #{forward.1} parent=11 // pred_check_branch
          %442 = sbr.rel (%p440) target = $region60
        $region59: #{forward.1} parent=11 // pred_region
          _
        $region60: #{forward.1} parent=11 // pred_fallthru
          _
        // Predicated region
        $region61: #{forward.1} parent=11 // pred_check
          %p443 = pneg %p324
        $region62: #{forward.1} parent=11 // pred_check_branch
          %445 = sbr.rel (%p443) target = $region64
        $region63: #{forward.1} parent=11 // pred_region
          _
        $region64: #{forward.1} parent=11 // pred_fallthru
          _
        // Predicated region
        $region65: #{forward.1} parent=11 // pred_check
          %p446 = pneg %p345
        $region66: #{forward.1} parent=11 // pred_check_branch
          %448 = sbr.rel (%p446) target = $region68
        $region67: #{forward.1} parent=11 // pred_region
          _
        $region68: #{forward.1} parent=11 // pred_fallthru
          _
        // Predicated region
        $region69: #{forward.1} parent=11 // pred_check
          %p449 = pneg %p366
        $region70: #{forward.1} parent=11 // pred_check_branch
          %451 = sbr.rel (%p449) target = $region72
        $region71: #{forward.1} parent=11 // pred_region
          _
        $region72: #{forward.1} parent=11 // pred_fallthru
          _
      $region12: #{forward.1} parent=5 // pred_fallthru
        _
      %p452 = scmp.lt.s32.totalorder %s25, 2
      // Predicated region
      $region73: #{forward.1} parent=5 // pred_check
        %p453 = pneg %p452
      $region74: #{forward.1} parent=5 // pred_check_branch
        %455 = sbr.rel (%p453) target = $region76
      $region75: #{forward.1} parent=5 // pred_region
        // Predicated region
        $region77: #{forward.1} parent=75 // pred_check
          %p456 = pneg %p45
        $region78: #{forward.1} parent=75 // pred_check_branch
          %458 = sbr.rel (%p456) target = $region80
        $region79: #{forward.1} parent=75 // pred_region
          %p459 = scmp.lt.s32.totalorder %s25, 1
          %s460 = scalar_select %p459, %s25, 1
          %s461 = smul.addr %s460, 64
          %s462 = smul.addr %s461, 4
          %s463 = scalar_lea.vmem %s0, %s462
        $region80: #{forward.1} parent=75 // pred_fallthru
          _
      $region76: #{forward.1} parent=5 // pred_fallthru
        _
      %p464 = scmp.le.s32.totalorder 1, %s25
      %p465 = scmp.lt.s32.totalorder %s25, 3
      %p466 = pnand %p464, %p465
      %p467 = pneg %p466
      // Predicated region
      $region81: #{forward.1} parent=5 // pred_check
        _
      $region82: #{forward.1} parent=5 // pred_check_branch
        %469 = sbr.rel (%p466) target = $region84
      $region83: #{forward.1} parent=5 // pred_region
        %s470 = ssub.s32 %s25, 1
        %p471 = scmp.lt.s32.totalorder %s30, 1
        %s472 = scalar_select %p471, %s30, 1
        %s473 = smul.addr %s472, 64
        %s474 = smul.addr %s473, 4
        %s475 = scalar_lea.vmem %s0, %s474
        %p476 = pneg %p51
        %p477 = pneg %p48
        %p478 = pneg %p72
        %p479 = pneg %p69
        %p480 = pneg %p93
        %p481 = pneg %p90
        %p482 = pneg %p114
        %p483 = pneg %p111
        %p484 = pneg %p135
        %p485 = pneg %p132
        %p486 = pneg %p156
        %p487 = pneg %p153
        %p488 = pneg %p177
        %p489 = pneg %p174
        %p490 = pneg %p198
        %p491 = pneg %p195
        %p492 = pneg %p219
        %p493 = pneg %p216
        %p494 = pneg %p240
        %p495 = pneg %p237
        %p496 = pneg %p261
        %p497 = pneg %p258
        %p498 = pneg %p282
        %p499 = pneg %p279
        %p500 = pneg %p303
        %p501 = pneg %p300
        %p502 = pneg %p324
        %p503 = pneg %p321
        %p504 = pneg %p345
        %p505 = pneg %p342
        %p506 = pneg %p366
        %p507 = pneg %p363
        %p508 = pneg %p392
        %p509 = pneg %p389
        %s510 = sand.u32 %s379, 1
        %s511 = scalar_lea.sflag [#allocation3], %s510
        %s512 = sand.u32 %s379, 1
        %s513 = scalar_lea.vmem [#allocation2], %s512
        %p514 = scmp.lt.s32.totalorder %s30, 1
        %s515 = scalar_select %p514, %s30, 1
        %s516 = smul.addr %s515, 64
        %s517 = smul.addr %s516, 4
        %s518 = scalar_lea.vmem %s0, %s517
        %v522 = vld [vmem:[%s518] sm:$0xf]
        %v523 = vld [vmem:[%s518 + $0x4] sm:$0xf]
        %v524 = vld [vmem:[%s518 + $0x8] sm:$0xf]
        %v525 = vld [vmem:[%s518 + $0xc] sm:$0xf]
        %v526 = vld [vmem:[%s518 + $0x10] sm:$0xf]
        %v527 = vld [vmem:[%s518 + $0x14] sm:$0xf]
        %v528 = vld [vmem:[%s518 + $0x18] sm:$0xf]
        %v529 = vld [vmem:[%s518 + $0x1c] sm:$0xf]
        %v530 = vld [vmem:[%s518 + $0x20] sm:$0xf]
        %v531 = vld [vmem:[%s518 + $0x24] sm:$0xf]
        %v532 = vld [vmem:[%s518 + $0x28] sm:$0xf]
        %v533 = vld [vmem:[%s518 + $0x2c] sm:$0xf]
        %v534 = vld [vmem:[%s518 + $0x30] sm:$0xf]
        %v535 = vld [vmem:[%s518 + $0x34] sm:$0xf]
        %v536 = vld [vmem:[%s518 + $0x38] sm:$0xf]
        %v537 = vld [vmem:[%s518 + $0x3c] sm:$0xf]
        %v538 = vld [vmem:[%s518 + $0x40] sm:$0xf]
        %v539 = vld [vmem:[%s518 + $0x44] sm:$0xf]
        %v540 = vld [vmem:[%s518 + $0x48] sm:$0xf]
        %v541 = vld [vmem:[%s518 + $0x4c] sm:$0xf]
        %v542 = vld [vmem:[%s518 + $0x50] sm:$0xf]
        %v543 = vld [vmem:[%s518 + $0x54] sm:$0xf]
        %v544 = vld [vmem:[%s518 + $0x58] sm:$0xf]
        %v545 = vld [vmem:[%s518 + $0x5c] sm:$0xf]
        %v546 = vld [vmem:[%s518 + $0x60] sm:$0xf]
        %v547 = vld [vmem:[%s518 + $0x64] sm:$0xf]
        %v548 = vld [vmem:[%s518 + $0x68] sm:$0xf]
        %v549 = vld [vmem:[%s518 + $0x6c] sm:$0xf]
        %v550 = vld [vmem:[%s518 + $0x70] sm:$0xf]
        %v551 = vld [vmem:[%s518 + $0x74] sm:$0xf]
        %v552 = vld [vmem:[%s518 + $0x78] sm:$0xf]
        %v553 = vld [vmem:[%s518 + $0x7c] sm:$0xf]
        %v554 = vld [vmem:[%s518 + $0x80] sm:$0xf]
        %v555 = vld [vmem:[%s518 + $0x84] sm:$0xf]
        %v556 = vld [vmem:[%s518 + $0x88] sm:$0xf]
        %v557 = vld [vmem:[%s518 + $0x8c] sm:$0xf]
        %v558 = vld [vmem:[%s518 + $0x90] sm:$0xf]
        %v559 = vld [vmem:[%s518 + $0x94] sm:$0xf]
        %v560 = vld [vmem:[%s518 + $0x98] sm:$0xf]
        %v561 = vld [vmem:[%s518 + $0x9c] sm:$0xf]
        %v562 = vld [vmem:[%s518 + $0xa0] sm:$0xf]
        %v563 = vld [vmem:[%s518 + $0xa4] sm:$0xf]
        %v564 = vld [vmem:[%s518 + $0xa8] sm:$0xf]
        %v565 = vld [vmem:[%s518 + $0xac] sm:$0xf]
        %v566 = vld [vmem:[%s518 + $0xb0] sm:$0xf]
        %v567 = vld [vmem:[%s518 + $0xb4] sm:$0xf]
        %v568 = vld [vmem:[%s518 + $0xb8] sm:$0xf]
        %v569 = vld [vmem:[%s518 + $0xbc] sm:$0xf]
        %v570 = vld [vmem:[%s518 + $0xc0] sm:$0xf]
        %v571 = vld [vmem:[%s518 + $0xc4] sm:$0xf]
        %v572 = vld [vmem:[%s518 + $0xc8] sm:$0xf]
        %v573 = vld [vmem:[%s518 + $0xcc] sm:$0xf]
        %v574 = vld [vmem:[%s518 + $0xd0] sm:$0xf]
        %v575 = vld [vmem:[%s518 + $0xd4] sm:$0xf]
        %v576 = vld [vmem:[%s518 + $0xd8] sm:$0xf]
        %v577 = vld [vmem:[%s518 + $0xdc] sm:$0xf]
        %v578 = vld [vmem:[%s518 + $0xe0] sm:$0xf]
        %v579 = vld [vmem:[%s518 + $0xe4] sm:$0xf]
        %v580 = vld [vmem:[%s518 + $0xe8] sm:$0xf]
        %v581 = vld [vmem:[%s518 + $0xec] sm:$0xf]
        %v582 = vld [vmem:[%s518 + $0xf0] sm:$0xf]
        %v583 = vld [vmem:[%s518 + $0xf4] sm:$0xf]
        %v584 = vld [vmem:[%s518 + $0xf8] sm:$0xf]
        %v585 = vld [vmem:[%s518 + $0xfc] sm:$0xf]
        %v586 = vld [vmem:[%s1] sm:$0xf]
        %v587 = vld [vmem:[%s1 + $0x4] sm:$0xf]
        %v588 = vld [vmem:[%s1 + $0x8] sm:$0xf]
        %v589 = vld [vmem:[%s1 + $0xc] sm:$0xf]
        %v654 = vunpack.c.l.b16 %v522
        %v655 = vunpack.c.l.b16 %v523
        %v656 = vunpack.c.l.b16 %v524
        %v657 = vunpack.c.l.b16 %v525
        %v658 = vunpack.c.l.b16 %v526
        %v659 = vunpack.c.l.b16 %v527
        %v660 = vunpack.c.l.b16 %v528
        %v661 = vunpack.c.l.b16 %v529
        %v662 = vunpack.c.l.b16 %v530
        %v663 = vunpack.c.l.b16 %v531
        %v664 = vunpack.c.l.b16 %v532
        %v665 = vunpack.c.l.b16 %v533
        %v666 = vunpack.c.l.b16 %v534
        %v667 = vunpack.c.l.b16 %v535
        %v668 = vunpack.c.l.b16 %v536
        %v669 = vunpack.c.l.b16 %v537
        %v670 = vunpack.c.l.b16 %v538
        %v671 = vunpack.c.l.b16 %v539
        %v672 = vunpack.c.l.b16 %v540
        %v673 = vunpack.c.l.b16 %v541
        %v674 = vunpack.c.l.b16 %v542
        %v675 = vunpack.c.l.b16 %v543
        %v676 = vunpack.c.l.b16 %v544
        %v677 = vunpack.c.l.b16 %v545
        %v678 = vunpack.c.l.b16 %v546
        %v679 = vunpack.c.l.b16 %v547
        %v680 = vunpack.c.l.b16 %v548
        %v681 = vunpack.c.l.b16 %v549
        %v682 = vunpack.c.l.b16 %v550
        %v683 = vunpack.c.l.b16 %v551
        %v684 = vunpack.c.l.b16 %v552
        %v685 = vunpack.c.l.b16 %v553
        %v686 = vunpack.c.l.b16 %v554
        %v687 = vunpack.c.l.b16 %v555
        %v688 = vunpack.c.l.b16 %v556
        %v689 = vunpack.c.l.b16 %v557
        %v690 = vunpack.c.l.b16 %v558
        %v691 = vunpack.c.l.b16 %v559
        %v692 = vunpack.c.l.b16 %v560
        %v693 = vunpack.c.l.b16 %v561
        %v694 = vunpack.c.l.b16 %v562
        %v695 = vunpack.c.l.b16 %v563
        %v696 = vunpack.c.l.b16 %v564
        %v697 = vunpack.c.l.b16 %v565
        %v698 = vunpack.c.l.b16 %v566
        %v699 = vunpack.c.l.b16 %v567
        %v700 = vunpack.c.l.b16 %v568
        %v701 = vunpack.c.l.b16 %v569
        %v702 = vunpack.c.l.b16 %v570
        %v703 = vunpack.c.l.b16 %v571
        %v704 = vunpack.c.l.b16 %v572
        %v705 = vunpack.c.l.b16 %v573
        %v706 = vunpack.c.l.b16 %v574
        %v707 = vunpack.c.l.b16 %v575
        %v708 = vunpack.c.l.b16 %v576
        %v709 = vunpack.c.l.b16 %v577
        %v710 = vunpack.c.l.b16 %v578
        %v711 = vunpack.c.l.b16 %v579
        %v712 = vunpack.c.l.b16 %v580
        %v713 = vunpack.c.l.b16 %v581
        %v714 = vunpack.c.l.b16 %v582
        %v715 = vunpack.c.l.b16 %v583
        %v716 = vunpack.c.l.b16 %v584
        %v717 = vunpack.c.l.b16 %v585
        %v718 = vpack.c.b16 %v655, %v654
        %v719 = vpack.c.b16 %v657, %v656
        %v720 = vpack.c.b16 %v659, %v658
        %v721 = vpack.c.b16 %v661, %v660
        %v722 = vpack.c.b16 %v663, %v662
        %v723 = vpack.c.b16 %v665, %v664
        %v724 = vpack.c.b16 %v667, %v666
        %v725 = vpack.c.b16 %v669, %v668
        %v726 = vpack.c.b16 %v671, %v670
        %v727 = vpack.c.b16 %v673, %v672
        %v728 = vpack.c.b16 %v675, %v674
        %v729 = vpack.c.b16 %v677, %v676
        %v730 = vpack.c.b16 %v679, %v678
        %v731 = vpack.c.b16 %v681, %v680
        %v732 = vpack.c.b16 %v683, %v682
        %v733 = vpack.c.b16 %v685, %v684
        %v734 = vpack.c.b16 %v687, %v686
        %v735 = vpack.c.b16 %v689, %v688
        %v736 = vpack.c.b16 %v691, %v690
        %v737 = vpack.c.b16 %v693, %v692
        %v738 = vpack.c.b16 %v695, %v694
        %v739 = vpack.c.b16 %v697, %v696
        %v740 = vpack.c.b16 %v699, %v698
        %v741 = vpack.c.b16 %v701, %v700
        %v742 = vpack.c.b16 %v703, %v702
        %v743 = vpack.c.b16 %v705, %v704
        %v744 = vpack.c.b16 %v707, %v706
        %v745 = vpack.c.b16 %v709, %v708
        %v746 = vpack.c.b16 %v711, %v710
        %v747 = vpack.c.b16 %v713, %v712
        %v748 = vpack.c.b16 %v715, %v714
        %v749 = vpack.c.b16 %v717, %v716
        %v754 = vunpack.c.l.b16 %v586
        %v755 = vunpack.c.l.b16 %v587
        %v756 = vunpack.c.l.b16 %v588
        %v757 = vunpack.c.l.b16 %v589
        %v758 = vpack.c.b16 %v755, %v754
        %v759 = vpack.c.b16 %v757, %v756
        %vm762 = vcmask 261120
        %v764 = vsel %vm762, %v718, 0
        %v767 = vsel %vm762, %v719, 0
        %v770 = vsel %vm762, %v720, 0
        %v773 = vsel %vm762, %v721, 0
        %v776 = vsel %vm762, %v722, 0
        %v779 = vsel %vm762, %v723, 0
        %v782 = vsel %vm762, %v724, 0
        %v785 = vsel %vm762, %v725, 0
        %v788 = vsel %vm762, %v726, 0
        %v791 = vsel %vm762, %v727, 0
        %v794 = vsel %vm762, %v728, 0
        %v797 = vsel %vm762, %v729, 0
        %v800 = vsel %vm762, %v730, 0
        %v803 = vsel %vm762, %v731, 0
        %v806 = vsel %vm762, %v732, 0
        %v809 = vsel %vm762, %v733, 0
        %v812 = vsel %vm762, %v734, 0
        %v815 = vsel %vm762, %v735, 0
        %v818 = vsel %vm762, %v736, 0
        %v821 = vsel %vm762, %v737, 0
        %v824 = vsel %vm762, %v738, 0
        %v827 = vsel %vm762, %v739, 0
        %v830 = vsel %vm762, %v740, 0
        %v833 = vsel %vm762, %v741, 0
        %v836 = vsel %vm762, %v742, 0
        %v839 = vsel %vm762, %v743, 0
        %v842 = vsel %vm762, %v744, 0
        %v845 = vsel %vm762, %v745, 0
        %v848 = vsel %vm762, %v746, 0
        %v851 = vsel %vm762, %v747, 0
        %v854 = vsel %vm762, %v748, 0
        %v857 = vsel %vm762, %v749, 0
        %859 = vmatprep.subr.bf16.mxu0 0
        %860 = vmatpush1.bf16.msra.mxu0 %v758
        %861 = vmatprep.subr.bf16.mxu0 0
        %862 = vmatpush1.bf16.msra.mxu0 %v759
        %863 = vmatprep.subr.bf16.mxu0 0
        %864 = vmatpush1.bf16.msra.mxu0 0
        %865 = vmatprep.subr.bf16.mxu0 0
        %866 = vmatpush1.bf16.msra.mxu0 0
        %867 = vmatprep.subr.bf16.mxu0 0
        %868 = vmatpush1.bf16.msra.mxu0 0
        %869 = vmatprep.subr.bf16.mxu0 0
        %870 = vmatpush1.bf16.msra.mxu0 0
        %871 = vmatprep.subr.bf16.mxu0 0
        %872 = vmatpush1.bf16.msra.mxu0 0
        %873 = vmatprep.subr.bf16.mxu0 0
        %874 = vmatpush1.bf16.msra.mxu0 0
        %875 = vmatprep.subr.bf16.mxu0 0
        %876 = vmatpush1.bf16.msra.mxu0 0
        %877 = vmatprep.subr.bf16.mxu0 0
        %878 = vmatpush1.bf16.msra.mxu0 0
        %879 = vmatprep.subr.bf16.mxu0 0
        %880 = vmatpush1.bf16.msra.mxu0 0
        %881 = vmatprep.subr.bf16.mxu0 0
        %882 = vmatpush1.bf16.msra.mxu0 0
        %883 = vmatprep.subr.bf16.mxu0 0
        %884 = vmatpush1.bf16.msra.mxu0 0
        %885 = vmatprep.subr.bf16.mxu0 0
        %886 = vmatpush1.bf16.msra.mxu0 0
        %887 = vmatprep.subr.bf16.mxu0 0
        %888 = vmatpush1.bf16.msra.mxu0 0
        %889 = vmatprep.subr.bf16.mxu0 0
        %890 = vmatpush1.bf16.msra.mxu0 0
        %891 = vmatprep.mubr.bf16.mxu0 0
        %892 = vmatmul.mubr.bf16.gmra.mrb[0].mxu0 %v764
        %v893 = vpop.f32.mrb[0].mxu0
        %v894 = vadd.f32 0.0, %v893
        %v895 = vpop.f32.mrb[0].mxu0
        %v896 = vpop.f32.mrb[0].mxu0
        %v897 = vadd.f32 0.0, %v896
        %v898 = vpop.f32.mrb[0].mxu0
        %899 = vmatprep.mubr.bf16.mxu0 0
        %900 = vmatmul.mubr.bf16.gmra.mrb[0].mxu0 %v767
        %v901 = vpop.f32.mrb[0].mxu0
        %v902 = vadd.f32 0.0, %v901
        %v903 = vpop.f32.mrb[0].mxu0
        %v904 = vpop.f32.mrb[0].mxu0
        %v905 = vadd.f32 0.0, %v904
        %v906 = vpop.f32.mrb[0].mxu0
        %907 = vmatprep.mubr.bf16.mxu0 0
        %908 = vmatmul.mubr.bf16.gmra.mrb[0].mxu0 %v770
        %v909 = vpop.f32.mrb[0].mxu0
        %v910 = vadd.f32 0.0, %v909
        %v911 = vpop.f32.mrb[0].mxu0
        %v912 = vpop.f32.mrb[0].mxu0
        %v913 = vadd.f32 0.0, %v912
        %v914 = vpop.f32.mrb[0].mxu0
        %915 = vmatprep.mubr.bf16.mxu0 0
        %916 = vmatmul.mubr.bf16.gmra.mrb[0].mxu0 %v773
        %v917 = vpop.f32.mrb[0].mxu0
        %v918 = vadd.f32 0.0, %v917
        %v919 = vpop.f32.mrb[0].mxu0
        %v920 = vpop.f32.mrb[0].mxu0
        %v921 = vadd.f32 0.0, %v920
        %v922 = vpop.f32.mrb[0].mxu0
        %923 = vmatprep.mubr.bf16.mxu0 0
        %924 = vmatmul.mubr.bf16.gmra.mrb[0].mxu0 %v776
        %v925 = vpop.f32.mrb[0].mxu0
        %v926 = vadd.f32 0.0, %v925
        %v927 = vpop.f32.mrb[0].mxu0
        %v928 = vpop.f32.mrb[0].mxu0
        %v929 = vadd.f32 0.0, %v928
        %v930 = vpop.f32.mrb[0].mxu0
        %931 = vmatprep.mubr.bf16.mxu0 0
        %932 = vmatmul.mubr.bf16.gmra.mrb[0].mxu0 %v779
        %v933 = vpop.f32.mrb[0].mxu0
        %v934 = vadd.f32 0.0, %v933
        %v935 = vpop.f32.mrb[0].mxu0
        %v936 = vpop.f32.mrb[0].mxu0
        %v937 = vadd.f32 0.0, %v936
        %v938 = vpop.f32.mrb[0].mxu0
        %939 = vmatprep.mubr.bf16.mxu0 0
        %940 = vmatmul.mubr.bf16.gmra.mrb[0].mxu0 %v782
        %v941 = vpop.f32.mrb[0].mxu0
        %v942 = vadd.f32 0.0, %v941
        %v943 = vpop.f32.mrb[0].mxu0
        %v944 = vpop.f32.mrb[0].mxu0
        %v945 = vadd.f32 0.0, %v944
        %v946 = vpop.f32.mrb[0].mxu0
        %947 = vmatprep.mubr.bf16.mxu0 0
        %948 = vmatmul.mubr.bf16.gmra.mrb[0].mxu0 %v785
        %v949 = vpop.f32.mrb[0].mxu0
        %v950 = vadd.f32 0.0, %v949
        %v951 = vpop.f32.mrb[0].mxu0
        %v952 = vpop.f32.mrb[0].mxu0
        %v953 = vadd.f32 0.0, %v952
        %v954 = vpop.f32.mrb[0].mxu0
        %955 = vmatprep.mubr.bf16.mxu0 0
        %956 = vmatmul.mubr.bf16.gmra.mrb[0].mxu0 %v788
        %v957 = vpop.f32.mrb[0].mxu0
        %v958 = vadd.f32 0.0, %v957
        %v959 = vpop.f32.mrb[0].mxu0
        %v960 = vpop.f32.mrb[0].mxu0
        %v961 = vadd.f32 0.0, %v960
        %v962 = vpop.f32.mrb[0].mxu0
        %963 = vmatprep.mubr.bf16.mxu0 0
        %964 = vmatmul.mubr.bf16.gmra.mrb[0].mxu0 %v791
        %v965 = vpop.f32.mrb[0].mxu0
        %v966 = vadd.f32 0.0, %v965
        %v967 = vpop.f32.mrb[0].mxu0
        %v968 = vpop.f32.mrb[0].mxu0
        %v969 = vadd.f32 0.0, %v968
        %v970 = vpop.f32.mrb[0].mxu0
        %971 = vmatprep.mubr.bf16.mxu0 0
        %972 = vmatmul.mubr.bf16.gmra.mrb[0].mxu0 %v794
        %v973 = vpop.f32.mrb[0].mxu0
        %v974 = vadd.f32 0.0, %v973
        %v975 = vpop.f32.mrb[0].mxu0
        %v976 = vpop.f32.mrb[0].mxu0
        %v977 = vadd.f32 0.0, %v976
        %v978 = vpop.f32.mrb[0].mxu0
        %979 = vmatprep.mubr.bf16.mxu0 0
        %980 = vmatmul.mubr.bf16.gmra.mrb[0].mxu0 %v797
        %v981 = vpop.f32.mrb[0].mxu0
        %v982 = vadd.f32 0.0, %v981
        %v983 = vpop.f32.mrb[0].mxu0
        %v984 = vpop.f32.mrb[0].mxu0
        %v985 = vadd.f32 0.0, %v984
        %v986 = vpop.f32.mrb[0].mxu0
        %987 = vmatprep.mubr.bf16.mxu0 0
        %988 = vmatmul.mubr.bf16.gmra.mrb[0].mxu0 %v800
        %v989 = vpop.f32.mrb[0].mxu0
        %v990 = vadd.f32 0.0, %v989
        %v991 = vpop.f32.mrb[0].mxu0
        %v992 = vpop.f32.mrb[0].mxu0
        %v993 = vadd.f32 0.0, %v992
        %v994 = vpop.f32.mrb[0].mxu0
        %995 = vmatprep.mubr.bf16.mxu0 0
        %996 = vmatmul.mubr.bf16.gmra.mrb[0].mxu0 %v803
        %v997 = vpop.f32.mrb[0].mxu0
        %v998 = vadd.f32 0.0, %v997
        %v999 = vpop.f32.mrb[0].mxu0
        %v1000 = vpop.f32.mrb[0].mxu0
        %v1001 = vadd.f32 0.0, %v1000
        %v1002 = vpop.f32.mrb[0].mxu0
        %1003 = vmatprep.mubr.bf16.mxu0 0
        %1004 = vmatmul.mubr.bf16.gmra.mrb[0].mxu0 %v806
        %v1005 = vpop.f32.mrb[0].mxu0
        %v1006 = vadd.f32 0.0, %v1005
        %v1007 = vpop.f32.mrb[0].mxu0
        %v1008 = vpop.f32.mrb[0].mxu0
        %v1009 = vadd.f32 0.0, %v1008
        %v1010 = vpop.f32.mrb[0].mxu0
        %1011 = vmatprep.mubr.bf16.mxu0 0
        %1012 = vmatmul.mubr.bf16.gmra.mrb[0].mxu0 %v809
        %v1013 = vpop.f32.mrb[0].mxu0
        %v1014 = vadd.f32 0.0, %v1013
        %v1015 = vpop.f32.mrb[0].mxu0
        %v1016 = vpop.f32.mrb[0].mxu0
        %v1017 = vadd.f32 0.0, %v1016
        %v1018 = vpop.f32.mrb[0].mxu0
        %1019 = vmatprep.mubr.bf16.mxu0 0
        %1020 = vmatmul.mubr.bf16.gmra.mrb[0].mxu0 %v812
        %v1021 = vpop.f32.mrb[0].mxu0
        %v1022 = vadd.f32 0.0, %v1021
        %v1023 = vpop.f32.mrb[0].mxu0
        %v1024 = vpop.f32.mrb[0].mxu0
        %v1025 = vadd.f32 0.0, %v1024
        %v1026 = vpop.f32.mrb[0].mxu0
        %1027 = vmatprep.mubr.bf16.mxu0 0
        %1028 = vmatmul.mubr.bf16.gmra.mrb[0].mxu0 %v815
        %v1029 = vpop.f32.mrb[0].mxu0
        %v1030 = vadd.f32 0.0, %v1029
        %v1031 = vpop.f32.mrb[0].mxu0
        %v1032 = vpop.f32.mrb[0].mxu0
        %v1033 = vadd.f32 0.0, %v1032
        %v1034 = vpop.f32.mrb[0].mxu0
        %1035 = vmatprep.mubr.bf16.mxu0 0
        %1036 = vmatmul.mubr.bf16.gmra.mrb[0].mxu0 %v818
        %v1037 = vpop.f32.mrb[0].mxu0
        %v1038 = vadd.f32 0.0, %v1037
        %v1039 = vpop.f32.mrb[0].mxu0
        %v1040 = vpop.f32.mrb[0].mxu0
        %v1041 = vadd.f32 0.0, %v1040
        %v1042 = vpop.f32.mrb[0].mxu0
        %1043 = vmatprep.mubr.bf16.mxu0 0
        %1044 = vmatmul.mubr.bf16.gmra.mrb[0].mxu0 %v821
        %v1045 = vpop.f32.mrb[0].mxu0
        %v1046 = vadd.f32 0.0, %v1045
        %v1047 = vpop.f32.mrb[0].mxu0
        %v1048 = vpop.f32.mrb[0].mxu0
        %v1049 = vadd.f32 0.0, %v1048
        %v1050 = vpop.f32.mrb[0].mxu0
        %1051 = vmatprep.mubr.bf16.mxu0 0
        %1052 = vmatmul.mubr.bf16.gmra.mrb[0].mxu0 %v824
        %v1053 = vpop.f32.mrb[0].mxu0
        %v1054 = vadd.f32 0.0, %v1053
        %v1055 = vpop.f32.mrb[0].mxu0
        %v1056 = vpop.f32.mrb[0].mxu0
        %v1057 = vadd.f32 0.0, %v1056
        %v1058 = vpop.f32.mrb[0].mxu0
        %1059 = vmatprep.mubr.bf16.mxu0 0
        %1060 = vmatmul.mubr.bf16.gmra.mrb[0].mxu0 %v827
        %v1061 = vpop.f32.mrb[0].mxu0
        %v1062 = vadd.f32 0.0, %v1061
        %v1063 = vpop.f32.mrb[0].mxu0
        %v1064 = vpop.f32.mrb[0].mxu0
        %v1065 = vadd.f32 0.0, %v1064
        %v1066 = vpop.f32.mrb[0].mxu0
        %1067 = vmatprep.mubr.bf16.mxu0 0
        %1068 = vmatmul.mubr.bf16.gmra.mrb[0].mxu0 %v830
        %v1069 = vpop.f32.mrb[0].mxu0
        %v1070 = vadd.f32 0.0, %v1069
        %v1071 = vpop.f32.mrb[0].mxu0
        %v1072 = vpop.f32.mrb[0].mxu0
        %v1073 = vadd.f32 0.0, %v1072
        %v1074 = vpop.f32.mrb[0].mxu0
        %1075 = vmatprep.mubr.bf16.mxu0 0
        %1076 = vmatmul.mubr.bf16.gmra.mrb[0].mxu0 %v833
        %v1077 = vpop.f32.mrb[0].mxu0
        %v1078 = vadd.f32 0.0, %v1077
        %v1079 = vpop.f32.mrb[0].mxu0
        %v1080 = vpop.f32.mrb[0].mxu0
        %v1081 = vadd.f32 0.0, %v1080
        %v1082 = vpop.f32.mrb[0].mxu0
        %1083 = vmatprep.mubr.bf16.mxu0 0
        %1084 = vmatmul.mubr.bf16.gmra.mrb[0].mxu0 %v836
        %v1085 = vpop.f32.mrb[0].mxu0
        %v1086 = vadd.f32 0.0, %v1085
        %v1087 = vpop.f32.mrb[0].mxu0
        %v1088 = vpop.f32.mrb[0].mxu0
        %v1089 = vadd.f32 0.0, %v1088
        %v1090 = vpop.f32.mrb[0].mxu0
        %1091 = vmatprep.mubr.bf16.mxu0 0
        %1092 = vmatmul.mubr.bf16.gmra.mrb[0].mxu0 %v839
        %v1093 = vpop.f32.mrb[0].mxu0
        %v1094 = vadd.f32 0.0, %v1093
        %v1095 = vpop.f32.mrb[0].mxu0
        %v1096 = vpop.f32.mrb[0].mxu0
        %v1097 = vadd.f32 0.0, %v1096
        %v1098 = vpop.f32.mrb[0].mxu0
        %1099 = vmatprep.mubr.bf16.mxu0 0
        %1100 = vmatmul.mubr.bf16.gmra.mrb[0].mxu0 %v842
        %v1101 = vpop.f32.mrb[0].mxu0
        %v1102 = vadd.f32 0.0, %v1101
        %v1103 = vpop.f32.mrb[0].mxu0
        %v1104 = vpop.f32.mrb[0].mxu0
        %v1105 = vadd.f32 0.0, %v1104
        %v1106 = vpop.f32.mrb[0].mxu0
        %1107 = vmatprep.mubr.bf16.mxu0 0
        %1108 = vmatmul.mubr.bf16.gmra.mrb[0].mxu0 %v845
        %v1109 = vpop.f32.mrb[0].mxu0
        %v1110 = vadd.f32 0.0, %v1109
        %v1111 = vpop.f32.mrb[0].mxu0
        %v1112 = vpop.f32.mrb[0].mxu0
        %v1113 = vadd.f32 0.0, %v1112
        %v1114 = vpop.f32.mrb[0].mxu0
        %1115 = vmatprep.mubr.bf16.mxu0 0
        %1116 = vmatmul.mubr.bf16.gmra.mrb[0].mxu0 %v848
        %v1117 = vpop.f32.mrb[0].mxu0
        %v1118 = vadd.f32 0.0, %v1117
        %v1119 = vpop.f32.mrb[0].mxu0
        %v1120 = vpop.f32.mrb[0].mxu0
        %v1121 = vadd.f32 0.0, %v1120
        %v1122 = vpop.f32.mrb[0].mxu0
        %1123 = vmatprep.mubr.bf16.mxu0 0
        %1124 = vmatmul.mubr.bf16.gmra.mrb[0].mxu0 %v851
        %v1125 = vpop.f32.mrb[0].mxu0
        %v1126 = vadd.f32 0.0, %v1125
        %v1127 = vpop.f32.mrb[0].mxu0
        %v1128 = vpop.f32.mrb[0].mxu0
        %v1129 = vadd.f32 0.0, %v1128
        %v1130 = vpop.f32.mrb[0].mxu0
        %1131 = vmatprep.mubr.bf16.mxu0 0
        %1132 = vmatmul.mubr.bf16.gmra.mrb[0].mxu0 %v854
        %v1133 = vpop.f32.mrb[0].mxu0
        %v1134 = vadd.f32 0.0, %v1133
        %v1135 = vpop.f32.mrb[0].mxu0
        %v1136 = vpop.f32.mrb[0].mxu0
        %v1137 = vadd.f32 0.0, %v1136
        %v1138 = vpop.f32.mrb[0].mxu0
        %1139 = vmatprep.mubr.bf16.mxu0 0
        %1140 = vmatmul.mubr.bf16.gmra.mrb[0].mxu0 %v857
        %v1141 = vpop.f32.mrb[0].mxu0
        %v1142 = vadd.f32 0.0, %v1141
        %v1143 = vpop.f32.mrb[0].mxu0
        %v1144 = vpop.f32.mrb[0].mxu0
        %v1145 = vadd.f32 0.0, %v1144
        %v1146 = vpop.f32.mrb[0].mxu0
        %1147 = vdwg.mxu0
        %v1148 = vld [vmem:[%s2] sm:$0x3]
        %v1149 = vlaneseq
        %v1150 = vshrl.u32 %v1149, 7
        %v1151 = vsub.s32 0, %v1150
        %v1152 = vrot.slane %v1148, %v1151
        %v1153 = vmul.f32 %v894, %v1152
        %v1154 = vmul.f32 %v897, %v1152
        %v1155 = vmul.f32 %v902, %v1152
        %v1156 = vmul.f32 %v905, %v1152
        %v1157 = vmul.f32 %v910, %v1152
        %v1158 = vmul.f32 %v913, %v1152
        %v1159 = vmul.f32 %v918, %v1152
        %v1160 = vmul.f32 %v921, %v1152
        %v1161 = vmul.f32 %v926, %v1152
        %v1162 = vmul.f32 %v929, %v1152
        %v1163 = vmul.f32 %v934, %v1152
        %v1164 = vmul.f32 %v937, %v1152
        %v1165 = vmul.f32 %v942, %v1152
        %v1166 = vmul.f32 %v945, %v1152
        %v1167 = vmul.f32 %v950, %v1152
        %v1168 = vmul.f32 %v953, %v1152
        %v1169 = vmul.f32 %v958, %v1152
        %v1170 = vmul.f32 %v961, %v1152
        %v1171 = vmul.f32 %v966, %v1152
        %v1172 = vmul.f32 %v969, %v1152
        %v1173 = vmul.f32 %v974, %v1152
        %v1174 = vmul.f32 %v977, %v1152
        %v1175 = vmul.f32 %v982, %v1152
        %v1176 = vmul.f32 %v985, %v1152
        %v1177 = vmul.f32 %v990, %v1152
        %v1178 = vmul.f32 %v993, %v1152
        %v1179 = vmul.f32 %v998, %v1152
        %v1180 = vmul.f32 %v1001, %v1152
        %v1181 = vmul.f32 %v1006, %v1152
        %v1182 = vmul.f32 %v1009, %v1152
        %v1183 = vmul.f32 %v1014, %v1152
        %v1184 = vmul.f32 %v1017, %v1152
        %v1185 = vmul.f32 %v1022, %v1152
        %v1186 = vmul.f32 %v1025, %v1152
        %v1187 = vmul.f32 %v1030, %v1152
        %v1188 = vmul.f32 %v1033, %v1152
        %v1189 = vmul.f32 %v1038, %v1152
        %v1190 = vmul.f32 %v1041, %v1152
        %v1191 = vmul.f32 %v1046, %v1152
        %v1192 = vmul.f32 %v1049, %v1152
        %v1193 = vmul.f32 %v1054, %v1152
        %v1194 = vmul.f32 %v1057, %v1152
        %v1195 = vmul.f32 %v1062, %v1152
        %v1196 = vmul.f32 %v1065, %v1152
        %v1197 = vmul.f32 %v1070, %v1152
        %v1198 = vmul.f32 %v1073, %v1152
        %v1199 = vmul.f32 %v1078, %v1152
        %v1200 = vmul.f32 %v1081, %v1152
        %v1201 = vmul.f32 %v1086, %v1152
        %v1202 = vmul.f32 %v1089, %v1152
        %v1203 = vmul.f32 %v1094, %v1152
        %v1204 = vmul.f32 %v1097, %v1152
        %v1205 = vmul.f32 %v1102, %v1152
        %v1206 = vmul.f32 %v1105, %v1152
        %v1207 = vmul.f32 %v1110, %v1152
        %v1208 = vmul.f32 %v1113, %v1152
        %v1209 = vmul.f32 %v1118, %v1152
        %v1210 = vmul.f32 %v1121, %v1152
        %v1211 = vmul.f32 %v1126, %v1152
        %v1212 = vmul.f32 %v1129, %v1152
        %v1213 = vmul.f32 %v1134, %v1152
        %v1214 = vmul.f32 %v1137, %v1152
        %v1215 = vmul.f32 %v1142, %v1152
        %v1216 = vmul.f32 %v1145, %v1152
        %v1217 = vlaneseq
        %v1218 = vshrl.u32 %v1217, 7
        %v1219 = vsub.s32 1, %v1218
        %v1220 = vrot.slane %v1148, %v1219
        %v1221 = vadd.f32 %v1153, %v1220
        %v1222 = vadd.f32 %v1154, %v1220
        %v1223 = vadd.f32 %v1155, %v1220
        %v1224 = vadd.f32 %v1156, %v1220
        %v1225 = vadd.f32 %v1157, %v1220
        %v1226 = vadd.f32 %v1158, %v1220
        %v1227 = vadd.f32 %v1159, %v1220
        %v1228 = vadd.f32 %v1160, %v1220
        %v1229 = vadd.f32 %v1161, %v1220
        %v1230 = vadd.f32 %v1162, %v1220
        %v1231 = vadd.f32 %v1163, %v1220
        %v1232 = vadd.f32 %v1164, %v1220
        %v1233 = vadd.f32 %v1165, %v1220
        %v1234 = vadd.f32 %v1166, %v1220
        %v1235 = vadd.f32 %v1167, %v1220
        %v1236 = vadd.f32 %v1168, %v1220
        %v1237 = vadd.f32 %v1169, %v1220
        %v1238 = vadd.f32 %v1170, %v1220
        %v1239 = vadd.f32 %v1171, %v1220
        %v1240 = vadd.f32 %v1172, %v1220
        %v1241 = vadd.f32 %v1173, %v1220
        %v1242 = vadd.f32 %v1174, %v1220
        %v1243 = vadd.f32 %v1175, %v1220
        %v1244 = vadd.f32 %v1176, %v1220
        %v1245 = vadd.f32 %v1177, %v1220
        %v1246 = vadd.f32 %v1178, %v1220
        %v1247 = vadd.f32 %v1179, %v1220
        %v1248 = vadd.f32 %v1180, %v1220
        %v1249 = vadd.f32 %v1181, %v1220
        %v1250 = vadd.f32 %v1182, %v1220
        %v1251 = vadd.f32 %v1183, %v1220
        %v1252 = vadd.f32 %v1184, %v1220
        %v1253 = vadd.f32 %v1185, %v1220
        %v1254 = vadd.f32 %v1186, %v1220
        %v1255 = vadd.f32 %v1187, %v1220
        %v1256 = vadd.f32 %v1188, %v1220
        %v1257 = vadd.f32 %v1189, %v1220
        %v1258 = vadd.f32 %v1190, %v1220
        %v1259 = vadd.f32 %v1191, %v1220
        %v1260 = vadd.f32 %v1192, %v1220
        %v1261 = vadd.f32 %v1193, %v1220
        %v1262 = vadd.f32 %v1194, %v1220
        %v1263 = vadd.f32 %v1195, %v1220
        %v1264 = vadd.f32 %v1196, %v1220
        %v1265 = vadd.f32 %v1197, %v1220
        %v1266 = vadd.f32 %v1198, %v1220
        %v1267 = vadd.f32 %v1199, %v1220
        %v1268 = vadd.f32 %v1200, %v1220
        %v1269 = vadd.f32 %v1201, %v1220
        %v1270 = vadd.f32 %v1202, %v1220
        %v1271 = vadd.f32 %v1203, %v1220
        %v1272 = vadd.f32 %v1204, %v1220
        %v1273 = vadd.f32 %v1205, %v1220
        %v1274 = vadd.f32 %v1206, %v1220
        %v1275 = vadd.f32 %v1207, %v1220
        %v1276 = vadd.f32 %v1208, %v1220
        %v1277 = vadd.f32 %v1209, %v1220
        %v1278 = vadd.f32 %v1210, %v1220
        %v1279 = vadd.f32 %v1211, %v1220
        %v1280 = vadd.f32 %v1212, %v1220
        %v1281 = vadd.f32 %v1213, %v1220
        %v1282 = vadd.f32 %v1214, %v1220
        %v1283 = vadd.f32 %v1215, %v1220
        %v1284 = vadd.f32 %v1216, %v1220
        %v1285 = vmax.f32 %v1221, 0.0
        %v1286 = vmax.f32 %v1222, 0.0
        %v1287 = vmax.f32 %v1223, 0.0
        %v1288 = vmax.f32 %v1224, 0.0
        %v1289 = vmax.f32 %v1225, 0.0
        %v1290 = vmax.f32 %v1226, 0.0
        %v1291 = vmax.f32 %v1227, 0.0
        %v1292 = vmax.f32 %v1228, 0.0
        %v1293 = vmax.f32 %v1229, 0.0
        %v1294 = vmax.f32 %v1230, 0.0
        %v1295 = vmax.f32 %v1231, 0.0
        %v1296 = vmax.f32 %v1232, 0.0
        %v1297 = vmax.f32 %v1233, 0.0
        %v1298 = vmax.f32 %v1234, 0.0
        %v1299 = vmax.f32 %v1235, 0.0
        %v1300 = vmax.f32 %v1236, 0.0
        %v1301 = vmax.f32 %v1237, 0.0
        %v1302 = vmax.f32 %v1238, 0.0
        %v1303 = vmax.f32 %v1239, 0.0
        %v1304 = vmax.f32 %v1240, 0.0
        %v1305 = vmax.f32 %v1241, 0.0
        %v1306 = vmax.f32 %v1242, 0.0
        %v1307 = vmax.f32 %v1243, 0.0
        %v1308 = vmax.f32 %v1244, 0.0
        %v1309 = vmax.f32 %v1245, 0.0
        %v1310 = vmax.f32 %v1246, 0.0
        %v1311 = vmax.f32 %v1247, 0.0
        %v1312 = vmax.f32 %v1248, 0.0
        %v1313 = vmax.f32 %v1249, 0.0
        %v1314 = vmax.f32 %v1250, 0.0
        %v1315 = vmax.f32 %v1251, 0.0
        %v1316 = vmax.f32 %v1252, 0.0
        %v1317 = vmax.f32 %v1253, 0.0
        %v1318 = vmax.f32 %v1254, 0.0
        %v1319 = vmax.f32 %v1255, 0.0
        %v1320 = vmax.f32 %v1256, 0.0
        %v1321 = vmax.f32 %v1257, 0.0
        %v1322 = vmax.f32 %v1258, 0.0
        %v1323 = vmax.f32 %v1259, 0.0
        %v1324 = vmax.f32 %v1260, 0.0
        %v1325 = vmax.f32 %v1261, 0.0
        %v1326 = vmax.f32 %v1262, 0.0
        %v1327 = vmax.f32 %v1263, 0.0
        %v1328 = vmax.f32 %v1264, 0.0
        %v1329 = vmax.f32 %v1265, 0.0
        %v1330 = vmax.f32 %v1266, 0.0
        %v1331 = vmax.f32 %v1267, 0.0
        %v1332 = vmax.f32 %v1268, 0.0
        %v1333 = vmax.f32 %v1269, 0.0
        %v1334 = vmax.f32 %v1270, 0.0
        %v1335 = vmax.f32 %v1271, 0.0
        %v1336 = vmax.f32 %v1272, 0.0
        %v1337 = vmax.f32 %v1273, 0.0
        %v1338 = vmax.f32 %v1274, 0.0
        %v1339 = vmax.f32 %v1275, 0.0
        %v1340 = vmax.f32 %v1276, 0.0
        %v1341 = vmax.f32 %v1277, 0.0
        %v1342 = vmax.f32 %v1278, 0.0
        %v1343 = vmax.f32 %v1279, 0.0
        %v1344 = vmax.f32 %v1280, 0.0
        %v1345 = vmax.f32 %v1281, 0.0
        %v1346 = vmax.f32 %v1282, 0.0
        %v1347 = vmax.f32 %v1283, 0.0
        %v1348 = vmax.f32 %v1284, 0.0
        %v1349 = vpack.c.bf16 %v1286, %v1285
        %v1350 = vpack.c.bf16 %v1288, %v1287
        %v1351 = vpack.c.bf16 %v1290, %v1289
        %v1352 = vpack.c.bf16 %v1292, %v1291
        %v1353 = vpack.c.bf16 %v1294, %v1293
        %v1354 = vpack.c.bf16 %v1296, %v1295
        %v1355 = vpack.c.bf16 %v1298, %v1297
        %v1356 = vpack.c.bf16 %v1300, %v1299
        %v1357 = vpack.c.bf16 %v1302, %v1301
        %v1358 = vpack.c.bf16 %v1304, %v1303
        %v1359 = vpack.c.bf16 %v1306, %v1305
        %v1360 = vpack.c.bf16 %v1308, %v1307
        %v1361 = vpack.c.bf16 %v1310, %v1309
        %v1362 = vpack.c.bf16 %v1312, %v1311
        %v1363 = vpack.c.bf16 %v1314, %v1313
        %v1364 = vpack.c.bf16 %v1316, %v1315
        %v1365 = vpack.c.bf16 %v1318, %v1317
        %v1366 = vpack.c.bf16 %v1320, %v1319
        %v1367 = vpack.c.bf16 %v1322, %v1321
        %v1368 = vpack.c.bf16 %v1324, %v1323
        %v1369 = vpack.c.bf16 %v1326, %v1325
        %v1370 = vpack.c.bf16 %v1328, %v1327
        %v1371 = vpack.c.bf16 %v1330, %v1329
        %v1372 = vpack.c.bf16 %v1332, %v1331
        %v1373 = vpack.c.bf16 %v1334, %v1333
        %v1374 = vpack.c.bf16 %v1336, %v1335
        %v1375 = vpack.c.bf16 %v1338, %v1337
        %v1376 = vpack.c.bf16 %v1340, %v1339
        %v1377 = vpack.c.bf16 %v1342, %v1341
        %v1378 = vpack.c.bf16 %v1344, %v1343
        %v1379 = vpack.c.bf16 %v1346, %v1345
        %v1380 = vpack.c.bf16 %v1348, %v1347
        %v1381 = vmax.bf16 %v1349, %v1365
        %v1382 = vmax.bf16 %v1350, %v1366
        %v1383 = vmax.bf16 %v1351, %v1367
        %v1384 = vmax.bf16 %v1352, %v1368
        %v1385 = vmax.bf16 %v1353, %v1369
        %v1386 = vmax.bf16 %v1354, %v1370
        %v1387 = vmax.bf16 %v1355, %v1371
        %v1388 = vmax.bf16 %v1356, %v1372
        %v1389 = vmax.bf16 %v1381, 0
        %v1390 = vmax.bf16 %v1382, 0
        %v1391 = vmax.bf16 %v1383, %v1365
        %v1392 = vmax.bf16 %v1384, %v1366
        %v1393 = vmax.bf16 %v1385, %v1367
        %v1394 = vmax.bf16 %v1386, %v1368
        %v1395 = vmax.bf16 %v1387, %v1369
        %v1396 = vmax.bf16 %v1388, %v1370
        %v1397 = vmax.bf16 %v1357, %v1373
        %v1398 = vmax.bf16 %v1358, %v1374
        %v1399 = vmax.bf16 %v1359, %v1375
        %v1400 = vmax.bf16 %v1360, %v1376
        %v1401 = vmax.bf16 %v1361, %v1377
        %v1402 = vmax.bf16 %v1362, %v1378
        %v1403 = vmax.bf16 %v1363, %v1379
        %v1404 = vmax.bf16 %v1364, %v1380
        %v1405 = vmax.bf16 %v1397, 0
        %v1406 = vmax.bf16 %v1398, 0
        %v1407 = vmax.bf16 %v1399, %v1373
        %v1408 = vmax.bf16 %v1400, %v1374
        %v1409 = vmax.bf16 %v1401, %v1375
        %v1410 = vmax.bf16 %v1402, %v1376
        %v1411 = vmax.bf16 %v1403, %v1377
        %v1412 = vmax.bf16 %v1404, %v1378
        %v1413 = vlaneseq
        %v1414 = vshrl.u32 %v1413, 7
        %v1415 = vadd.s32 %v1414, 8
        %v1416 = vadd.s32 %v1414, 16
        %v1417 = vadd.s32 %v1414, 24
        %v1418 = vadd.s32 %v1414, 32
        %v1419 = vadd.s32 %v1414, 40
        %v1420 = vadd.s32 %v1414, 48
        %v1421 = vadd.s32 %v1414, 56
        %v1422 = vadd.s32 %v1414, 64
        %v1423 = vadd.s32 %v1414, 72
        %v1424 = vadd.s32 %v1414, 80
        %v1425 = vadd.s32 %v1414, 88
        %v1426 = vadd.s32 %v1414, 96
        %v1427 = vadd.s32 %v1414, 104
        %v1428 = vadd.s32 %v1414, 112
        %v1429 = vadd.s32 %v1414, 120
        %vm1430 = vcmp.lt.s32.totalorder %v1414, 0
        %v1431 = vsub.s32 0, %v1414
        %v1432 = vsel %vm1430, %v1431, %v1414
        %v1433 = vshrl.u32 %v1432, 5
        %v1434 = vand.u32 %v1432, 31
        %v1435 = vsub.s32 0, %v1434
        %v1436 = vsel %vm1430, %v1435, %v1434
        %vm1437 = vcmp.lt.s32.totalorder %v1415, 0
        %v1438 = vsub.s32 0, %v1415
        %v1439 = vsel %vm1437, %v1438, %v1415
        %v1440 = vshrl.u32 %v1439, 5
        %v1441 = vand.u32 %v1439, 31
        %v1442 = vsub.s32 0, %v1441
        %v1443 = vsel %vm1437, %v1442, %v1441
        %vm1444 = vcmp.lt.s32.totalorder %v1416, 0
        %v1445 = vsub.s32 0, %v1416
        %v1446 = vsel %vm1444, %v1445, %v1416
        %v1447 = vshrl.u32 %v1446, 5
        %v1448 = vand.u32 %v1446, 31
        %v1449 = vsub.s32 0, %v1448
        %v1450 = vsel %vm1444, %v1449, %v1448
        %vm1451 = vcmp.lt.s32.totalorder %v1417, 0
        %v1452 = vsub.s32 0, %v1417
        %v1453 = vsel %vm1451, %v1452, %v1417
        %v1454 = vshrl.u32 %v1453, 5
        %v1455 = vand.u32 %v1453, 31
        %v1456 = vsub.s32 0, %v1455
        %v1457 = vsel %vm1451, %v1456, %v1455
        %vm1458 = vcmp.lt.s32.totalorder %v1418, 0
        %v1459 = vsub.s32 0, %v1418
        %v1460 = vsel %vm1458, %v1459, %v1418
        %v1461 = vshrl.u32 %v1460, 5
        %v1462 = vand.u32 %v1460, 31
        %v1463 = vsub.s32 0, %v1462
        %v1464 = vsel %vm1458, %v1463, %v1462
        %vm1465 = vcmp.lt.s32.totalorder %v1419, 0
        %v1466 = vsub.s32 0, %v1419
        %v1467 = vsel %vm1465, %v1466, %v1419
        %v1468 = vshrl.u32 %v1467, 5
        %v1469 = vand.u32 %v1467, 31
        %v1470 = vsub.s32 0, %v1469
        %v1471 = vsel %vm1465, %v1470, %v1469
        %vm1472 = vcmp.lt.s32.totalorder %v1420, 0
        %v1473 = vsub.s32 0, %v1420
        %v1474 = vsel %vm1472, %v1473, %v1420
        %v1475 = vshrl.u32 %v1474, 5
        %v1476 = vand.u32 %v1474, 31
        %v1477 = vsub.s32 0, %v1476
        %v1478 = vsel %vm1472, %v1477, %v1476
        %vm1479 = vcmp.lt.s32.totalorder %v1421, 0
        %v1480 = vsub.s32 0, %v1421
        %v1481 = vsel %vm1479, %v1480, %v1421
        %v1482 = vshrl.u32 %v1481, 5
        %v1483 = vand.u32 %v1481, 31
        %v1484 = vsub.s32 0, %v1483
        %v1485 = vsel %vm1479, %v1484, %v1483
        %vm1486 = vcmp.lt.s32.totalorder %v1422, 0
        %v1487 = vsub.s32 0, %v1422
        %v1488 = vsel %vm1486, %v1487, %v1422
        %v1489 = vshrl.u32 %v1488, 5
        %v1490 = vand.u32 %v1488, 31
        %v1491 = vsub.s32 0, %v1490
        %v1492 = vsel %vm1486, %v1491, %v1490
        %vm1493 = vcmp.lt.s32.totalorder %v1423, 0
        %v1494 = vsub.s32 0, %v1423
        %v1495 = vsel %vm1493, %v1494, %v1423
        %v1496 = vshrl.u32 %v1495, 5
        %v1497 = vand.u32 %v1495, 31
        %v1498 = vsub.s32 0, %v1497
        %v1499 = vsel %vm1493, %v1498, %v1497
        %vm1500 = vcmp.lt.s32.totalorder %v1424, 0
        %v1501 = vsub.s32 0, %v1424
        %v1502 = vsel %vm1500, %v1501, %v1424
        %v1503 = vshrl.u32 %v1502, 5
        %v1504 = vand.u32 %v1502, 31
        %v1505 = vsub.s32 0, %v1504
        %v1506 = vsel %vm1500, %v1505, %v1504
        %vm1507 = vcmp.lt.s32.totalorder %v1425, 0
        %v1508 = vsub.s32 0, %v1425
        %v1509 = vsel %vm1507, %v1508, %v1425
        %v1510 = vshrl.u32 %v1509, 5
        %v1511 = vand.u32 %v1509, 31
        %v1512 = vsub.s32 0, %v1511
        %v1513 = vsel %vm1507, %v1512, %v1511
        %vm1514 = vcmp.lt.s32.totalorder %v1426, 0
        %v1515 = vsub.s32 0, %v1426
        %v1516 = vsel %vm1514, %v1515, %v1426
        %v1517 = vshrl.u32 %v1516, 5
        %v1518 = vand.u32 %v1516, 31
        %v1519 = vsub.s32 0, %v1518
        %v1520 = vsel %vm1514, %v1519, %v1518
        %vm1521 = vcmp.lt.s32.totalorder %v1427, 0
        %v1522 = vsub.s32 0, %v1427
        %v1523 = vsel %vm1521, %v1522, %v1427
        %v1524 = vshrl.u32 %v1523, 5
        %v1525 = vand.u32 %v1523, 31
        %v1526 = vsub.s32 0, %v1525
        %v1527 = vsel %vm1521, %v1526, %v1525
        %vm1528 = vcmp.lt.s32.totalorder %v1428, 0
        %v1529 = vsub.s32 0, %v1428
        %v1530 = vsel %vm1528, %v1529, %v1428
        %v1531 = vshrl.u32 %v1530, 5
        %v1532 = vand.u32 %v1530, 31
        %v1533 = vsub.s32 0, %v1532
        %v1534 = vsel %vm1528, %v1533, %v1532
        %vm1535 = vcmp.lt.s32.totalorder %v1429, 0
        %v1536 = vsub.s32 0, %v1429
        %v1537 = vsel %vm1535, %v1536, %v1429
        %v1538 = vshrl.u32 %v1537, 5
        %v1539 = vand.u32 %v1537, 31
        %v1540 = vsub.s32 0, %v1539
        %v1541 = vsel %vm1535, %v1540, %v1539
        %vm1542 = vcmp.ne.s32.totalorder %v1436, 0
        %vm1543 = vcmp.ne.s32.totalorder %v1443, 0
        %vm1544 = vcmp.ne.s32.totalorder %v1450, 0
        %vm1545 = vcmp.ne.s32.totalorder %v1457, 0
        %vm1546 = vcmp.ne.s32.totalorder %v1464, 0
        %vm1547 = vcmp.ne.s32.totalorder %v1471, 0
        %vm1548 = vcmp.ne.s32.totalorder %v1478, 0
        %vm1549 = vcmp.ne.s32.totalorder %v1485, 0
        %vm1550 = vcmp.ne.s32.totalorder %v1492, 0
        %vm1551 = vcmp.ne.s32.totalorder %v1499, 0
        %vm1552 = vcmp.ne.s32.totalorder %v1506, 0
        %vm1553 = vcmp.ne.s32.totalorder %v1513, 0
        %vm1554 = vcmp.ne.s32.totalorder %v1520, 0
        %vm1555 = vcmp.ne.s32.totalorder %v1527, 0
        %vm1556 = vcmp.ne.s32.totalorder %v1534, 0
        %vm1557 = vcmp.ne.s32.totalorder %v1541, 0
        %vm1558 = vcmp.lt.s32.totalorder %v1436, 0
        %vm1559 = vcmp.lt.s32.totalorder %v1443, 0
        %vm1560 = vcmp.lt.s32.totalorder %v1450, 0
        %vm1561 = vcmp.lt.s32.totalorder %v1457, 0
        %vm1562 = vcmp.lt.s32.totalorder %v1464, 0
        %vm1563 = vcmp.lt.s32.totalorder %v1471, 0
        %vm1564 = vcmp.lt.s32.totalorder %v1478, 0
        %vm1565 = vcmp.lt.s32.totalorder %v1485, 0
        %vm1566 = vcmp.lt.s32.totalorder %v1492, 0
        %vm1567 = vcmp.lt.s32.totalorder %v1499, 0
        %vm1568 = vcmp.lt.s32.totalorder %v1506, 0
        %vm1569 = vcmp.lt.s32.totalorder %v1513, 0
        %vm1570 = vcmp.lt.s32.totalorder %v1520, 0
        %vm1571 = vcmp.lt.s32.totalorder %v1527, 0
        %vm1572 = vcmp.lt.s32.totalorder %v1534, 0
        %vm1573 = vcmp.lt.s32.totalorder %v1541, 0
        %vm1574 = vmand %vm1558, %vm1542
        %vm1575 = vmand %vm1559, %vm1543
        %vm1576 = vmand %vm1560, %vm1544
        %vm1577 = vmand %vm1561, %vm1545
        %vm1578 = vmand %vm1562, %vm1546
        %vm1579 = vmand %vm1563, %vm1547
        %vm1580 = vmand %vm1564, %vm1548
        %vm1581 = vmand %vm1565, %vm1549
        %vm1582 = vmand %vm1566, %vm1550
        %vm1583 = vmand %vm1567, %vm1551
        %vm1584 = vmand %vm1568, %vm1552
        %vm1585 = vmand %vm1569, %vm1553
        %vm1586 = vmand %vm1570, %vm1554
        %vm1587 = vmand %vm1571, %vm1555
        %vm1588 = vmand %vm1572, %vm1556
        %vm1589 = vmand %vm1573, %vm1557
        %v1590 = vadd.s32 %v1436, 32
        %v1591 = vadd.s32 %v1443, 32
        %v1592 = vadd.s32 %v1450, 32
        %v1593 = vadd.s32 %v1457, 32
        %v1594 = vadd.s32 %v1464, 32
        %v1595 = vadd.s32 %v1471, 32
        %v1596 = vadd.s32 %v1478, 32
        %v1597 = vadd.s32 %v1485, 32
        %v1598 = vadd.s32 %v1492, 32
        %v1599 = vadd.s32 %v1499, 32
        %v1600 = vadd.s32 %v1506, 32
        %v1601 = vadd.s32 %v1513, 32
        %v1602 = vadd.s32 %v1520, 32
        %v1603 = vadd.s32 %v1527, 32
        %v1604 = vadd.s32 %v1534, 32
        %v1605 = vadd.s32 %v1541, 32
        %v1606 = vsel %vm1574, %v1590, %v1436
        %v1607 = vsel %vm1575, %v1591, %v1443
        %v1608 = vsel %vm1576, %v1592, %v1450
        %v1609 = vsel %vm1577, %v1593, %v1457
        %v1610 = vsel %vm1578, %v1594, %v1464
        %v1611 = vsel %vm1579, %v1595, %v1471
        %v1612 = vsel %vm1580, %v1596, %v1478
        %v1613 = vsel %vm1581, %v1597, %v1485
        %v1614 = vsel %vm1582, %v1598, %v1492
        %v1615 = vsel %vm1583, %v1599, %v1499
        %v1616 = vsel %vm1584, %v1600, %v1506
        %v1617 = vsel %vm1585, %v1601, %v1513
        %v1618 = vsel %vm1586, %v1602, %v1520
        %v1619 = vsel %vm1587, %v1603, %v1527
        %v1620 = vsel %vm1588, %v1604, %v1534
        %v1621 = vsel %vm1589, %v1605, %v1541
        %vm1622 = vcmp.ge.s32.totalorder %v1606, 8
        %vm1623 = vcmp.ge.s32.totalorder %v1607, 8
        %vm1624 = vcmp.ge.s32.totalorder %v1608, 8
        %vm1625 = vcmp.ge.s32.totalorder %v1609, 8
        %vm1626 = vcmp.ge.s32.totalorder %v1610, 8
        %vm1627 = vcmp.ge.s32.totalorder %v1611, 8
        %vm1628 = vcmp.ge.s32.totalorder %v1612, 8
        %vm1629 = vcmp.ge.s32.totalorder %v1613, 8
        %vm1630 = vcmp.ge.s32.totalorder %v1614, 8
        %vm1631 = vcmp.ge.s32.totalorder %v1615, 8
        %vm1632 = vcmp.ge.s32.totalorder %v1616, 8
        %vm1633 = vcmp.ge.s32.totalorder %v1617, 8
        %vm1634 = vcmp.ge.s32.totalorder %v1618, 8
        %vm1635 = vcmp.ge.s32.totalorder %v1619, 8
        %vm1636 = vcmp.ge.s32.totalorder %v1620, 8
        %vm1637 = vcmp.ge.s32.totalorder %v1621, 8
        %vm1646 = vcmask 1043456
        %v1647 = vrot.slane %v1405, 4
        %v1648 = vrot.slane %v1406, 4
        %v1649 = vsel %vm1646, %v1647, %v1648
        %v1650 = vrot.slane %v1407, 4
        %v1651 = vsel %vm1646, %v1648, %v1650
        %v1652 = vrot.slane %v1408, 4
        %v1653 = vsel %vm1646, %v1650, %v1652
        %v1654 = vrot.slane %v1409, 4
        %v1655 = vsel %vm1646, %v1652, %v1654
        %v1656 = vrot.slane %v1410, 4
        %v1657 = vsel %vm1646, %v1654, %v1656
        %v1658 = vrot.slane %v1411, 4
        %v1659 = vsel %vm1646, %v1656, %v1658
        %v1660 = vrot.slane %v1412, 4
        %v1661 = vsel %vm1646, %v1658, %v1660
        %vm1669 = vcmask 1043456
        %v1672 = vsel %vm1669, 0, %v1647
        %v1674 = vsel %vm1622, 1, 0
        %v1675 = vsel %vm1623, 1, 0
        %v1676 = vsel %vm1624, 1, 0
        %v1677 = vsel %vm1625, 1, 0
        %v1678 = vsel %vm1626, 1, 0
        %v1679 = vsel %vm1627, 1, 0
        %v1680 = vsel %vm1628, 1, 0
        %v1681 = vsel %vm1629, 1, 0
        %v1682 = vsel %vm1630, 1, 0
        %v1683 = vsel %vm1631, 1, 0
        %v1684 = vsel %vm1632, 1, 0
        %v1685 = vsel %vm1633, 1, 0
        %v1686 = vsel %vm1634, 1, 0
        %v1687 = vsel %vm1635, 1, 0
        %v1688 = vsel %vm1636, 1, 0
        %v1689 = vsel %vm1637, 1, 0
        %vm1690 = vcmp.eq.s32.totalorder %v1674, 1
        %vm1691 = vcmp.eq.s32.totalorder %v1675, 1
        %vm1692 = vcmp.eq.s32.totalorder %v1676, 1
        %vm1693 = vcmp.eq.s32.totalorder %v1677, 1
        %vm1694 = vcmp.eq.s32.totalorder %v1678, 1
        %vm1695 = vcmp.eq.s32.totalorder %v1679, 1
        %vm1696 = vcmp.eq.s32.totalorder %v1680, 1
        %vm1697 = vcmp.eq.s32.totalorder %v1681, 1
        %vm1698 = vcmp.eq.s32.totalorder %v1682, 1
        %vm1699 = vcmp.eq.s32.totalorder %v1683, 1
        %vm1700 = vcmp.eq.s32.totalorder %v1684, 1
        %vm1701 = vcmp.eq.s32.totalorder %v1685, 1
        %vm1702 = vcmp.eq.s32.totalorder %v1686, 1
        %vm1703 = vcmp.eq.s32.totalorder %v1687, 1
        %vm1704 = vcmp.eq.s32.totalorder %v1688, 1
        %vm1705 = vcmp.eq.s32.totalorder %v1689, 1
        %vm1706 = vmpackc.low %vm1690, %vm1690
        %vm1707 = vmpackc.low %vm1691, %vm1691
        %vm1708 = vmpackc.low %vm1692, %vm1692
        %vm1709 = vmpackc.low %vm1693, %vm1693
        %vm1710 = vmpackc.low %vm1694, %vm1694
        %vm1711 = vmpackc.low %vm1695, %vm1695
        %vm1712 = vmpackc.low %vm1696, %vm1696
        %vm1713 = vmpackc.low %vm1697, %vm1697
        %vm1714 = vmpackc.low %vm1698, %vm1698
        %vm1715 = vmpackc.low %vm1699, %vm1699
        %vm1716 = vmpackc.low %vm1700, %vm1700
        %vm1717 = vmpackc.low %vm1701, %vm1701
        %vm1718 = vmpackc.low %vm1702, %vm1702
        %vm1719 = vmpackc.low %vm1703, %vm1703
        %vm1720 = vmpackc.low %vm1704, %vm1704
        %vm1721 = vmpackc.low %vm1705, %vm1705
        %v1722 = vsel %vm1706, 65537, 0
        %v1723 = vsel %vm1707, 65537, 0
        %v1724 = vsel %vm1708, 65537, 0
        %v1725 = vsel %vm1709, 65537, 0
        %v1726 = vsel %vm1710, 65537, 0
        %v1727 = vsel %vm1711, 65537, 0
        %v1728 = vsel %vm1712, 65537, 0
        %v1729 = vsel %vm1713, 65537, 0
        %v1730 = vsel %vm1714, 65537, 0
        %v1731 = vsel %vm1715, 65537, 0
        %v1732 = vsel %vm1716, 65537, 0
        %v1733 = vsel %vm1717, 65537, 0
        %v1734 = vsel %vm1718, 65537, 0
        %v1735 = vsel %vm1719, 65537, 0
        %v1736 = vsel %vm1720, 65537, 0
        %v1737 = vsel %vm1721, 65537, 0
        %v1738 = vunpack.c.l.b16 %v1722
        %v1739 = vunpack.c.l.b16 %v1723
        %v1740 = vunpack.c.l.b16 %v1724
        %v1741 = vunpack.c.l.b16 %v1725
        %v1742 = vunpack.c.l.b16 %v1726
        %v1743 = vunpack.c.l.b16 %v1727
        %v1744 = vunpack.c.l.b16 %v1728
        %v1745 = vunpack.c.l.b16 %v1729
        %v1746 = vunpack.c.l.b16 %v1730
        %v1747 = vunpack.c.l.b16 %v1731
        %v1748 = vunpack.c.l.b16 %v1732
        %v1749 = vunpack.c.l.b16 %v1733
        %v1750 = vunpack.c.l.b16 %v1734
        %v1751 = vunpack.c.l.b16 %v1735
        %v1752 = vunpack.c.l.b16 %v1736
        %v1753 = vunpack.c.l.b16 %v1737
        %v1754 = vpack.c.b16 %v1739, %v1738
        %v1755 = vpack.c.b16 %v1741, %v1740
        %v1756 = vpack.c.b16 %v1743, %v1742
        %v1757 = vpack.c.b16 %v1745, %v1744
        %v1758 = vpack.c.b16 %v1747, %v1746
        %v1759 = vpack.c.b16 %v1749, %v1748
        %v1760 = vpack.c.b16 %v1751, %v1750
        %v1761 = vpack.c.b16 %v1753, %v1752
        %vm1762 = vcmp.ne.s16.totalorder %v1754, 0
        %vm1763 = vcmp.ne.s16.totalorder %v1755, 0
        %vm1764 = vcmp.ne.s16.totalorder %v1756, 0
        %vm1765 = vcmp.ne.s16.totalorder %v1757, 0
        %vm1766 = vcmp.ne.s16.totalorder %v1758, 0
        %vm1767 = vcmp.ne.s16.totalorder %v1759, 0
        %vm1768 = vcmp.ne.s16.totalorder %v1760, 0
        %vm1769 = vcmp.ne.s16.totalorder %v1761, 0
        %v1770 = vsel %vm1762, %v1672, 0
        %v1771 = vsel %vm1763, %v1649, 0
        %v1772 = vsel %vm1764, %v1651, 0
        %v1773 = vsel %vm1765, %v1653, 0
        %v1774 = vsel %vm1766, %v1655, 0
        %v1775 = vsel %vm1767, %v1657, 0
        %v1776 = vsel %vm1768, %v1659, 0
        %v1777 = vsel %vm1769, %v1661, 0
        %v1778 = vmax.bf16 %v1389, %v1405
        %v1779 = vmax.bf16 %v1390, %v1406
        %v1780 = vmax.bf16 %v1391, %v1407
        %v1781 = vmax.bf16 %v1392, %v1408
        %v1782 = vmax.bf16 %v1393, %v1409
        %v1783 = vmax.bf16 %v1394, %v1410
        %v1784 = vmax.bf16 %v1395, %v1411
        %v1785 = vmax.bf16 %v1396, %v1412
        %v1786 = vmax.bf16 %v1778, %v1770
        %v1787 = vmax.bf16 %v1779, %v1771
        %v1788 = vmax.bf16 %v1780, %v1772
        %v1789 = vmax.bf16 %v1781, %v1773
        %v1790 = vmax.bf16 %v1782, %v1774
        %v1791 = vmax.bf16 %v1783, %v1775
        %v1792 = vmax.bf16 %v1784, %v1776
        %v1793 = vmax.bf16 %v1785, %v1777
        %v1794 = vld [vmem:[%s3] sm:$0xf]
        %vm1795 = vcmask 64512
        %v1797 = vsel %vm1795, %v1786, 0
        %v1800 = vsel %vm1795, %v1787, 0
        %v1803 = vsel %vm1795, %v1788, 0
        %v1806 = vsel %vm1795, %v1789, 0
        %v1809 = vsel %vm1795, %v1790, 0
        %v1812 = vsel %vm1795, %v1791, 0
        %v1815 = vsel %vm1795, %v1792, 0
        %v1818 = vsel %vm1795, %v1793, 0
        %v1821 = vsel %vm1669, %v1794, 0
        %1823 = vmatprep.subr.bf16.mxu0 0
        %1824 = vmatpush1.bf16.msra.mxu0 %v1821
        %1825 = vmatprep.subr.bf16.mxu0 0
        %1826 = vmatpush1.bf16.msra.mxu0 0
        %1827 = vmatprep.subr.bf16.mxu0 0
        %1828 = vmatpush1.bf16.msra.mxu0 0
        %1829 = vmatprep.subr.bf16.mxu0 0
        %1830 = vmatpush1.bf16.msra.mxu0 0
        %1831 = vmatprep.subr.bf16.mxu0 0
        %1832 = vmatpush1.bf16.msra.mxu0 0
        %1833 = vmatprep.subr.bf16.mxu0 0
        %1834 = vmatpush1.bf16.msra.mxu0 0
        %1835 = vmatprep.subr.bf16.mxu0 0
        %1836 = vmatpush1.bf16.msra.mxu0 0
        %1837 = vmatprep.subr.bf16.mxu0 0
        %1838 = vmatpush1.bf16.msra.mxu0 0
        %1839 = vmatprep.subr.bf16.mxu0 0
        %1840 = vmatpush1.bf16.msra.mxu0 0
        %1841 = vmatprep.subr.bf16.mxu0 0
        %1842 = vmatpush1.bf16.msra.mxu0 0
        %1843 = vmatprep.subr.bf16.mxu0 0
        %1844 = vmatpush1.bf16.msra.mxu0 0
        %1845 = vmatprep.subr.bf16.mxu0 0
        %1846 = vmatpush1.bf16.msra.mxu0 0
        %1847 = vmatprep.subr.bf16.mxu0 0
        %1848 = vmatpush1.bf16.msra.mxu0 0
        %1849 = vmatprep.subr.bf16.mxu0 0
        %1850 = vmatpush1.bf16.msra.mxu0 0
        %1851 = vmatprep.subr.bf16.mxu0 0
        %1852 = vmatpush1.bf16.msra.mxu0 0
        %1853 = vmatprep.subr.bf16.mxu0 0
        %1854 = vmatpush1.bf16.msra.mxu0 0
        %1855 = vmatprep.mubr.bf16.mxu0 0
        %1856 = vmatmul.mubr.bf16.gmra.mrb[0].mxu0 %v1797
        %v1857 = vpop.f32.mrb[0].mxu0
        %v1858 = vadd.f32 0.0, %v1857
        %v1859 = vpop.f32.mrb[0].mxu0
        %v1860 = vpop.f32.mrb[0].mxu0
        %v1861 = vadd.f32 0.0, %v1860
        %v1862 = vpop.f32.mrb[0].mxu0
        %1863 = vmatprep.mubr.bf16.mxu0 0
        %1864 = vmatmul.mubr.bf16.gmra.mrb[0].mxu0 %v1800
        %v1865 = vpop.f32.mrb[0].mxu0
        %v1866 = vadd.f32 0.0, %v1865
        %v1867 = vpop.f32.mrb[0].mxu0
        %v1868 = vpop.f32.mrb[0].mxu0
        %v1869 = vadd.f32 0.0, %v1868
        %v1870 = vpop.f32.mrb[0].mxu0
        %1871 = vmatprep.mubr.bf16.mxu0 0
        %1872 = vmatmul.mubr.bf16.gmra.mrb[0].mxu0 %v1803
        %v1873 = vpop.f32.mrb[0].mxu0
        %v1874 = vadd.f32 0.0, %v1873
        %v1875 = vpop.f32.mrb[0].mxu0
        %v1876 = vpop.f32.mrb[0].mxu0
        %v1877 = vadd.f32 0.0, %v1876
        %v1878 = vpop.f32.mrb[0].mxu0
        %1879 = vmatprep.mubr.bf16.mxu0 0
        %1880 = vmatmul.mubr.bf16.gmra.mrb[0].mxu0 %v1806
        %v1881 = vpop.f32.mrb[0].mxu0
        %v1882 = vadd.f32 0.0, %v1881
        %v1883 = vpop.f32.mrb[0].mxu0
        %v1884 = vpop.f32.mrb[0].mxu0
        %v1885 = vadd.f32 0.0, %v1884
        %v1886 = vpop.f32.mrb[0].mxu0
        %1887 = vmatprep.mubr.bf16.mxu0 0
        %1888 = vmatmul.mubr.bf16.gmra.mrb[0].mxu0 %v1809
        %v1889 = vpop.f32.mrb[0].mxu0
        %v1890 = vadd.f32 0.0, %v1889
        %v1891 = vpop.f32.mrb[0].mxu0
        %v1892 = vpop.f32.mrb[0].mxu0
        %v1893 = vadd.f32 0.0, %v1892
        %v1894 = vpop.f32.mrb[0].mxu0
        %1895 = vmatprep.mubr.bf16.mxu0 0
        %1896 = vmatmul.mubr.bf16.gmra.mrb[0].mxu0 %v1812
        %v1897 = vpop.f32.mrb[0].mxu0
        %v1898 = vadd.f32 0.0, %v1897
        %v1899 = vpop.f32.mrb[0].mxu0
        %v1900 = vpop.f32.mrb[0].mxu0
        %v1901 = vadd.f32 0.0, %v1900
        %v1902 = vpop.f32.mrb[0].mxu0
        %1903 = vmatprep.mubr.bf16.mxu0 0
        %1904 = vmatmul.mubr.bf16.gmra.mrb[0].mxu0 %v1815
        %v1905 = vpop.f32.mrb[0].mxu0
        %v1906 = vadd.f32 0.0, %v1905
        %v1907 = vpop.f32.mrb[0].mxu0
        %v1908 = vpop.f32.mrb[0].mxu0
        %v1909 = vadd.f32 0.0, %v1908
        %v1910 = vpop.f32.mrb[0].mxu0
        %1911 = vmatprep.mubr.bf16.mxu0 0
        %1912 = vmatmul.mubr.bf16.gmra.mrb[0].mxu0 %v1818
        %v1913 = vpop.f32.mrb[0].mxu0
        %v1914 = vadd.f32 0.0, %v1913
        %v1915 = vpop.f32.mrb[0].mxu0
        %v1916 = vpop.f32.mrb[0].mxu0
        %v1917 = vadd.f32 0.0, %v1916
        %v1918 = vpop.f32.mrb[0].mxu0
        %1919 = vdwg.mxu0
        %v1920 = vld [vmem:[%s4] sm:$0x3]
        %v1921 = vlaneseq
        %v1922 = vshrl.u32 %v1921, 7
        %v1923 = vsub.s32 0, %v1922
        %v1924 = vrot.slane %v1920, %v1923
        %v1925 = vmul.f32 %v1858, %v1924
        %v1926 = vmul.f32 %v1861, %v1924
        %v1927 = vmul.f32 %v1866, %v1924
        %v1928 = vmul.f32 %v1869, %v1924
        %v1929 = vmul.f32 %v1874, %v1924
        %v1930 = vmul.f32 %v1877, %v1924
        %v1931 = vmul.f32 %v1882, %v1924
        %v1932 = vmul.f32 %v1885, %v1924
        %v1933 = vmul.f32 %v1890, %v1924
        %v1934 = vmul.f32 %v1893, %v1924
        %v1935 = vmul.f32 %v1898, %v1924
        %v1936 = vmul.f32 %v1901, %v1924
        %v1937 = vmul.f32 %v1906, %v1924
        %v1938 = vmul.f32 %v1909, %v1924
        %v1939 = vmul.f32 %v1914, %v1924
        %v1940 = vmul.f32 %v1917, %v1924
        %v1941 = vlaneseq
        %v1942 = vshrl.u32 %v1941, 7
        %v1943 = vsub.s32 1, %v1942
        %v1944 = vrot.slane %v1920, %v1943
        %v1945 = vadd.f32 %v1925, %v1944
        %v1946 = vadd.f32 %v1926, %v1944
        %v1947 = vadd.f32 %v1927, %v1944
        %v1948 = vadd.f32 %v1928, %v1944
        %v1949 = vadd.f32 %v1929, %v1944
        %v1950 = vadd.f32 %v1930, %v1944
        %v1951 = vadd.f32 %v1931, %v1944
        %v1952 = vadd.f32 %v1932, %v1944
        %v1953 = vadd.f32 %v1933, %v1944
        %v1954 = vadd.f32 %v1934, %v1944
        %v1955 = vadd.f32 %v1935, %v1944
        %v1956 = vadd.f32 %v1936, %v1944
        %v1957 = vadd.f32 %v1937, %v1944
        %v1958 = vadd.f32 %v1938, %v1944
        %v1959 = vadd.f32 %v1939, %v1944
        %v1960 = vadd.f32 %v1940, %v1944
        %v1961 = vmax.f32 %v1945, 0.0
        %v1962 = vmax.f32 %v1946, 0.0
        %v1963 = vmax.f32 %v1947, 0.0
        %v1964 = vmax.f32 %v1948, 0.0
        %v1965 = vmax.f32 %v1949, 0.0
        %v1966 = vmax.f32 %v1950, 0.0
        %v1967 = vmax.f32 %v1951, 0.0
        %v1968 = vmax.f32 %v1952, 0.0
        %v1969 = vmax.f32 %v1953, 0.0
        %v1970 = vmax.f32 %v1954, 0.0
        %v1971 = vmax.f32 %v1955, 0.0
        %v1972 = vmax.f32 %v1956, 0.0
        %v1973 = vmax.f32 %v1957, 0.0
        %v1974 = vmax.f32 %v1958, 0.0
        %v1975 = vmax.f32 %v1959, 0.0
        %v1976 = vmax.f32 %v1960, 0.0
        %v1977 = vsel %vm762, %v1961, 0.0
        %v1978 = vsel %vm762, %v1962, 0.0
        %v1979 = vadd.f32 %v1977, %v1978
        %v1980 = vsel %vm762, %v1963, 0.0
        %v1981 = vadd.f32 %v1979, %v1980
        %v1982 = vsel %vm762, %v1964, 0.0
        %v1983 = vadd.f32 %v1981, %v1982
        %v1984 = vsel %vm762, %v1965, 0.0
        %v1985 = vadd.f32 %v1983, %v1984
        %v1986 = vsel %vm762, %v1966, 0.0
        %v1987 = vadd.f32 %v1985, %v1986
        %v1988 = vsel %vm762, %v1967, 0.0
        %v1989 = vadd.f32 %v1987, %v1988
        %v1990 = vsel %vm762, %v1968, 0.0
        %v1991 = vadd.f32 %v1989, %v1990
        %v1992 = vsel %vm762, %v1969, 0.0
        %v1993 = vadd.f32 %v1991, %v1992
        %v1994 = vsel %vm762, %v1970, 0.0
        %v1995 = vadd.f32 %v1993, %v1994
        %v1996 = vsel %vm762, %v1971, 0.0
        %v1997 = vadd.f32 %v1995, %v1996
        %v1998 = vsel %vm762, %v1972, 0.0
        %v1999 = vadd.f32 %v1997, %v1998
        %v2000 = vsel %vm762, %v1973, 0.0
        %v2001 = vadd.f32 %v1999, %v2000
        %v2002 = vsel %vm762, %v1974, 0.0
        %v2003 = vadd.f32 %v2001, %v2002
        %v2004 = vsel %vm762, %v1975, 0.0
        %v2005 = vadd.f32 %v2003, %v2004
        %v2006 = vsel %vm762, %v1976, 0.0
        %v2007 = vadd.f32 %v2005, %v2006
        %v2008 = vrcp.pop 16.0
        %v2009 = vmul.f32 %v2007, %v2008
        %v2011 = vrot.slane %v2009, 7
        %vm2013 = vcmask 1040384
        %v2014 = vsel %vm2013, 0.0, %v2011
        %v2015 = vrot.slane %v2009, 1
        %v2017 = vsel %vm1669, %v2015, 0.0
        %2018 = vrot.lane.b32.xlu0 %v2009, 32
        %v2019 = vpop.permute.xlu0 %2018
        %2022 = vrot.lane.b32.xlu0 %v2017, 64
        %v2023 = vpop.permute.xlu0 %2022
        %v2025 = vsel %vm762, %v2014, %v2019
        %vm2026 = vcmask 523264
        %v2027 = vsel %vm2026, %v2025, %v2023
        %v2028 = vpack.c.bf16 %v2027, %v2027
        %v2029 = vld [vmem:[%s5] sm:$0xf]
        %v2030 = vld [vmem:[%s5 + $0x4] sm:$0xf]
        %v2031 = vld [vmem:[%s5 + $0x8] sm:$0xf]
        %v2032 = vld [vmem:[%s5 + $0xc] sm:$0xf]
        %v2033 = vld [vmem:[%s5 + $0x10] sm:$0xf]
        %v2034 = vld [vmem:[%s5 + $0x14] sm:$0xf]
        %v2035 = vld [vmem:[%s5 + $0x18] sm:$0xf]
        %v2036 = vld [vmem:[%s5 + $0x1c] sm:$0xf]
        %v2037 = vld [vmem:[%s5 + $0x20] sm:$0xf]
        %v2038 = vld [vmem:[%s5 + $0x24] sm:$0xf]
        %v2039 = vld [vmem:[%s5 + $0x28] sm:$0xf]
        %v2040 = vld [vmem:[%s5 + $0x2c] sm:$0xf]
        %v2053 = vunpack.c.l.b16 %v2029
        %v2054 = vunpack.c.l.b16 %v2030
        %v2055 = vunpack.c.l.b16 %v2031
        %v2056 = vunpack.c.l.b16 %v2032
        %v2057 = vunpack.c.l.b16 %v2033
        %v2058 = vunpack.c.l.b16 %v2034
        %v2059 = vunpack.c.l.b16 %v2035
        %v2060 = vunpack.c.l.b16 %v2036
        %v2061 = vunpack.c.l.b16 %v2037
        %v2062 = vunpack.c.l.b16 %v2038
        %v2063 = vunpack.c.l.b16 %v2039
        %v2064 = vunpack.c.l.b16 %v2040
        %v2065 = vpack.c.b16 %v2054, %v2053
        %v2066 = vpack.c.b16 %v2056, %v2055
        %v2067 = vpack.c.b16 %v2058, %v2057
        %v2068 = vpack.c.b16 %v2060, %v2059
        %v2069 = vpack.c.b16 %v2062, %v2061
        %v2070 = vpack.c.b16 %v2064, %v2063
        %vm2077 = vcmask 785408
        %v2079 = vsel %vm2077, %v2028, 0
        %2081 = vmatprep.subr.bf16.mxu0 0
        %2082 = vmatpush1.bf16.msra.mxu0 %v2065
        %2083 = vmatprep.subr.bf16.mxu0 0
        %2084 = vmatpush1.bf16.msra.mxu0 %v2066
        %2085 = vmatprep.subr.bf16.mxu0 0
        %2086 = vmatpush1.bf16.msra.mxu0 %v2067
        %2087 = vmatprep.subr.bf16.mxu0 0
        %2088 = vmatpush1.bf16.msra.mxu0 %v2068
        %2089 = vmatprep.subr.bf16.mxu0 0
        %2090 = vmatpush1.bf16.msra.mxu0 %v2069
        %2091 = vmatprep.subr.bf16.mxu0 0
        %2092 = vmatpush1.bf16.msra.mxu0 %v2070
        %2093 = vmatprep.subr.bf16.mxu0 0
        %2094 = vmatpush1.bf16.msra.mxu0 0
        %2095 = vmatprep.subr.bf16.mxu0 0
        %2096 = vmatpush1.bf16.msra.mxu0 0
        %2097 = vmatprep.subr.bf16.mxu0 0
        %2098 = vmatpush1.bf16.msra.mxu0 0
        %2099 = vmatprep.subr.bf16.mxu0 0
        %2100 = vmatpush1.bf16.msra.mxu0 0
        %2101 = vmatprep.subr.bf16.mxu0 0
        %2102 = vmatpush1.bf16.msra.mxu0 0
        %2103 = vmatprep.subr.bf16.mxu0 0
        %2104 = vmatpush1.bf16.msra.mxu0 0
        %2105 = vmatprep.subr.bf16.mxu0 0
        %2106 = vmatpush1.bf16.msra.mxu0 0
        %2107 = vmatprep.subr.bf16.mxu0 0
        %2108 = vmatpush1.bf16.msra.mxu0 0
        %2109 = vmatprep.subr.bf16.mxu0 0
        %2110 = vmatpush1.bf16.msra.mxu0 0
        %2111 = vmatprep.subr.bf16.mxu0 0
        %2112 = vmatpush1.bf16.msra.mxu0 0
        %2113 = vmatprep.mubr.bf16.mxu0 0
        %2114 = vmatmul.mubr.bf16.gmra.mrb[0].mxu0 %v2079
        %v2115 = vpop.f32.mrb[0].mxu0
        %v2116 = vadd.f32 0.0, %v2115
        %v2117 = vpop.f32.mrb[0].mxu0
        %v2118 = vpop.f32.mrb[0].mxu0
        %v2119 = vpop.f32.mrb[0].mxu0
        %2120 = vdwg.mxu0
        %v2121 = vld [vmem:[%s6] sm:$0x3]
        %v2122 = vlaneseq
        %v2123 = vshrl.u32 %v2122, 7
        %v2124 = vsub.s32 0, %v2123
        %v2125 = vrot.slane %v2121, %v2124
        %v2126 = vmul.f32 %v2116, %v2125
        %v2127 = vlaneseq
        %v2128 = vshrl.u32 %v2127, 7
        %v2129 = vsub.s32 1, %v2128
        %v2130 = vrot.slane %v2121, %v2129
        %v2131 = vadd.f32 %v2126, %v2130
        %v2132 = vmax.f32 %v2131, 0.0
        %v2134 = vrot.slane %v2132, 7
        %v2136 = vsel %vm2013, 0.0, %v2134
        %v2137 = vrot.slane %v2132, 1
        %v2139 = vsel %vm1669, %v2137, 0.0
        %2140 = vrot.lane.b32.xlu0 %v2132, 64
        %v2141 = vpop.permute.xlu0 %2140
        %v2143 = vsel %vm2026, %v2136, %v2141
        %v2144 = vpack.c.bf16 %v2143, %v2143
        %v2145 = vpack.c.bf16 %v2139, %v2139
        %v2146 = vld [vmem:[%s7] sm:$0xf]
        %v2147 = vld [vmem:[%s7 + $0x4] sm:$0xf]
        %v2148 = vld [vmem:[%s7 + $0x8] sm:$0xf]
        %v2149 = vld [vmem:[%s7 + $0xc] sm:$0xf]
        %v2150 = vld [vmem:[%s7 + $0x10] sm:$0xf]
        %v2151 = vld [vmem:[%s7 + $0x14] sm:$0xf]
        %v2152 = vld [vmem:[%s7 + $0x18] sm:$0xf]
        %v2153 = vld [vmem:[%s7 + $0x1c] sm:$0xf]
        %v2154 = vld [vmem:[%s7 + $0x20] sm:$0xf]
        %v2155 = vld [vmem:[%s7 + $0x24] sm:$0xf]
        %v2156 = vld [vmem:[%s7 + $0x28] sm:$0xf]
        %v2157 = vld [vmem:[%s7 + $0x2c] sm:$0xf]
        %v2158 = vld [vmem:[%s7 + $0x30] sm:$0xf]
        %v2159 = vld [vmem:[%s7 + $0x34] sm:$0xf]
        %v2160 = vld [vmem:[%s7 + $0x38] sm:$0xf]
        %v2161 = vld [vmem:[%s7 + $0x3c] sm:$0xf]
        %v2162 = vld [vmem:[%s7 + $0x40] sm:$0xf]
        %v2163 = vld [vmem:[%s7 + $0x44] sm:$0xf]
        %v2164 = vld [vmem:[%s7 + $0x48] sm:$0xf]
        %v2165 = vld [vmem:[%s7 + $0x4c] sm:$0xf]
        %v2166 = vld [vmem:[%s7 + $0x50] sm:$0xf]
        %v2167 = vld [vmem:[%s7 + $0x54] sm:$0xf]
        %v2168 = vld [vmem:[%s7 + $0x58] sm:$0xf]
        %v2169 = vld [vmem:[%s7 + $0x5c] sm:$0xf]
        %v2194 = vunpack.c.l.b16 %v2146
        %v2195 = vunpack.c.l.b16 %v2147
        %v2196 = vunpack.c.l.b16 %v2148
        %v2197 = vunpack.c.l.b16 %v2149
        %v2198 = vunpack.c.l.b16 %v2150
        %v2199 = vunpack.c.l.b16 %v2151
        %v2200 = vunpack.c.l.b16 %v2152
        %v2201 = vunpack.c.l.b16 %v2153
        %v2202 = vunpack.c.l.b16 %v2154
        %v2203 = vunpack.c.l.b16 %v2155
        %v2204 = vunpack.c.l.b16 %v2156
        %v2205 = vunpack.c.l.b16 %v2157
        %v2206 = vunpack.c.l.b16 %v2158
        %v2207 = vunpack.c.l.b16 %v2159
        %v2208 = vunpack.c.l.b16 %v2160
        %v2209 = vunpack.c.l.b16 %v2161
        %v2210 = vunpack.c.l.b16 %v2162
        %v2211 = vunpack.c.l.b16 %v2163
        %v2212 = vunpack.c.l.b16 %v2164
        %v2213 = vunpack.c.l.b16 %v2165
        %v2214 = vunpack.c.l.b16 %v2166
        %v2215 = vunpack.c.l.b16 %v2167
        %v2216 = vunpack.c.l.b16 %v2168
        %v2217 = vunpack.c.l.b16 %v2169
        %v2218 = vpack.c.b16 %v2195, %v2194
        %v2219 = vpack.c.b16 %v2197, %v2196
        %v2220 = vpack.c.b16 %v2199, %v2198
        %v2221 = vpack.c.b16 %v2201, %v2200
        %v2222 = vpack.c.b16 %v2203, %v2202
        %v2223 = vpack.c.b16 %v2205, %v2204
        %v2224 = vpack.c.b16 %v2207, %v2206
        %v2225 = vpack.c.b16 %v2209, %v2208
        %v2226 = vpack.c.b16 %v2211, %v2210
        %v2227 = vpack.c.b16 %v2213, %v2212
        %v2228 = vpack.c.b16 %v2215, %v2214
        %v2229 = vpack.c.b16 %v2217, %v2216
        %v2243 = vsel %vm2026, %v2145, 0
        %2245 = vmatprep.subr.bf16.mxu0 0
        %2246 = vmatpush1.bf16.msra.mxu0 %v2218
        %2247 = vmatprep.subr.bf16.mxu0 0
        %2248 = vmatpush1.bf16.msra.mxu0 %v2219
        %2249 = vmatprep.subr.bf16.mxu0 0
        %2250 = vmatpush1.bf16.msra.mxu0 %v2220
        %2251 = vmatprep.subr.bf16.mxu0 0
        %2252 = vmatpush1.bf16.msra.mxu0 %v2221
        %2253 = vmatprep.subr.bf16.mxu0 0
        %2254 = vmatpush1.bf16.msra.mxu0 %v2222
        %2255 = vmatprep.subr.bf16.mxu0 0
        %2256 = vmatpush1.bf16.msra.mxu0 %v2223
        %2257 = vmatprep.subr.bf16.mxu0 0
        %2258 = vmatpush1.bf16.msra.mxu0 %v2224
        %2259 = vmatprep.subr.bf16.mxu0 0
        %2260 = vmatpush1.bf16.msra.mxu0 %v2225
        %2261 = vmatprep.subr.bf16.mxu0 0
        %2262 = vmatpush1.bf16.msra.mxu0 %v2226
        %2263 = vmatprep.subr.bf16.mxu0 0
        %2264 = vmatpush1.bf16.msra.mxu0 %v2227
        %2265 = vmatprep.subr.bf16.mxu0 0
        %2266 = vmatpush1.bf16.msra.mxu0 %v2228
        %2267 = vmatprep.subr.bf16.mxu0 0
        %2268 = vmatpush1.bf16.msra.mxu0 %v2229
        %2269 = vmatprep.subr.bf16.mxu0 0
        %2270 = vmatpush1.bf16.msra.mxu0 0
        %2271 = vmatprep.subr.bf16.mxu0 0
        %2272 = vmatpush1.bf16.msra.mxu0 0
        %2273 = vmatprep.subr.bf16.mxu0 0
        %2274 = vmatpush1.bf16.msra.mxu0 0
        %2275 = vmatprep.subr.bf16.mxu0 0
        %2276 = vmatpush1.bf16.msra.mxu0 0
        %2277 = vmatprep.mubr.bf16.mxu0 %v2243
        %2278 = vmatmul.mubr.bf16.gmra.mrb[0].mxu0 %v2144
        %v2279 = vpop.f32.mrb[0].mxu0
        %v2280 = vadd.f32 0.0, %v2279
        %v2281 = vpop.f32.mrb[0].mxu0
        %v2282 = vpop.f32.mrb[0].mxu0
        %v2283 = vpop.f32.mrb[0].mxu0
        %2284 = vdwg.mxu0
        %v2285 = vld [vmem:[%s8] sm:$0x3]
        %v2286 = vlaneseq
        %v2287 = vshrl.u32 %v2286, 7
        %v2288 = vsub.s32 0, %v2287
        %v2289 = vrot.slane %v2285, %v2288
        %v2290 = vmul.f32 %v2280, %v2289
        %v2291 = vlaneseq
        %v2292 = vshrl.u32 %v2291, 7
        %v2293 = vsub.s32 1, %v2292
        %v2294 = vrot.slane %v2285, %v2293
        %v2295 = vadd.f32 %v2290, %v2294
        %v2296 = vmax.f32 %v2295, 0.0
        %v2298 = vrot.slane %v2296, 7
        %v2300 = vsel %vm2013, 0.0, %v2298
        %v2301 = vrot.slane %v2296, 1
        %v2303 = vsel %vm1669, %v2301, 0.0
        %2304 = vrot.lane.b32.xlu0 %v2296, 64
        %v2305 = vpop.permute.xlu0 %2304
        %v2307 = vsel %vm2026, %v2300, %v2305
        %v2308 = vpack.c.bf16 %v2307, %v2307
        %v2309 = vpack.c.bf16 %v2303, %v2303
        %v2310 = vld [vmem:[%s9] sm:$0xf]
        %v2311 = vld [vmem:[%s9 + $0x4] sm:$0xf]
        %v2312 = vld [vmem:[%s9 + $0x8] sm:$0xf]
        %v2313 = vld [vmem:[%s9 + $0xc] sm:$0xf]
        %v2314 = vld [vmem:[%s9 + $0x10] sm:$0xf]
        %v2315 = vld [vmem:[%s9 + $0x14] sm:$0xf]
        %v2316 = vld [vmem:[%s9 + $0x18] sm:$0xf]
        %v2317 = vld [vmem:[%s9 + $0x1c] sm:$0xf]
        %v2318 = vld [vmem:[%s9 + $0x20] sm:$0xf]
        %v2319 = vld [vmem:[%s9 + $0x24] sm:$0xf]
        %v2320 = vld [vmem:[%s9 + $0x28] sm:$0xf]
        %v2321 = vld [vmem:[%s9 + $0x2c] sm:$0xf]
        %v2322 = vld [vmem:[%s9 + $0x30] sm:$0xf]
        %v2323 = vld [vmem:[%s9 + $0x34] sm:$0xf]
        %v2324 = vld [vmem:[%s9 + $0x38] sm:$0xf]
        %v2325 = vld [vmem:[%s9 + $0x3c] sm:$0xf]
        %v2326 = vld [vmem:[%s9 + $0x40] sm:$0xf]
        %v2327 = vld [vmem:[%s9 + $0x44] sm:$0xf]
        %v2328 = vld [vmem:[%s9 + $0x48] sm:$0xf]
        %v2329 = vld [vmem:[%s9 + $0x4c] sm:$0xf]
        %v2330 = vld [vmem:[%s9 + $0x50] sm:$0xf]
        %v2331 = vld [vmem:[%s9 + $0x54] sm:$0xf]
        %v2332 = vld [vmem:[%s9 + $0x58] sm:$0xf]
        %v2333 = vld [vmem:[%s9 + $0x5c] sm:$0xf]
        %v2358 = vunpack.c.l.b16 %v2310
        %v2359 = vunpack.c.l.b16 %v2311
        %v2360 = vunpack.c.l.b16 %v2312
        %v2361 = vunpack.c.l.b16 %v2313
        %v2362 = vunpack.c.l.b16 %v2314
        %v2363 = vunpack.c.l.b16 %v2315
        %v2364 = vunpack.c.l.b16 %v2316
        %v2365 = vunpack.c.l.b16 %v2317
        %v2366 = vunpack.c.l.b16 %v2318
        %v2367 = vunpack.c.l.b16 %v2319
        %v2368 = vunpack.c.l.b16 %v2320
        %v2369 = vunpack.c.l.b16 %v2321
        %v2370 = vunpack.c.l.b16 %v2322
        %v2371 = vunpack.c.l.b16 %v2323
        %v2372 = vunpack.c.l.b16 %v2324
        %v2373 = vunpack.c.l.b16 %v2325
        %v2374 = vunpack.c.l.b16 %v2326
        %v2375 = vunpack.c.l.b16 %v2327
        %v2376 = vunpack.c.l.b16 %v2328
        %v2377 = vunpack.c.l.b16 %v2329
        %v2378 = vunpack.c.l.b16 %v2330
        %v2379 = vunpack.c.l.b16 %v2331
        %v2380 = vunpack.c.l.b16 %v2332
        %v2381 = vunpack.c.l.b16 %v2333
        %v2382 = vpack.c.b16 %v2359, %v2358
        %v2383 = vpack.c.b16 %v2361, %v2360
        %v2384 = vpack.c.b16 %v2363, %v2362
        %v2385 = vpack.c.b16 %v2365, %v2364
        %v2386 = vpack.c.b16 %v2367, %v2366
        %v2387 = vpack.c.b16 %v2369, %v2368
        %v2388 = vpack.c.b16 %v2371, %v2370
        %v2389 = vpack.c.b16 %v2373, %v2372
        %v2390 = vpack.c.b16 %v2375, %v2374
        %v2391 = vpack.c.b16 %v2377, %v2376
        %v2392 = vpack.c.b16 %v2379, %v2378
        %v2393 = vpack.c.b16 %v2381, %v2380
        %v2407 = vsel %vm2026, %v2309, 0
        %2409 = vmatprep.subr.bf16.mxu0 0
        %2410 = vmatpush1.bf16.msra.mxu0 %v2382
        %2411 = vmatprep.subr.bf16.mxu0 0
        %2412 = vmatpush1.bf16.msra.mxu0 %v2383
        %2413 = vmatprep.subr.bf16.mxu0 0
        %2414 = vmatpush1.bf16.msra.mxu0 %v2384
        %2415 = vmatprep.subr.bf16.mxu0 0
        %2416 = vmatpush1.bf16.msra.mxu0 %v2385
        %2417 = vmatprep.subr.bf16.mxu0 0
        %2418 = vmatpush1.bf16.msra.mxu0 %v2386
        %2419 = vmatprep.subr.bf16.mxu0 0
        %2420 = vmatpush1.bf16.msra.mxu0 %v2387
        %2421 = vmatprep.subr.bf16.mxu0 0
        %2422 = vmatpush1.bf16.msra.mxu0 %v2388
        %2423 = vmatprep.subr.bf16.mxu0 0
        %2424 = vmatpush1.bf16.msra.mxu0 %v2389
        %2425 = vmatprep.subr.bf16.mxu0 0
        %2426 = vmatpush1.bf16.msra.mxu0 %v2390
        %2427 = vmatprep.subr.bf16.mxu0 0
        %2428 = vmatpush1.bf16.msra.mxu0 %v2391
        %2429 = vmatprep.subr.bf16.mxu0 0
        %2430 = vmatpush1.bf16.msra.mxu0 %v2392
        %2431 = vmatprep.subr.bf16.mxu0 0
        %2432 = vmatpush1.bf16.msra.mxu0 %v2393
        %2433 = vmatprep.subr.bf16.mxu0 0
        %2434 = vmatpush1.bf16.msra.mxu0 0
        %2435 = vmatprep.subr.bf16.mxu0 0
        %2436 = vmatpush1.bf16.msra.mxu0 0
        %2437 = vmatprep.subr.bf16.mxu0 0
        %2438 = vmatpush1.bf16.msra.mxu0 0
        %2439 = vmatprep.subr.bf16.mxu0 0
        %2440 = vmatpush1.bf16.msra.mxu0 0
        %2441 = vmatprep.mubr.bf16.mxu0 %v2407
        %2442 = vmatmul.mubr.bf16.gmra.mrb[0].mxu0 %v2308
        %v2443 = vpop.f32.mrb[0].mxu0
        %v2444 = vadd.f32 0.0, %v2443
        %v2445 = vpop.f32.mrb[0].mxu0
        %v2446 = vpop.f32.mrb[0].mxu0
        %v2447 = vpop.f32.mrb[0].mxu0
        %2448 = vdwg.mxu0
        %v2449 = vld [vmem:[%s10] sm:$0x3]
        %v2450 = vlaneseq
        %v2451 = vshrl.u32 %v2450, 7
        %v2452 = vsub.s32 0, %v2451
        %v2453 = vrot.slane %v2449, %v2452
        %v2454 = vmul.f32 %v2444, %v2453
        %v2455 = vlaneseq
        %v2456 = vshrl.u32 %v2455, 7
        %v2457 = vsub.s32 1, %v2456
        %v2458 = vrot.slane %v2449, %v2457
        %v2459 = vadd.f32 %v2454, %v2458
        %v2460 = vmax.f32 %v2459, 0.0
        %v2462 = vrot.slane %v2460, 7
        %v2464 = vsel %vm2013, 0.0, %v2462
        %v2465 = vrot.slane %v2460, 1
        %v2467 = vsel %vm1669, %v2465, 0.0
        %v2468 = vpack.c.bf16 %v2464, %v2464
        %v2469 = vpack.c.bf16 %v2460, %v2460
        %v2470 = vpack.c.bf16 %v2467, %v2467
        %v2471 = vld [vmem:[%s11] sm:$0xf]
        %v2472 = vld [vmem:[%s11 + $0x4] sm:$0xf]
        %v2473 = vld [vmem:[%s11 + $0x8] sm:$0xf]
        %v2474 = vld [vmem:[%s11 + $0xc] sm:$0xf]
        %v2475 = vld [vmem:[%s11 + $0x10] sm:$0xf]
        %v2476 = vld [vmem:[%s11 + $0x14] sm:$0xf]
        %v2477 = vld [vmem:[%s11 + $0x18] sm:$0xf]
        %v2478 = vld [vmem:[%s11 + $0x1c] sm:$0xf]
        %v2479 = vld [vmem:[%s11 + $0x20] sm:$0xf]
        %v2480 = vld [vmem:[%s11 + $0x24] sm:$0xf]
        %v2481 = vld [vmem:[%s11 + $0x28] sm:$0xf]
        %v2482 = vld [vmem:[%s11 + $0x2c] sm:$0xf]
        %v2483 = vld [vmem:[%s11 + $0x30] sm:$0xf]
        %v2484 = vld [vmem:[%s11 + $0x34] sm:$0xf]
        %v2485 = vld [vmem:[%s11 + $0x38] sm:$0xf]
        %v2486 = vld [vmem:[%s11 + $0x3c] sm:$0xf]
        %v2487 = vld [vmem:[%s11 + $0x40] sm:$0xf]
        %v2488 = vld [vmem:[%s11 + $0x44] sm:$0xf]
        %v2489 = vld [vmem:[%s11 + $0x48] sm:$0xf]
        %v2490 = vld [vmem:[%s11 + $0x4c] sm:$0xf]
        %v2491 = vld [vmem:[%s11 + $0x50] sm:$0xf]
        %v2492 = vld [vmem:[%s11 + $0x54] sm:$0xf]
        %v2493 = vld [vmem:[%s11 + $0x58] sm:$0xf]
        %v2494 = vld [vmem:[%s11 + $0x5c] sm:$0xf]
        %v2495 = vld [vmem:[%s11 + $0x60] sm:$0xf]
        %v2496 = vld [vmem:[%s11 + $0x64] sm:$0xf]
        %v2497 = vld [vmem:[%s11 + $0x68] sm:$0xf]
        %v2498 = vld [vmem:[%s11 + $0x6c] sm:$0xf]
        %v2499 = vld [vmem:[%s11 + $0x70] sm:$0xf]
        %v2500 = vld [vmem:[%s11 + $0x74] sm:$0xf]
        %v2501 = vld [vmem:[%s11 + $0x78] sm:$0xf]
        %v2502 = vld [vmem:[%s11 + $0x7c] sm:$0xf]
        %v2503 = vld [vmem:[%s11 + $0x80] sm:$0xf]
        %v2504 = vld [vmem:[%s11 + $0x84] sm:$0xf]
        %v2505 = vld [vmem:[%s11 + $0x88] sm:$0xf]
        %v2506 = vld [vmem:[%s11 + $0x8c] sm:$0xf]
        %v2507 = vld [vmem:[%s11 + $0x90] sm:$0xf]
        %v2508 = vld [vmem:[%s11 + $0x94] sm:$0xf]
        %v2509 = vld [vmem:[%s11 + $0x98] sm:$0xf]
        %v2510 = vld [vmem:[%s11 + $0x9c] sm:$0xf]
        %v2511 = vld [vmem:[%s11 + $0xa0] sm:$0xf]
        %v2512 = vld [vmem:[%s11 + $0xa4] sm:$0xf]
        %v2513 = vld [vmem:[%s11 + $0xa8] sm:$0xf]
        %v2514 = vld [vmem:[%s11 + $0xac] sm:$0xf]
        %v2515 = vld [vmem:[%s11 + $0xb0] sm:$0xf]
        %v2516 = vld [vmem:[%s11 + $0xb4] sm:$0xf]
        %v2517 = vld [vmem:[%s11 + $0xb8] sm:$0xf]
        %v2518 = vld [vmem:[%s11 + $0xbc] sm:$0xf]
        %v2567 = vunpack.c.l.b16 %v2471
        %v2568 = vunpack.c.l.b16 %v2472
        %v2569 = vunpack.c.l.b16 %v2473
        %v2570 = vunpack.c.l.b16 %v2474
        %v2571 = vunpack.c.l.b16 %v2475
        %v2572 = vunpack.c.l.b16 %v2476
        %v2573 = vunpack.c.l.b16 %v2477
        %v2574 = vunpack.c.l.b16 %v2478
        %v2575 = vunpack.c.l.b16 %v2479
        %v2576 = vunpack.c.l.b16 %v2480
        %v2577 = vunpack.c.l.b16 %v2481
        %v2578 = vunpack.c.l.b16 %v2482
        %v2579 = vunpack.c.l.b16 %v2483
        %v2580 = vunpack.c.l.b16 %v2484
        %v2581 = vunpack.c.l.b16 %v2485
        %v2582 = vunpack.c.l.b16 %v2486
        %v2583 = vunpack.c.l.b16 %v2487
        %v2584 = vunpack.c.l.b16 %v2488
        %v2585 = vunpack.c.l.b16 %v2489
        %v2586 = vunpack.c.l.b16 %v2490
        %v2587 = vunpack.c.l.b16 %v2491
        %v2588 = vunpack.c.l.b16 %v2492
        %v2589 = vunpack.c.l.b16 %v2493
        %v2590 = vunpack.c.l.b16 %v2494
        %v2591 = vunpack.c.l.b16 %v2495
        %v2592 = vunpack.c.l.b16 %v2496
        %v2593 = vunpack.c.l.b16 %v2497
        %v2594 = vunpack.c.l.b16 %v2498
        %v2595 = vunpack.c.l.b16 %v2499
        %v2596 = vunpack.c.l.b16 %v2500
        %v2597 = vunpack.c.l.b16 %v2501
        %v2598 = vunpack.c.l.b16 %v2502
        %v2599 = vunpack.c.l.b16 %v2503
        %v2600 = vunpack.c.l.b16 %v2504
        %v2601 = vunpack.c.l.b16 %v2505
        %v2602 = vunpack.c.l.b16 %v2506
        %v2603 = vunpack.c.l.b16 %v2507
        %v2604 = vunpack.c.l.b16 %v2508
        %v2605 = vunpack.c.l.b16 %v2509
        %v2606 = vunpack.c.l.b16 %v2510
        %v2607 = vunpack.c.l.b16 %v2511
        %v2608 = vunpack.c.l.b16 %v2512
        %v2609 = vunpack.c.l.b16 %v2513
        %v2610 = vunpack.c.l.b16 %v2514
        %v2611 = vunpack.c.l.b16 %v2515
        %v2612 = vunpack.c.l.b16 %v2516
        %v2613 = vunpack.c.l.b16 %v2517
        %v2614 = vunpack.c.l.b16 %v2518
        %v2615 = vpack.c.b16 %v2568, %v2567
        %v2616 = vpack.c.b16 %v2570, %v2569
        %v2617 = vpack.c.b16 %v2572, %v2571
        %v2618 = vpack.c.b16 %v2574, %v2573
        %v2619 = vpack.c.b16 %v2576, %v2575
        %v2620 = vpack.c.b16 %v2578, %v2577
        %v2621 = vpack.c.b16 %v2580, %v2579
        %v2622 = vpack.c.b16 %v2582, %v2581
        %v2623 = vpack.c.b16 %v2584, %v2583
        %v2624 = vpack.c.b16 %v2586, %v2585
        %v2625 = vpack.c.b16 %v2588, %v2587
        %v2626 = vpack.c.b16 %v2590, %v2589
        %v2627 = vpack.c.b16 %v2592, %v2591
        %v2628 = vpack.c.b16 %v2594, %v2593
        %v2629 = vpack.c.b16 %v2596, %v2595
        %v2630 = vpack.c.b16 %v2598, %v2597
        %v2631 = vpack.c.b16 %v2600, %v2599
        %v2632 = vpack.c.b16 %v2602, %v2601
        %v2633 = vpack.c.b16 %v2604, %v2603
        %v2634 = vpack.c.b16 %v2606, %v2605
        %v2635 = vpack.c.b16 %v2608, %v2607
        %v2636 = vpack.c.b16 %v2610, %v2609
        %v2637 = vpack.c.b16 %v2612, %v2611
        %v2638 = vpack.c.b16 %v2614, %v2613
        %2663 = vmatprep.subr.bf16.mxu0 0
        %2664 = vmatpush1.bf16.msra.mxu0 %v2615
        %2665 = vmatprep.subr.bf16.mxu0 0
        %2666 = vmatpush1.bf16.msra.mxu0 %v2616
        %2667 = vmatprep.subr.bf16.mxu0 0
        %2668 = vmatpush1.bf16.msra.mxu0 %v2617
        %2669 = vmatprep.subr.bf16.mxu0 0
        %2670 = vmatpush1.bf16.msra.mxu0 %v2618
        %2671 = vmatprep.subr.bf16.mxu0 0
        %2672 = vmatpush1.bf16.msra.mxu0 %v2619
        %2673 = vmatprep.subr.bf16.mxu0 0
        %2674 = vmatpush1.bf16.msra.mxu0 %v2620
        %2675 = vmatprep.subr.bf16.mxu0 0
        %2676 = vmatpush1.bf16.msra.mxu0 %v2621
        %2677 = vmatprep.subr.bf16.mxu0 0
        %2678 = vmatpush1.bf16.msra.mxu0 %v2622
        %2679 = vmatprep.subr.bf16.mxu0 0
        %2680 = vmatpush1.bf16.msra.mxu0 %v2623
        %2681 = vmatprep.subr.bf16.mxu0 0
        %2682 = vmatpush1.bf16.msra.mxu0 %v2624
        %2683 = vmatprep.subr.bf16.mxu0 0
        %2684 = vmatpush1.bf16.msra.mxu0 %v2625
        %2685 = vmatprep.subr.bf16.mxu0 0
        %2686 = vmatpush1.bf16.msra.mxu0 %v2626
        %2687 = vmatprep.subr.bf16.mxu0 0
        %2688 = vmatpush1.bf16.msra.mxu0 %v2627
        %2689 = vmatprep.subr.bf16.mxu0 0
        %2690 = vmatpush1.bf16.msra.mxu0 %v2628
        %2691 = vmatprep.subr.bf16.mxu0 0
        %2692 = vmatpush1.bf16.msra.mxu0 %v2629
        %2693 = vmatprep.subr.bf16.mxu0 0
        %2694 = vmatpush1.bf16.msra.mxu0 %v2630
        %2695 = vmatprep.mubr.bf16.mxu0 %v2469
        %2696 = vmatmul.mubr.bf16.gmra.mrb[0].mxu0 %v2468
        %v2697 = vpop.f32.mrb[0].mxu0
        %v2698 = vadd.f32 0.0, %v2697
        %v2699 = vpop.f32.mrb[0].mxu0
        %v2700 = vpop.f32.mrb[0].mxu0
        %v2701 = vpop.f32.mrb[0].mxu0
        %2702 = vdwg.mxu0
        %2703 = vmatprep.subr.bf16.mxu0 0
        %2704 = vmatpush1.bf16.msra.mxu0 %v2631
        %2705 = vmatprep.subr.bf16.mxu0 0
        %2706 = vmatpush1.bf16.msra.mxu0 %v2632
        %2707 = vmatprep.subr.bf16.mxu0 0
        %2708 = vmatpush1.bf16.msra.mxu0 %v2633
        %2709 = vmatprep.subr.bf16.mxu0 0
        %2710 = vmatpush1.bf16.msra.mxu0 %v2634
        %2711 = vmatprep.subr.bf16.mxu0 0
        %2712 = vmatpush1.bf16.msra.mxu0 %v2635
        %2713 = vmatprep.subr.bf16.mxu0 0
        %2714 = vmatpush1.bf16.msra.mxu0 %v2636
        %2715 = vmatprep.subr.bf16.mxu0 0
        %2716 = vmatpush1.bf16.msra.mxu0 %v2637
        %2717 = vmatprep.subr.bf16.mxu0 0
        %2718 = vmatpush1.bf16.msra.mxu0 %v2638
        %2719 = vmatprep.subr.bf16.mxu0 0
        %2720 = vmatpush1.bf16.msra.mxu0 0
        %2721 = vmatprep.subr.bf16.mxu0 0
        %2722 = vmatpush1.bf16.msra.mxu0 0
        %2723 = vmatprep.subr.bf16.mxu0 0
        %2724 = vmatpush1.bf16.msra.mxu0 0
        %2725 = vmatprep.subr.bf16.mxu0 0
        %2726 = vmatpush1.bf16.msra.mxu0 0
        %2727 = vmatprep.subr.bf16.mxu0 0
        %2728 = vmatpush1.bf16.msra.mxu0 0
        %2729 = vmatprep.subr.bf16.mxu0 0
        %2730 = vmatpush1.bf16.msra.mxu0 0
        %2731 = vmatprep.subr.bf16.mxu0 0
        %2732 = vmatpush1.bf16.msra.mxu0 0
        %2733 = vmatprep.subr.bf16.mxu0 0
        %2734 = vmatpush1.bf16.msra.mxu0 0
        %2735 = vmatprep.mubr.bf16.mxu0 0
        %2736 = vmatmul.mubr.bf16.gmra.mrb[0].mxu0 %v2470
        %v2737 = vpop.f32.mrb[0].mxu0
        %v2738 = vadd.f32 %v2698, %v2737
        %v2739 = vpop.f32.mrb[0].mxu0
        %v2740 = vpop.f32.mrb[0].mxu0
        %v2741 = vpop.f32.mrb[0].mxu0
        %2742 = vdwg.mxu0
        %v2743 = vld [vmem:[%s12] sm:$0x3]
        %v2744 = vlaneseq
        %v2745 = vshrl.u32 %v2744, 7
        %v2746 = vsub.s32 0, %v2745
        %v2747 = vrot.slane %v2743, %v2746
        %v2748 = vmul.f32 %v2738, %v2747
        %v2749 = vlaneseq
        %v2750 = vshrl.u32 %v2749, 7
        %v2751 = vsub.s32 1, %v2750
        %v2752 = vrot.slane %v2743, %v2751
        %v2753 = vadd.f32 %v2748, %v2752
        %v2754 = vmax.f32 %v2753, 0.0
        %v2755 = vld [vmem:[%s13] sm:$0x1]
        %vm2756 = vcmask 39936
        %v2758 = vsel %vm2756, %v2755, 0
        %vm2760 = vcmask 1044480
        %v2762 = vsel %vm2760, %v2754, 0
        %2764 = vmatprep.subr.mxu0 0.0
        %2765 = vmatpush1.msra.mxu0 %v2762
        %2766 = vmatprep.subr.mxu0 0.0
        %2767 = vmatpush1.msra.mxu0 0.0
        %2768 = vmatprep.subr.mxu0 0.0
        %2769 = vmatpush1.msra.mxu0 0.0
        %2770 = vmatprep.subr.mxu0 0.0
        %2771 = vmatpush1.msra.mxu0 0.0
        %2772 = vmatprep.subr.mxu0 0.0
        %2773 = vmatpush1.msra.mxu0 0.0
        %2774 = vmatprep.subr.mxu0 0.0
        %2775 = vmatpush1.msra.mxu0 0.0
        %2776 = vmatprep.subr.mxu0 0.0
        %2777 = vmatpush1.msra.mxu0 0.0
        %2778 = vmatprep.subr.mxu0 0.0
        %2779 = vmatpush1.msra.mxu0 0.0
        %2780 = vmatprep.subr.mxu0 0.0
        %2781 = vmatpush1.msra.mxu0 0.0
        %2782 = vmatprep.subr.mxu0 0.0
        %2783 = vmatpush1.msra.mxu0 0.0
        %2784 = vmatprep.subr.mxu0 0.0
        %2785 = vmatpush1.msra.mxu0 0.0
        %2786 = vmatprep.subr.mxu0 0.0
        %2787 = vmatpush1.msra.mxu0 0.0
        %2788 = vmatprep.subr.mxu0 0.0
        %2789 = vmatpush1.msra.mxu0 0.0
        %2790 = vmatprep.subr.mxu0 0.0
        %2791 = vmatpush1.msra.mxu0 0.0
        %2792 = vmatprep.subr.mxu0 0.0
        %2793 = vmatpush1.msra.mxu0 0.0
        %2794 = vmatprep.subr.mxu0 0.0
        %2795 = vmatpush1.msra.mxu0 0.0
        %2796 = vmatprep.subr.mxu0 0.0
        %2797 = vmatpush1.msra.mxu0 0.0
        %2798 = vmatprep.subr.mxu0 0.0
        %2799 = vmatpush1.msra.mxu0 0.0
        %2800 = vmatprep.subr.mxu0 0.0
        %2801 = vmatpush1.msra.mxu0 0.0
        %2802 = vmatprep.subr.mxu0 0.0
        %2803 = vmatpush1.msra.mxu0 0.0
        %2804 = vmatprep.subr.mxu0 0.0
        %2805 = vmatpush1.msra.mxu0 0.0
        %2806 = vmatprep.subr.mxu0 0.0
        %2807 = vmatpush1.msra.mxu0 0.0
        %2808 = vmatprep.subr.mxu0 0.0
        %2809 = vmatpush1.msra.mxu0 0.0
        %2810 = vmatprep.subr.mxu0 0.0
        %2811 = vmatpush1.msra.mxu0 0.0
        %2812 = vmatprep.subr.mxu0 0.0
        %2813 = vmatpush1.msra.mxu0 0.0
        %2814 = vmatprep.subr.mxu0 0.0
        %2815 = vmatpush1.msra.mxu0 0.0
        %2816 = vmatprep.subr.mxu0 0.0
        %2817 = vmatpush1.msra.mxu0 0.0
        %2818 = vmatprep.subr.mxu0 0.0
        %2819 = vmatpush1.msra.mxu0 0.0
        %2820 = vmatprep.subr.mxu0 0.0
        %2821 = vmatpush1.msra.mxu0 0.0
        %2822 = vmatprep.subr.mxu0 0.0
        %2823 = vmatpush1.msra.mxu0 0.0
        %2824 = vmatprep.subr.mxu0 0.0
        %2825 = vmatpush1.msra.mxu0 0.0
        %2826 = vmatprep.subr.mxu0 0.0
        %2827 = vmatpush1.msra.mxu0 0.0
        %2828 = vmatprep.mubr.f32.mxu0 0.0
        %2829 = vmatmul.mubr.f32.gmra.mrb[0].mxu0 %v2758
        %v2830 = vpop.f32.mrb[0].mxu0
        %v2831 = vadd.f32 0.0, %v2830
        %v2832 = vpop.f32.mrb[0].mxu0
        %2833 = vdwg.mxu0
        %v2834 = vld [vmem:[%s14] sm:$0xff]
        %v2835 = vld [vmem:[%s14 + $0x8] sm:$0xff]
        %v2836 = vld [vmem:[%s14 + $0x10] sm:$0xff]
        %v2837 = vld [vmem:[%s14 + $0x18] sm:$0xff]
        %v2838 = vld [vmem:[%s14 + $0x20] sm:$0xff]
        %v2839 = vld [vmem:[%s14 + $0x28] sm:$0xff]
        %v2840 = vld [vmem:[%s14 + $0x30] sm:$0xff]
        %v2841 = vld [vmem:[%s14 + $0x38] sm:$0xff]
        %v2842 = vld [vmem:[%s14 + $0x40] sm:$0xff]
        %v2843 = vld [vmem:[%s14 + $0x48] sm:$0xff]
        %v2844 = vld [vmem:[%s14 + $0x50] sm:$0xff]
        %v2845 = vld [vmem:[%s14 + $0x58] sm:$0xff]
        %v2846 = vld [vmem:[%s14 + $0x60] sm:$0xff]
        %v2847 = vld [vmem:[%s14 + $0x68] sm:$0xff]
        %v2848 = vld [vmem:[%s14 + $0x70] sm:$0xff]
        %v2849 = vld [vmem:[%s14 + $0x78] sm:$0xff]
        %v2850 = vld [vmem:[%s15] sm:$0x1]
        %2851 = vmatprep.subr.mxu0 0.0
        %2852 = vmatpush1.msra.mxu0 %v2834
        %2853 = vmatprep.subr.mxu0 0.0
        %2854 = vmatpush1.msra.mxu0 %v2835
        %2855 = vmatprep.subr.mxu0 0.0
        %2856 = vmatpush1.msra.mxu0 %v2836
        %2857 = vmatprep.subr.mxu0 0.0
        %2858 = vmatpush1.msra.mxu0 %v2837
        %2859 = vmatprep.subr.mxu0 0.0
        %2860 = vmatpush1.msra.mxu0 %v2838
        %2861 = vmatprep.subr.mxu0 0.0
        %2862 = vmatpush1.msra.mxu0 %v2839
        %2863 = vmatprep.subr.mxu0 0.0
        %2864 = vmatpush1.msra.mxu0 %v2840
        %2865 = vmatprep.subr.mxu0 0.0
        %2866 = vmatpush1.msra.mxu0 %v2841
        %2867 = vmatprep.subr.mxu0 0.0
        %2868 = vmatpush1.msra.mxu0 %v2842
        %2869 = vmatprep.subr.mxu0 0.0
        %2870 = vmatpush1.msra.mxu0 %v2843
        %2871 = vmatprep.subr.mxu0 0.0
        %2872 = vmatpush1.msra.mxu0 %v2844
        %2873 = vmatprep.subr.mxu0 0.0
        %2874 = vmatpush1.msra.mxu0 %v2845
        %2875 = vmatprep.subr.mxu0 0.0
        %2876 = vmatpush1.msra.mxu0 %v2846
        %2877 = vmatprep.subr.mxu0 0.0
        %2878 = vmatpush1.msra.mxu0 %v2847
        %2879 = vmatprep.subr.mxu0 0.0
        %2880 = vmatpush1.msra.mxu0 %v2848
        %2881 = vmatprep.subr.mxu0 0.0
        %2882 = vmatpush1.msra.mxu0 %v2849
        %2883 = vmatprep.subr.mxu0 0.0
        %2884 = vmatpush1.msra.mxu0 0.0
        %2885 = vmatprep.subr.mxu0 0.0
        %2886 = vmatpush1.msra.mxu0 0.0
        %2887 = vmatprep.subr.mxu0 0.0
        %2888 = vmatpush1.msra.mxu0 0.0
        %2889 = vmatprep.subr.mxu0 0.0
        %2890 = vmatpush1.msra.mxu0 0.0
        %2891 = vmatprep.subr.mxu0 0.0
        %2892 = vmatpush1.msra.mxu0 0.0
        %2893 = vmatprep.subr.mxu0 0.0
        %2894 = vmatpush1.msra.mxu0 0.0
        %2895 = vmatprep.subr.mxu0 0.0
        %2896 = vmatpush1.msra.mxu0 0.0
        %2897 = vmatprep.subr.mxu0 0.0
        %2898 = vmatpush1.msra.mxu0 0.0
        %2899 = vmatprep.subr.mxu0 0.0
        %2900 = vmatpush1.msra.mxu0 0.0
        %2901 = vmatprep.subr.mxu0 0.0
        %2902 = vmatpush1.msra.mxu0 0.0
        %2903 = vmatprep.subr.mxu0 0.0
        %2904 = vmatpush1.msra.mxu0 0.0
        %2905 = vmatprep.subr.mxu0 0.0
        %2906 = vmatpush1.msra.mxu0 0.0
        %2907 = vmatprep.subr.mxu0 0.0
        %2908 = vmatpush1.msra.mxu0 0.0
        %2909 = vmatprep.subr.mxu0 0.0
        %2910 = vmatpush1.msra.mxu0 0.0
        %2911 = vmatprep.subr.mxu0 0.0
        %2912 = vmatpush1.msra.mxu0 0.0
        %2913 = vmatprep.subr.mxu0 0.0
        %2914 = vmatpush1.msra.mxu0 0.0
        %2915 = vmatprep.mubr.f32.mxu0 0.0
        %2916 = vmatmul.mubr.f32.gmra.mrb[0].mxu0 %v2831
        %v2917 = vpop.f32.mrb[0].mxu0
        %v2918 = vadd.f32 %v2850, %v2917
        %v2919 = vpop.f32.mrb[0].mxu0
        %2920 = vdwg.mxu0
        %vm2921 = vcmask 24576
        %2922 = vst.msk [vmem:[%s513] sm:$0x1] %vm2921, %v2918
        %s2923 = sand.u32 %s379, 1
        %s2924 = scalar_lea.sflag [#allocation3], %s2923
        %s2925 = sand.u32 %s379, 1
        %s2926 = scalar_lea.vmem [#allocation2], %s2925
        // Predicated region
        $region85: #{forward.1} parent=83 // pred_check
          %p2927 = pneg %p389
        $region86: #{forward.1} parent=83 // pred_check_branch
          %2929 = sbr.rel (%p2927) target = $region88
        $region87: #{forward.1} parent=83 // pred_region
          %s2931 = ssub.s32 16, 16
          %2932 = vsyncadd %s2924, %s2931
          %s2933 = smul.addr %s30, 16
          %s2934 = scalar_lea.hbm %s16, %s2933
          %s2936 = sshll.u32 %s2926, 4
          %s2937 = int_to_ptr.vmem [resolvable:$true] %s2936
          %2939 = dma.vmem_to_hbm [thread:$0]  %s2937, 16, %s2934, %s2924
        $region88: #{forward.1} parent=83 // pred_fallthru
          _
      $region84: #{forward.1} parent=5 // pred_fallthru
        _
      %p2940 = scmp.le.s32.totalorder 2, %s25
      // Predicated region
      $region89: #{forward.1} parent=5 // pred_check
        %p2941 = pneg %p2940
      $region90: #{forward.1} parent=5 // pred_check_branch
        %2943 = sbr.rel (%p2941) target = $region92
      $region91: #{forward.1} parent=5 // pred_region
        %s2944 = ssub.s32 %s25, 2
        // Predicated region
        $region93: #{forward.1} parent=91 // pred_check
          %p2945 = pneg %p395
        $region94: #{forward.1} parent=91 // pred_check_branch
          %2947 = sbr.rel (%p2945) target = $region96
        $region95: #{forward.1} parent=91 // pred_region
          %s2948 = sand.u32 %s380, 1
          %s2949 = scalar_lea.sflag [#allocation3], %s2948
          %s2950 = sand.u32 %s380, 1
          %s2951 = scalar_lea.vmem [#allocation2], %s2950
          %2952 = dma.done %s2949, 16
        $region96: #{forward.1} parent=91 // pred_fallthru
          _
      $region92: #{forward.1} parent=5 // pred_fallthru
        _
    $region6: #{forward.1} parent=1 // loop_footer
      %s29 = sadd.s32 1, %s25
    $region7: #{forward.1} parent=1 // loop_footer_branch
      %24 = sbr.rel target = $region3
    $region8: #{forward.1} parent=1 // loop_exit
      _
    %2953 = vsyncpa [#allocation3], 1
    %s2954 = scalar_lea.sflag [#allocation3], 1
    %2955 = vsyncpa %s2954, 1

</llo_original>
